<compile_context>
chip_gen: v7x
topology: tpu7x:2x2x1
jax: 0.10.0
libtpu: 0.0.40
codegen_flags: <defaults>
</compile_context>

<pallas_src>
import jax
import jax.numpy as jnp
from jax.experimental import pallas as pl
from jax.experimental.pallas import tpu as pltpu


def _mlp_kernel(x_ref, w1_ref, b1_ref, w2_ref, b2_ref, o_ref):
    # fc1 + relu  (MXU matmul, f32 accumulation)
    h = jnp.dot(x_ref[...], w1_ref[...], preferred_element_type=jnp.float32)
    h = jnp.maximum(h + b1_ref[...], 0.0)          # (TB, H) + (1, H) broadcast
    # fc2 + sigmoid
    z = jnp.dot(h, w2_ref[...], preferred_element_type=jnp.float32)
    o_ref[...] = jax.nn.sigmoid(z + b2_ref[...]).astype(o_ref.dtype)


def _round_up(n, m):
    return ((n + m - 1) // m) * m


def _choose_batch_tile(b8, block_rows):
    """Pick a sublane-aligned (multiple-of-8) batch tile.

    Prefers an exact divisor of the 8-rounded batch (so no whole-array pad of
    x is needed) and prefers >= 2 grid steps so the "parallel" grid axis can
    shard across both TensorCores on v7x. Falls back to the cap (with padding)
    only for ragged batch sizes with no suitable divisor.
    """
    cap = max(8, min(block_rows, b8))
    cap -= cap % 8
    divisors = [tb for tb in range(8, cap + 1, 8) if b8 % tb == 0]
    if divisors:
        multi_step = [tb for tb in divisors if b8 // tb >= 2]
        return max(multi_step) if multi_step else max(divisors)
    return cap


def _build_call(TB, I, H, O, B_pad, grid, resident_mode):
    # resident_mode: pl.Buffered(1) for single-buffered resident weights/biases,
    # or None to use the default pipelining.
    kw = {} if resident_mode is None else {"pipeline_mode": resident_mode}
    return pl.pallas_call(
        _mlp_kernel,
        out_shape=jax.ShapeDtypeStruct((B_pad, O), jnp.float32),
        grid=grid,
        in_specs=[
            pl.BlockSpec((TB, I), lambda i: (i, 0)),        # streamed per tile
            pl.BlockSpec((I, H), lambda i: (0, 0), **kw),   # VMEM-resident
            pl.BlockSpec((1, H), lambda i: (0, 0), **kw),   # VMEM-resident
            pl.BlockSpec((H, O), lambda i: (0, 0), **kw),   # VMEM-resident
            pl.BlockSpec((1, O), lambda i: (0, 0), **kw),   # VMEM-resident
        ],
        out_specs=pl.BlockSpec((TB, O), lambda i: (i, 0)),
        compiler_params=pltpu.CompilerParams(
            dimension_semantics=("parallel",),
            # Safe scoped-VMEM budget on v5e/v6e (128 MiB) and v7x (64 MiB);
            # tiles here use well under 1 MiB even at TB=2048.
            vmem_limit_bytes=32 * 1024 * 1024,
        ),
    )


def task_allocation_forward(x, w1, b1, w2, b2, *, block_rows=2048):
    """x: (B, input_size) f32; w1: (input_size, hidden); b1: (hidden,);
       w2: (hidden, output); b2: (output,). Returns (B, output) f32."""
    B, I = x.shape
    H = w1.shape[1]
    O = w2.shape[1]

    # Sublane-aligned batch tiling. Avoid padding x whenever a divisor tile
    # exists; otherwise pad only the (small) remainder rows.
    block_rows = max(8, _round_up(block_rows, 8))
    B8 = _round_up(B, 8)
    TB = _choose_batch_tile(B8, block_rows)
    B_pad = _round_up(B8, TB)
    if B_pad != B:
        x = jnp.pad(x, ((0, B_pad - B), (0, 0)))

    # Keep biases 2-D so their last-two dims are well-defined tiles.
    b1_2d = b1.reshape(1, H)
    b2_2d = b2.reshape(1, O)

    grid = (B_pad // TB,)

    try:
        call = _build_call(TB, I, H, O, B_pad, grid, pl.Buffered(1))
        out = call(x, w1, b1_2d, w2, b2_2d)
    except Exception:
        # Fallback for JAX versions that don't accept per-operand buffer
        # counts on the top-level TPU pipeline: default double-buffering.
        call = _build_call(TB, I, H, O, B_pad, grid, None)
        out = call(x, w1, b1_2d, w2, b2_2d)

    return out if B_pad == B else out[:B]


def reference_forward(x, w1, b1, w2, b2):
    h = jnp.maximum(x @ w1 + b1, 0.0)
    return jax.nn.sigmoid(h @ w2 + b2)


if __name__ == "__main__":
    # Shapes consistent with the module: input=16, hidden=32, output=8.
    # Batch of 1024 exercises a multi-step tiled grid (grid=(2,) with TB=512)
    # while staying tiny.
    batch, input_size, hidden_size, output_size = 1024, 16, 32, 8

    key = jax.random.PRNGKey(0)
    kx, kw1, kb1, kw2, kb2 = jax.random.split(key, 5)

    x = jax.random.normal(kx, (batch, input_size), dtype=jnp.float32)

    # Deterministic parameter init (PyTorch nn.Linear-style uniform bounds).
    bound1 = 1.0 / (input_size ** 0.5)
    bound2 = 1.0 / (hidden_size ** 0.5)
    # Stored as [in, out] (transposed vs PyTorch's [out, in]) for x @ W layout.
    w1 = jax.random.uniform(kw1, (input_size, hidden_size), jnp.float32, -bound1, bound1)
    b1 = jax.random.uniform(kb1, (hidden_size,), jnp.float32, -bound1, bound1)
    w2 = jax.random.uniform(kw2, (hidden_size, output_size), jnp.float32, -bound2, bound2)
    b2 = jax.random.uniform(kb2, (output_size,), jnp.float32, -bound2, bound2)

    out = task_allocation_forward(x, w1, b1, w2, b2)
    out = jax.block_until_ready(out)

    ref = reference_forward(x, w1, b1, w2, b2)
    assert out.shape == (batch, output_size)
    assert jnp.allclose(out, ref, atol=1e-5, rtol=1e-5)

    # Non-multiple-of-tile / tiny batch path (13 rows -> TB=8, grid=(2,), pad to 16).
    out_small = jax.block_until_ready(task_allocation_forward(x[:13], w1, b1, w2, b2))
    assert out_small.shape == (13, output_size)
    assert jnp.allclose(out_small, ref[:13], atol=1e-5, rtol=1e-5)

    print("KERNEL_OK")
</pallas_src>

<mosaic_0001>
module attributes {stable_mosaic.version = 11 : i64} {
  func.func @_mlp_kernel(%arg0: i32, %arg1: memref<512x16xf32, #tpu.memory_space<vmem>>, %arg2: memref<16x32xf32, #tpu.memory_space<vmem>>, %arg3: memref<1x32xf32, #tpu.memory_space<vmem>>, %arg4: memref<32x8xf32, #tpu.memory_space<vmem>>, %arg5: memref<1x8xf32, #tpu.memory_space<vmem>>, %arg6: memref<512x8xf32, #tpu.memory_space<vmem>>) attributes {dimension_semantics = [#tpu.dimension_semantics<parallel>], iteration_bounds = array<i64: 2>, scalar_prefetch = 0 : i64, scratch_operands = 0 : i64, tpu.core_type = #tpu.core_type<tc>, window_params = [{transform_indices = @transform_0, window_bounds = array<i64: 512, 16>}, {pipeline_mode = #tpu.pipeline_mode<synchronous>, transform_indices = @transform_1, window_bounds = array<i64: 16, 32>}, {pipeline_mode = #tpu.pipeline_mode<synchronous>, transform_indices = @transform_2, window_bounds = array<i64: 1, 32>}, {pipeline_mode = #tpu.pipeline_mode<synchronous>, transform_indices = @transform_3, window_bounds = array<i64: 32, 8>}, {pipeline_mode = #tpu.pipeline_mode<synchronous>, transform_indices = @transform_4, window_bounds = array<i64: 1, 8>}, {transform_indices = @transform_5, window_bounds = array<i64: 512, 8>}]} {
    %c0 = arith.constant 0 : index
    %c0_0 = arith.constant 0 : index
    %0 = vector.load %arg1[%c0, %c0_0] : memref<512x16xf32, #tpu.memory_space<vmem>>, vector<512x16xf32>
    %c0_1 = arith.constant 0 : index
    %c0_2 = arith.constant 0 : index
    %1 = vector.load %arg2[%c0_1, %c0_2] : memref<16x32xf32, #tpu.memory_space<vmem>>, vector<16x32xf32>
    %cst = arith.constant dense<0.000000e+00> : vector<512x32xf32>
    %2 = tpu.matmul %0, %1, %cst {dimension_numbers = #tpu.dot_dimension_numbers<[1], [0], [0], [1], [0, 0, 1, 1], [], []>} : vector<512x16xf32>, vector<16x32xf32>, vector<512x32xf32> -> vector<512x32xf32>
    %c0_3 = arith.constant 0 : index
    %c0_4 = arith.constant 0 : index
    %3 = vector.load %arg3[%c0_3, %c0_4] : memref<1x32xf32, #tpu.memory_space<vmem>>, vector<1x32xf32>
    %4 = vector.broadcast %3 : vector<1x32xf32> to vector<512x32xf32>
    %5 = arith.addf %2, %4 : vector<512x32xf32>
    %cst_5 = arith.constant 0.000000e+00 : f32
    %6 = vector.broadcast %cst_5 : f32 to vector<512x32xf32>
    %7 = arith.maximumf %5, %6 : vector<512x32xf32>
    %c0_6 = arith.constant 0 : index
    %c0_7 = arith.constant 0 : index
    %8 = vector.load %arg4[%c0_6, %c0_7] : memref<32x8xf32, #tpu.memory_space<vmem>>, vector<32x8xf32>
    %cst_8 = arith.constant dense<0.000000e+00> : vector<512x8xf32>
    %9 = tpu.matmul %7, %8, %cst_8 {dimension_numbers = #tpu.dot_dimension_numbers<[1], [0], [0], [1], [0, 0, 1, 1], [], []>} : vector<512x32xf32>, vector<32x8xf32>, vector<512x8xf32> -> vector<512x8xf32>
    %c0_9 = arith.constant 0 : index
    %c0_10 = arith.constant 0 : index
    %10 = vector.load %arg5[%c0_9, %c0_10] : memref<1x8xf32, #tpu.memory_space<vmem>>, vector<1x8xf32>
    %11 = vector.broadcast %10 : vector<1x8xf32> to vector<512x8xf32>
    %12 = arith.addf %9, %11 : vector<512x8xf32>
    %13 = arith.negf %12 : vector<512x8xf32>
    %14 = math.exp %13 : vector<512x8xf32>
    %cst_11 = arith.constant 1.000000e+00 : f32
    %15 = vector.broadcast %cst_11 : f32 to vector<512x8xf32>
    %16 = arith.addf %15, %14 : vector<512x8xf32>
    %17 = arith.divf %15, %16 : vector<512x8xf32>
    %c0_12 = arith.constant 0 : index
    %c0_13 = arith.constant 0 : index
    %18 = vector.load %arg6[%c0_12, %c0_13] : memref<512x8xf32, #tpu.memory_space<vmem>>, vector<512x8xf32>
    tpu.vector_store %arg6[%c0_12, %c0_13], %17 {strides = array<i32>} : memref<512x8xf32, #tpu.memory_space<vmem>>, vector<512x8xf32>,
    return
  }
  func.func @transform_0(%arg0: i32) -> (i32, i32) {
    %c0_i32 = arith.constant 0 : i32
    %c0_i32_0 = arith.constant 0 : i32
    return %arg0, %c0_i32 : i32, i32
  }
  func.func @transform_1(%arg0: i32) -> (i32, i32) {
    %c0_i32 = arith.constant 0 : i32
    %c0_i32_0 = arith.constant 0 : i32
    %c0_i32_1 = arith.constant 0 : i32
    return %c0_i32, %c0_i32_0 : i32, i32
  }
  func.func @transform_2(%arg0: i32) -> (i32, i32) {
    %c0_i32 = arith.constant 0 : i32
    %c0_i32_0 = arith.constant 0 : i32
    %c0_i32_1 = arith.constant 0 : i32
    return %c0_i32, %c0_i32_0 : i32, i32
  }
  func.func @transform_3(%arg0: i32) -> (i32, i32) {
    %c0_i32 = arith.constant 0 : i32
    %c0_i32_0 = arith.constant 0 : i32
    %c0_i32_1 = arith.constant 0 : i32
    return %c0_i32, %c0_i32_0 : i32, i32
  }
  func.func @transform_4(%arg0: i32) -> (i32, i32) {
    %c0_i32 = arith.constant 0 : i32
    %c0_i32_0 = arith.constant 0 : i32
    %c0_i32_1 = arith.constant 0 : i32
    return %c0_i32, %c0_i32_0 : i32, i32
  }
  func.func @transform_5(%arg0: i32) -> (i32, i32) {
    %c0_i32 = arith.constant 0 : i32
    %c0_i32_0 = arith.constant 0 : i32
    return %arg0, %c0_i32 : i32, i32
  }
}

module attributes {stable_mosaic.version = 11 : i64} {
  func.func @_mlp_kernel(%arg0: i32, %arg1: memref<512x16xf32, #tpu.memory_space<vmem>>, %arg2: memref<16x32xf32, #tpu.memory_space<vmem>>, %arg3: memref<1x32xf32, #tpu.memory_space<vmem>>, %arg4: memref<32x8xf32, #tpu.memory_space<vmem>>, %arg5: memref<1x8xf32, #tpu.memory_space<vmem>>, %arg6: memref<512x8xf32, #tpu.memory_space<vmem>>) attributes {dimension_semantics = [#tpu.dimension_semantics<parallel>], iteration_bounds = array<i64: 2>, scalar_prefetch = 0 : i64, scratch_operands = 0 : i64, tpu.core_type = #tpu.core_type<tc>, window_params = [{transform_indices = @transform_0, window_bounds = array<i64: 512, 16>}, {pipeline_mode = #tpu.pipeline_mode<synchronous>, transform_indices = @transform_1, window_bounds = array<i64: 16, 32>}, {pipeline_mode = #tpu.pipeline_mode<synchronous>, transform_indices = @transform_2, window_bounds = array<i64: 1, 32>}, {pipeline_mode = #tpu.pipeline_mode<synchronous>, transform_indices = @transform_3, window_bounds = array<i64: 32, 8>}, {pipeline_mode = #tpu.pipeline_mode<synchronous>, transform_indices = @transform_4, window_bounds = array<i64: 1, 8>}, {transform_indices = @transform_5, window_bounds = array<i64: 512, 8>}]} {
    %c0 = arith.constant 0 : index
    %c0_0 = arith.constant 0 : index
    %0 = vector.load %arg1[%c0, %c0_0] : memref<512x16xf32, #tpu.memory_space<vmem>>, vector<512x16xf32>
    %c0_1 = arith.constant 0 : index
    %c0_2 = arith.constant 0 : index
    %1 = vector.load %arg2[%c0_1, %c0_2] : memref<16x32xf32, #tpu.memory_space<vmem>>, vector<16x32xf32>
    %cst = arith.constant dense<0.000000e+00> : vector<512x32xf32>
    %2 = tpu.matmul %0, %1, %cst {dimension_numbers = #tpu.dot_dimension_numbers<[1], [0], [0], [1], [0, 0, 1, 1], [], []>} : vector<512x16xf32>, vector<16x32xf32>, vector<512x32xf32> -> vector<512x32xf32>
    %c0_3 = arith.constant 0 : index
    %c0_4 = arith.constant 0 : index
    %3 = vector.load %arg3[%c0_3, %c0_4] : memref<1x32xf32, #tpu.memory_space<vmem>>, vector<1x32xf32>
    %4 = vector.broadcast %3 : vector<1x32xf32> to vector<512x32xf32>
    %5 = arith.addf %2, %4 : vector<512x32xf32>
    %cst_5 = arith.constant 0.000000e+00 : f32
    %6 = vector.broadcast %cst_5 : f32 to vector<512x32xf32>
    %7 = arith.maximumf %5, %6 : vector<512x32xf32>
    %c0_6 = arith.constant 0 : index
    %c0_7 = arith.constant 0 : index
    %8 = vector.load %arg4[%c0_6, %c0_7] : memref<32x8xf32, #tpu.memory_space<vmem>>, vector<32x8xf32>
    %cst_8 = arith.constant dense<0.000000e+00> : vector<512x8xf32>
    %9 = tpu.matmul %7, %8, %cst_8 {dimension_numbers = #tpu.dot_dimension_numbers<[1], [0], [0], [1], [0, 0, 1, 1], [], []>} : vector<512x32xf32>, vector<32x8xf32>, vector<512x8xf32> -> vector<512x8xf32>
    %c0_9 = arith.constant 0 : index
    %c0_10 = arith.constant 0 : index
    %10 = vector.load %arg5[%c0_9, %c0_10] : memref<1x8xf32, #tpu.memory_space<vmem>>, vector<1x8xf32>
    %11 = vector.broadcast %10 : vector<1x8xf32> to vector<512x8xf32>
    %12 = arith.addf %9, %11 : vector<512x8xf32>
    %13 = arith.negf %12 : vector<512x8xf32>
    %14 = math.exp %13 : vector<512x8xf32>
    %cst_11 = arith.constant 1.000000e+00 : f32
    %15 = vector.broadcast %cst_11 : f32 to vector<512x8xf32>
    %16 = arith.addf %15, %14 : vector<512x8xf32>
    %17 = arith.divf %15, %16 : vector<512x8xf32>
    %c0_12 = arith.constant 0 : index
    %c0_13 = arith.constant 0 : index
    %18 = vector.load %arg6[%c0_12, %c0_13] : memref<512x8xf32, #tpu.memory_space<vmem>>, vector<512x8xf32>
    tpu.vector_store %arg6[%c0_12, %c0_13], %17 {strides = array<i32>} : memref<512x8xf32, #tpu.memory_space<vmem>>, vector<512x8xf32>,
    return
  }
  func.func @transform_0(%arg0: i32) -> (i32, i32) {
    %c0_i32 = arith.constant 0 : i32
    %c0_i32_0 = arith.constant 0 : i32
    return %arg0, %c0_i32 : i32, i32
  }
  func.func @transform_1(%arg0: i32) -> (i32, i32) {
    %c0_i32 = arith.constant 0 : i32
    %c0_i32_0 = arith.constant 0 : i32
    %c0_i32_1 = arith.constant 0 : i32
    return %c0_i32, %c0_i32_0 : i32, i32
  }
  func.func @transform_2(%arg0: i32) -> (i32, i32) {
    %c0_i32 = arith.constant 0 : i32
    %c0_i32_0 = arith.constant 0 : i32
    %c0_i32_1 = arith.constant 0 : i32
    return %c0_i32, %c0_i32_0 : i32, i32
  }
  func.func @transform_3(%arg0: i32) -> (i32, i32) {
    %c0_i32 = arith.constant 0 : i32
    %c0_i32_0 = arith.constant 0 : i32
    %c0_i32_1 = arith.constant 0 : i32
    return %c0_i32, %c0_i32_0 : i32, i32
  }
  func.func @transform_4(%arg0: i32) -> (i32, i32) {
    %c0_i32 = arith.constant 0 : i32
    %c0_i32_0 = arith.constant 0 : i32
    %c0_i32_1 = arith.constant 0 : i32
    return %c0_i32, %c0_i32_0 : i32, i32
  }
  func.func @transform_5(%arg0: i32) -> (i32, i32) {
    %c0_i32 = arith.constant 0 : i32
    %c0_i32_0 = arith.constant 0 : i32
    return %arg0, %c0_i32 : i32, i32
  }
}

</mosaic_0001>

<llo_original>
// kernel: tpu_custom_call.1
$region0: #{tpu_custom_call.1}
  #allocation0 [shape = 'u32[]', space=smem, size = 0x4, offset = 0x4, fixed_abs, tag = 'smem constant byte address 0x4 - core index']
  #allocation1 [shape = 'u32[144,128]{1,0:T(1,128)}', space=vmem, size = 0x12000, scoped, tag = 'internal scratch']
  %s0 = inlined_call_operand.vmem [shape: f32[1024,16], index: 0, kind: input, shape index: {}]
  %s1 = inlined_call_operand.vmem [shape: f32[16,32], index: 1, kind: input, shape index: {}]
  %s2 = inlined_call_operand.vmem [shape: f32[1,32], index: 2, kind: input, shape index: {}]
  %s3 = inlined_call_operand.vmem [shape: f32[32,8], index: 3, kind: input, shape index: {}]
  %s4 = inlined_call_operand.vmem [shape: f32[1,8], index: 4, kind: input, shape index: {}]
  %s5 = inlined_call_operand.vmem [shape: f32[1024,8], index: 5, kind: output, shape index: {}]
  %s6 = sld [smem:[#allocation0]]
  $region53: #{tpu_custom_call.1} parent=0
    _
  %s8 = ssub.s32 1, %s6
  %s9 = scalar_select 0, %s8, %s6
  loop: start=0, step=1, limit=4
  $region2: #{tpu_custom_call.1} parent=0 // loop_pre_header
    _
  $region3: #{tpu_custom_call.1} parent=0 // loop_header
    %s11 = sphi 0, %s15
    %p12 = scmp.ge.s32.totalorder %s11, 4
    %s21 = sphi 0, %s23
    %s24 = sphi 0, %s21
    %s25 = sphi 0, %s24
    %s41 = sphi 0, %s25
    %s45 = sphi 0, %s45
    %s47 = sphi 0, %s45
    %s48 = sphi 0, %s47
    %s62 = sphi 0, %s48
    %s66 = sphi 0, %s66
    %s68 = sphi 0, %s66
    %s69 = sphi 0, %s68
    %s83 = sphi 0, %s69
    %s87 = sphi 0, %s87
    %s89 = sphi 0, %s87
    %s90 = sphi 0, %s89
    %s104 = sphi 0, %s90
    %s108 = sphi 0, %s108
    %s110 = sphi 0, %s108
    %s111 = sphi 0, %s110
    %s125 = sphi 0, %s111
    %s131 = sphi 0, %s133
    %s134 = sphi 0, %s131
    %s135 = sphi 0, %s134
    %s151 = sphi 0, %s135
  $region4: #{tpu_custom_call.1} parent=0 // loop_header_branch
    %14 = sbr.rel (%p12) target = $region8
  $region5: #{tpu_custom_call.1} parent=0 // loop_body
    %s16 = ssub.s32 %s11, 1
    %s17 = ssub.s32 %s11, 2
    %s18 = sadd.s32 %s11, 1
    %s19 = ssub.s32 %s11, %s18
    %p20 = scmp.eq.s32.totalorder %s19, 0
    %s22 = sadd.s32 %s21, 1
    %s23 = scalar_select %p20, %s21, %s22
    %p26 = pneg %p20
    %p27 = scmp.eq.s32.totalorder %s11, 1
    %p28 = por %p26, %p27
    %p29 = scmp.ne.s32.totalorder %s21, %s24
    %p30 = scmp.eq.s32.totalorder %s11, 0
    %p31 = por %p29, %p30
    %p32 = scmp.ne.s32.totalorder %s21, %s24
    %p33 = scmp.eq.s32.totalorder %s16, 1
    %p34 = por %p32, %p33
    %p35 = scmp.ne.s32.totalorder %s24, %s25
    %p36 = scmp.eq.s32.totalorder %s16, 0
    %p37 = por %p35, %p36
    %p38 = scmp.ne.s32.totalorder %s24, %s25
    %p39 = scmp.eq.s32.totalorder %s17, 1
    %p40 = por %p38, %p39
    %p42 = scmp.ne.s32.totalorder %s25, %s41
    %p43 = scmp.eq.s32.totalorder %s17, 0
    %p44 = por %p42, %p43
    %s46 = sadd.s32 %s45, 1
    %p49 = scmp.eq.s32.totalorder %s11, 1
    %p50 = scmp.ne.s32.totalorder %s45, %s47
    %p51 = scmp.eq.s32.totalorder %s11, 0
    %p52 = por %p50, %p51
    %p53 = scmp.ne.s32.totalorder %s45, %s47
    %p54 = scmp.eq.s32.totalorder %s16, 1
    %p55 = por %p53, %p54
    %p56 = scmp.ne.s32.totalorder %s47, %s48
    %p57 = scmp.eq.s32.totalorder %s16, 0
    %p58 = por %p56, %p57
    %p59 = scmp.ne.s32.totalorder %s47, %s48
    %p60 = scmp.eq.s32.totalorder %s17, 1
    %p61 = por %p59, %p60
    %p63 = scmp.ne.s32.totalorder %s48, %s62
    %p64 = scmp.eq.s32.totalorder %s17, 0
    %p65 = por %p63, %p64
    %s67 = sadd.s32 %s66, 1
    %p70 = scmp.eq.s32.totalorder %s11, 1
    %p71 = scmp.ne.s32.totalorder %s66, %s68
    %p72 = scmp.eq.s32.totalorder %s11, 0
    %p73 = por %p71, %p72
    %p74 = scmp.ne.s32.totalorder %s66, %s68
    %p75 = scmp.eq.s32.totalorder %s16, 1
    %p76 = por %p74, %p75
    %p77 = scmp.ne.s32.totalorder %s68, %s69
    %p78 = scmp.eq.s32.totalorder %s16, 0
    %p79 = por %p77, %p78
    %p80 = scmp.ne.s32.totalorder %s68, %s69
    %p81 = scmp.eq.s32.totalorder %s17, 1
    %p82 = por %p80, %p81
    %p84 = scmp.ne.s32.totalorder %s69, %s83
    %p85 = scmp.eq.s32.totalorder %s17, 0
    %p86 = por %p84, %p85
    %s88 = sadd.s32 %s87, 1
    %p91 = scmp.eq.s32.totalorder %s11, 1
    %p92 = scmp.ne.s32.totalorder %s87, %s89
    %p93 = scmp.eq.s32.totalorder %s11, 0
    %p94 = por %p92, %p93
    %p95 = scmp.ne.s32.totalorder %s87, %s89
    %p96 = scmp.eq.s32.totalorder %s16, 1
    %p97 = por %p95, %p96
    %p98 = scmp.ne.s32.totalorder %s89, %s90
    %p99 = scmp.eq.s32.totalorder %s16, 0
    %p100 = por %p98, %p99
    %p101 = scmp.ne.s32.totalorder %s89, %s90
    %p102 = scmp.eq.s32.totalorder %s17, 1
    %p103 = por %p101, %p102
    %p105 = scmp.ne.s32.totalorder %s90, %s104
    %p106 = scmp.eq.s32.totalorder %s17, 0
    %p107 = por %p105, %p106
    %s109 = sadd.s32 %s108, 1
    %p112 = scmp.eq.s32.totalorder %s11, 1
    %p113 = scmp.ne.s32.totalorder %s108, %s110
    %p114 = scmp.eq.s32.totalorder %s11, 0
    %p115 = por %p113, %p114
    %p116 = scmp.ne.s32.totalorder %s108, %s110
    %p117 = scmp.eq.s32.totalorder %s16, 1
    %p118 = por %p116, %p117
    %p119 = scmp.ne.s32.totalorder %s110, %s111
    %p120 = scmp.eq.s32.totalorder %s16, 0
    %p121 = por %p119, %p120
    %p122 = scmp.ne.s32.totalorder %s110, %s111
    %p123 = scmp.eq.s32.totalorder %s17, 1
    %p124 = por %p122, %p123
    %p126 = scmp.ne.s32.totalorder %s111, %s125
    %p127 = scmp.eq.s32.totalorder %s17, 0
    %p128 = por %p126, %p127
    %s129 = ssub.s32 %s11, %s18
    %p130 = scmp.eq.s32.totalorder %s129, 0
    %s132 = sadd.s32 %s131, 1
    %s133 = scalar_select %p130, %s131, %s132
    %p136 = pneg %p130
    %p137 = scmp.eq.s32.totalorder %s11, 1
    %p138 = por %p136, %p137
    %p139 = scmp.ne.s32.totalorder %s131, %s134
    %p140 = scmp.eq.s32.totalorder %s11, 0
    %p141 = por %p139, %p140
    %p142 = scmp.ne.s32.totalorder %s131, %s134
    %p143 = scmp.eq.s32.totalorder %s16, 1
    %p144 = por %p142, %p143
    %p145 = scmp.ne.s32.totalorder %s134, %s135
    %p146 = scmp.eq.s32.totalorder %s16, 0
    %p147 = por %p145, %p146
    %p148 = scmp.ne.s32.totalorder %s134, %s135
    %p149 = scmp.eq.s32.totalorder %s17, 1
    %p150 = por %p148, %p149
    %p152 = scmp.ne.s32.totalorder %s135, %s151
    %p153 = scmp.eq.s32.totalorder %s17, 0
    %p154 = por %p152, %p153
    %p155 = scmp.le.s32.totalorder 1, %s11
    %p156 = scmp.lt.s32.totalorder %s11, 3
    %p157 = pnand %p155, %p156
    %p158 = pneg %p157
    // Predicated region
    $region9: #{tpu_custom_call.1} parent=5 // pred_check
      _
    $region10: #{tpu_custom_call.1} parent=5 // pred_check_branch
      %160 = sbr.rel (%p157) target = $region12
    $region11: #{tpu_custom_call.1} parent=5 // pred_region
      %s161 = ssub.s32 %s11, 1
      // Predicated region
      $region13: #{tpu_custom_call.1} parent=11 // pred_check
        %p162 = pneg %p58
      $region14: #{tpu_custom_call.1} parent=11 // pred_check_branch
        %164 = sbr.rel (%p162) target = $region16
      $region15: #{tpu_custom_call.1} parent=11 // pred_region
        _
      $region16: #{tpu_custom_call.1} parent=11 // pred_fallthru
        _
      // Predicated region
      $region17: #{tpu_custom_call.1} parent=11 // pred_check
        %p165 = pneg %p79
      $region18: #{tpu_custom_call.1} parent=11 // pred_check_branch
        %167 = sbr.rel (%p165) target = $region20
      $region19: #{tpu_custom_call.1} parent=11 // pred_region
        _
      $region20: #{tpu_custom_call.1} parent=11 // pred_fallthru
        _
      // Predicated region
      $region21: #{tpu_custom_call.1} parent=11 // pred_check
        %p168 = pneg %p100
      $region22: #{tpu_custom_call.1} parent=11 // pred_check_branch
        %170 = sbr.rel (%p168) target = $region24
      $region23: #{tpu_custom_call.1} parent=11 // pred_region
        _
      $region24: #{tpu_custom_call.1} parent=11 // pred_fallthru
        _
      // Predicated region
      $region25: #{tpu_custom_call.1} parent=11 // pred_check
        %p171 = pneg %p121
      $region26: #{tpu_custom_call.1} parent=11 // pred_check_branch
        %173 = sbr.rel (%p171) target = $region28
      $region27: #{tpu_custom_call.1} parent=11 // pred_region
        _
      $region28: #{tpu_custom_call.1} parent=11 // pred_fallthru
        _
    $region12: #{tpu_custom_call.1} parent=5 // pred_fallthru
      _
    %p174 = scmp.lt.s32.totalorder %s11, 2
    // Predicated region
    $region29: #{tpu_custom_call.1} parent=5 // pred_check
      %p175 = pneg %p174
    $region30: #{tpu_custom_call.1} parent=5 // pred_check_branch
      %177 = sbr.rel (%p175) target = $region32
    $region31: #{tpu_custom_call.1} parent=5 // pred_region
      // Predicated region
      $region33: #{tpu_custom_call.1} parent=31 // pred_check
        %p178 = pneg %p31
      $region34: #{tpu_custom_call.1} parent=31 // pred_check_branch
        %180 = sbr.rel (%p178) target = $region36
      $region35: #{tpu_custom_call.1} parent=31 // pred_region
        %s181 = smul.u32 64, %s11
        %p182 = scmp.lt.s32.totalorder %s181, 127
        %s183 = scalar_select %p182, %s181, 127
        %s184 = smul.addr %s183, 8
        %s185 = scalar_lea.vmem %s0, %s184
        %s186 = smul.u32 64, %s11
      $region36: #{tpu_custom_call.1} parent=31 // pred_fallthru
        _
    $region32: #{tpu_custom_call.1} parent=5 // pred_fallthru
      _
    %p187 = scmp.le.s32.totalorder 1, %s11
    %p188 = scmp.lt.s32.totalorder %s11, 3
    %p189 = pnand %p187, %p188
    %p190 = pneg %p189
    // Predicated region
    $region37: #{tpu_custom_call.1} parent=5 // pred_check
      _
    $region38: #{tpu_custom_call.1} parent=5 // pred_check_branch
      %192 = sbr.rel (%p189) target = $region40
    $region39: #{tpu_custom_call.1} parent=5 // pred_region
      %s193 = ssub.s32 %s11, 1
      %s194 = smul.u32 64, %s16
      %p195 = scmp.lt.s32.totalorder %s194, 127
      %s196 = scalar_select %p195, %s194, 127
      %s197 = smul.addr %s196, 8
      %s198 = scalar_lea.vmem %s0, %s197
      %p199 = pneg %p37
      %p200 = pneg %p34
      %p201 = pneg %p58
      %p202 = pneg %p55
      %p203 = pneg %p79
      %p204 = pneg %p76
      %p205 = pneg %p100
      %p206 = pneg %p97
      %p207 = pneg %p121
      %p208 = pneg %p118
      %p209 = pneg %p147
      %p210 = pneg %p144
      %s211 = smul.u32 64, %s16
      %p212 = scmp.lt.s32.totalorder %s211, 127
      %s213 = scalar_select %p212, %s211, 127
      %s214 = smul.addr %s213, 8
      %s215 = scalar_lea.vmem %s5, %s214
      %s216 = smul.u32 64, %s16
      %p217 = scmp.lt.s32.totalorder %s216, 127
      %s218 = scalar_select %p217, %s216, 127
      %s219 = smul.addr %s218, 8
      %s220 = scalar_lea.vmem %s0, %s219
      %s221 = smul.u32 64, %s16
      %s222 = smul.u32 64, %s16
      %p223 = scmp.lt.s32.totalorder %s222, 127
      %s224 = scalar_select %p223, %s222, 127
      %s225 = smul.addr %s224, 8
      %s226 = scalar_lea.vmem %s5, %s225
      %s227 = smul.u32 64, %s16
      %v228 = vld [vmem:[%s220] sm:$0xff]
      %v229 = vld [vmem:[%s220 + $0x8] sm:$0xff]
      %v230 = vld [vmem:[%s220 + $0x10] sm:$0xff]
      %v231 = vld [vmem:[%s220 + $0x18] sm:$0xff]
      %v232 = vld [vmem:[%s220 + $0x20] sm:$0xff]
      %v233 = vld [vmem:[%s220 + $0x28] sm:$0xff]
      %v234 = vld [vmem:[%s220 + $0x30] sm:$0xff]
      %v235 = vld [vmem:[%s220 + $0x38] sm:$0xff]
      %v236 = vld [vmem:[%s220 + $0x40] sm:$0xff]
      %v237 = vld [vmem:[%s220 + $0x48] sm:$0xff]
      %v238 = vld [vmem:[%s220 + $0x50] sm:$0xff]
      %v239 = vld [vmem:[%s220 + $0x58] sm:$0xff]
      %v240 = vld [vmem:[%s220 + $0x60] sm:$0xff]
      %v241 = vld [vmem:[%s220 + $0x68] sm:$0xff]
      %v242 = vld [vmem:[%s220 + $0x70] sm:$0xff]
      %v243 = vld [vmem:[%s220 + $0x78] sm:$0xff]
      %v244 = vld [vmem:[%s220 + $0x80] sm:$0xff]
      %v245 = vld [vmem:[%s220 + $0x88] sm:$0xff]
      %v246 = vld [vmem:[%s220 + $0x90] sm:$0xff]
      %v247 = vld [vmem:[%s220 + $0x98] sm:$0xff]
      %v248 = vld [vmem:[%s220 + $0xa0] sm:$0xff]
      %v249 = vld [vmem:[%s220 + $0xa8] sm:$0xff]
      %v250 = vld [vmem:[%s220 + $0xb0] sm:$0xff]
      %v251 = vld [vmem:[%s220 + $0xb8] sm:$0xff]
      %v252 = vld [vmem:[%s220 + $0xc0] sm:$0xff]
      %v253 = vld [vmem:[%s220 + $0xc8] sm:$0xff]
      %v254 = vld [vmem:[%s220 + $0xd0] sm:$0xff]
      %v255 = vld [vmem:[%s220 + $0xd8] sm:$0xff]
      %v256 = vld [vmem:[%s220 + $0xe0] sm:$0xff]
      %v257 = vld [vmem:[%s220 + $0xe8] sm:$0xff]
      %v258 = vld [vmem:[%s220 + $0xf0] sm:$0xff]
      %v259 = vld [vmem:[%s220 + $0xf8] sm:$0xff]
      %v260 = vld [vmem:[%s220 + $0x100] sm:$0xff]
      %v261 = vld [vmem:[%s220 + $0x108] sm:$0xff]
      %v262 = vld [vmem:[%s220 + $0x110] sm:$0xff]
      %v263 = vld [vmem:[%s220 + $0x118] sm:$0xff]
      %v264 = vld [vmem:[%s220 + $0x120] sm:$0xff]
      %v265 = vld [vmem:[%s220 + $0x128] sm:$0xff]
      %v266 = vld [vmem:[%s220 + $0x130] sm:$0xff]
      %v267 = vld [vmem:[%s220 + $0x138] sm:$0xff]
      %v268 = vld [vmem:[%s220 + $0x140] sm:$0xff]
      %v269 = vld [vmem:[%s220 + $0x148] sm:$0xff]
      %v270 = vld [vmem:[%s220 + $0x150] sm:$0xff]
      %v271 = vld [vmem:[%s220 + $0x158] sm:$0xff]
      %v272 = vld [vmem:[%s220 + $0x160] sm:$0xff]
      %v273 = vld [vmem:[%s220 + $0x168] sm:$0xff]
      %v274 = vld [vmem:[%s220 + $0x170] sm:$0xff]
      %v275 = vld [vmem:[%s220 + $0x178] sm:$0xff]
      %v276 = vld [vmem:[%s220 + $0x180] sm:$0xff]
      %v277 = vld [vmem:[%s220 + $0x188] sm:$0xff]
      %v278 = vld [vmem:[%s220 + $0x190] sm:$0xff]
      %v279 = vld [vmem:[%s220 + $0x198] sm:$0xff]
      %v280 = vld [vmem:[%s220 + $0x1a0] sm:$0xff]
      %v281 = vld [vmem:[%s220 + $0x1a8] sm:$0xff]
      %v282 = vld [vmem:[%s220 + $0x1b0] sm:$0xff]
      %v283 = vld [vmem:[%s220 + $0x1b8] sm:$0xff]
      %v284 = vld [vmem:[%s220 + $0x1c0] sm:$0xff]
      %v285 = vld [vmem:[%s220 + $0x1c8] sm:$0xff]
      %v286 = vld [vmem:[%s220 + $0x1d0] sm:$0xff]
      %v287 = vld [vmem:[%s220 + $0x1d8] sm:$0xff]
      %v288 = vld [vmem:[%s220 + $0x1e0] sm:$0xff]
      %v289 = vld [vmem:[%s220 + $0x1e8] sm:$0xff]
      %v290 = vld [vmem:[%s220 + $0x1f0] sm:$0xff]
      %v291 = vld [vmem:[%s220 + $0x1f8] sm:$0xff]
      %v292 = vld [vmem:[%s1] sm:$0xff]
      %v293 = vld [vmem:[%s1 + $0x8] sm:$0xff]
      %v294 = vld [vmem:[%s2] sm:$0x1]
      %v296 = vlaneseq
      %v297 = vshrl.u32 %v296, 7
      %v298 = vsub.s32 0, %v297
      %v299 = vrot.slane %v294, %v298
      %vm301 = vcmask 130048
      %v303 = vsel %vm301, %v228, 0
      %v306 = vsel %vm301, %v229, 0
      %v309 = vsel %vm301, %v230, 0
      %v312 = vsel %vm301, %v231, 0
      %v315 = vsel %vm301, %v232, 0
      %v318 = vsel %vm301, %v233, 0
      %v321 = vsel %vm301, %v234, 0
      %v324 = vsel %vm301, %v235, 0
      %v327 = vsel %vm301, %v236, 0
      %v330 = vsel %vm301, %v237, 0
      %v333 = vsel %vm301, %v238, 0
      %v336 = vsel %vm301, %v239, 0
      %v339 = vsel %vm301, %v240, 0
      %v342 = vsel %vm301, %v241, 0
      %v345 = vsel %vm301, %v242, 0
      %v348 = vsel %vm301, %v243, 0
      %v351 = vsel %vm301, %v244, 0
      %v354 = vsel %vm301, %v245, 0
      %v357 = vsel %vm301, %v246, 0
      %v360 = vsel %vm301, %v247, 0
      %v363 = vsel %vm301, %v248, 0
      %v366 = vsel %vm301, %v249, 0
      %v369 = vsel %vm301, %v250, 0
      %v372 = vsel %vm301, %v251, 0
      %v375 = vsel %vm301, %v252, 0
      %v378 = vsel %vm301, %v253, 0
      %v381 = vsel %vm301, %v254, 0
      %v384 = vsel %vm301, %v255, 0
      %v387 = vsel %vm301, %v256, 0
      %v390 = vsel %vm301, %v257, 0
      %v393 = vsel %vm301, %v258, 0
      %v396 = vsel %vm301, %v259, 0
      %v399 = vsel %vm301, %v260, 0
      %v402 = vsel %vm301, %v261, 0
      %v405 = vsel %vm301, %v262, 0
      %v408 = vsel %vm301, %v263, 0
      %v411 = vsel %vm301, %v264, 0
      %v414 = vsel %vm301, %v265, 0
      %v417 = vsel %vm301, %v266, 0
      %v420 = vsel %vm301, %v267, 0
      %v423 = vsel %vm301, %v268, 0
      %v426 = vsel %vm301, %v269, 0
      %v429 = vsel %vm301, %v270, 0
      %v432 = vsel %vm301, %v271, 0
      %v435 = vsel %vm301, %v272, 0
      %v438 = vsel %vm301, %v273, 0
      %v441 = vsel %vm301, %v274, 0
      %v444 = vsel %vm301, %v275, 0
      %v447 = vsel %vm301, %v276, 0
      %v450 = vsel %vm301, %v277, 0
      %v453 = vsel %vm301, %v278, 0
      %v456 = vsel %vm301, %v279, 0
      %v459 = vsel %vm301, %v280, 0
      %v462 = vsel %vm301, %v281, 0
      %v465 = vsel %vm301, %v282, 0
      %v468 = vsel %vm301, %v283, 0
      %v471 = vsel %vm301, %v284, 0
      %v474 = vsel %vm301, %v285, 0
      %v477 = vsel %vm301, %v286, 0
      %v480 = vsel %vm301, %v287, 0
      %v483 = vsel %vm301, %v288, 0
      %v486 = vsel %vm301, %v289, 0
      %v489 = vsel %vm301, %v290, 0
      %v492 = vsel %vm301, %v291, 0
      %494 = vmatprep.subr.mxu0 0.0
      %495 = vmatpush1.msra.mxu0 %v292
      %496 = vmatprep.subr.mxu0 0.0
      %497 = vmatpush1.msra.mxu0 %v293
      %498 = vmatprep.subr.mxu0 0.0
      %499 = vmatpush1.msra.mxu0 0.0
      %500 = vmatprep.subr.mxu0 0.0
      %501 = vmatpush1.msra.mxu0 0.0
      %502 = vmatprep.subr.mxu0 0.0
      %503 = vmatpush1.msra.mxu0 0.0
      %504 = vmatprep.subr.mxu0 0.0
      %505 = vmatpush1.msra.mxu0 0.0
      %506 = vmatprep.subr.mxu0 0.0
      %507 = vmatpush1.msra.mxu0 0.0
      %508 = vmatprep.subr.mxu0 0.0
      %509 = vmatpush1.msra.mxu0 0.0
      %510 = vmatprep.subr.mxu0 0.0
      %511 = vmatpush1.msra.mxu0 0.0
      %512 = vmatprep.subr.mxu0 0.0
      %513 = vmatpush1.msra.mxu0 0.0
      %514 = vmatprep.subr.mxu0 0.0
      %515 = vmatpush1.msra.mxu0 0.0
      %516 = vmatprep.subr.mxu0 0.0
      %517 = vmatpush1.msra.mxu0 0.0
      %518 = vmatprep.subr.mxu0 0.0
      %519 = vmatpush1.msra.mxu0 0.0
      %520 = vmatprep.subr.mxu0 0.0
      %521 = vmatpush1.msra.mxu0 0.0
      %522 = vmatprep.subr.mxu0 0.0
      %523 = vmatpush1.msra.mxu0 0.0
      %524 = vmatprep.subr.mxu0 0.0
      %525 = vmatpush1.msra.mxu0 0.0
      %526 = vmatprep.subr.mxu0 0.0
      %527 = vmatpush1.msra.mxu0 0.0
      %528 = vmatprep.subr.mxu0 0.0
      %529 = vmatpush1.msra.mxu0 0.0
      %530 = vmatprep.subr.mxu0 0.0
      %531 = vmatpush1.msra.mxu0 0.0
      %532 = vmatprep.subr.mxu0 0.0
      %533 = vmatpush1.msra.mxu0 0.0
      %534 = vmatprep.subr.mxu0 0.0
      %535 = vmatpush1.msra.mxu0 0.0
      %536 = vmatprep.subr.mxu0 0.0
      %537 = vmatpush1.msra.mxu0 0.0
      %538 = vmatprep.subr.mxu0 0.0
      %539 = vmatpush1.msra.mxu0 0.0
      %540 = vmatprep.subr.mxu0 0.0
      %541 = vmatpush1.msra.mxu0 0.0
      %542 = vmatprep.subr.mxu0 0.0
      %543 = vmatpush1.msra.mxu0 0.0
      %544 = vmatprep.subr.mxu0 0.0
      %545 = vmatpush1.msra.mxu0 0.0
      %546 = vmatprep.subr.mxu0 0.0
      %547 = vmatpush1.msra.mxu0 0.0
      %548 = vmatprep.subr.mxu0 0.0
      %549 = vmatpush1.msra.mxu0 0.0
      %550 = vmatprep.subr.mxu0 0.0
      %551 = vmatpush1.msra.mxu0 0.0
      %552 = vmatprep.subr.mxu0 0.0
      %553 = vmatpush1.msra.mxu0 0.0
      %554 = vmatprep.subr.mxu0 0.0
      %555 = vmatpush1.msra.mxu0 0.0
      %556 = vmatprep.subr.mxu0 0.0
      %557 = vmatpush1.msra.mxu0 0.0
      %558 = vmatprep.mubr.f32.mxu0 0.0
      %559 = vmatmul.mubr.f32.gmra.mrb[0].mxu0 %v303
      %v560 = vpop.f32.mrb[0].mxu0
      %v561 = vadd.f32 %v299, %v560
      %v562 = vpop.f32.mrb[0].mxu0
      %563 = vmatprep.mubr.f32.mxu0 0.0
      %564 = vmatmul.mubr.f32.gmra.mrb[0].mxu0 %v306
      %v565 = vpop.f32.mrb[0].mxu0
      %v566 = vadd.f32 %v299, %v565
      %v567 = vpop.f32.mrb[0].mxu0
      %568 = vmatprep.mubr.f32.mxu0 0.0
      %569 = vmatmul.mubr.f32.gmra.mrb[0].mxu0 %v309
      %v570 = vpop.f32.mrb[0].mxu0
      %v571 = vadd.f32 %v299, %v570
      %v572 = vpop.f32.mrb[0].mxu0
      %573 = vmatprep.mubr.f32.mxu0 0.0
      %574 = vmatmul.mubr.f32.gmra.mrb[0].mxu0 %v312
      %v575 = vpop.f32.mrb[0].mxu0
      %v576 = vadd.f32 %v299, %v575
      %v577 = vpop.f32.mrb[0].mxu0
      %578 = vmatprep.mubr.f32.mxu0 0.0
      %579 = vmatmul.mubr.f32.gmra.mrb[0].mxu0 %v315
      %v580 = vpop.f32.mrb[0].mxu0
      %v581 = vadd.f32 %v299, %v580
      %v582 = vpop.f32.mrb[0].mxu0
      %583 = vmatprep.mubr.f32.mxu0 0.0
      %584 = vmatmul.mubr.f32.gmra.mrb[0].mxu0 %v318
      %v585 = vpop.f32.mrb[0].mxu0
      %v586 = vadd.f32 %v299, %v585
      %v587 = vpop.f32.mrb[0].mxu0
      %588 = vmatprep.mubr.f32.mxu0 0.0
      %589 = vmatmul.mubr.f32.gmra.mrb[0].mxu0 %v321
      %v590 = vpop.f32.mrb[0].mxu0
      %v591 = vadd.f32 %v299, %v590
      %v592 = vpop.f32.mrb[0].mxu0
      %593 = vmatprep.mubr.f32.mxu0 0.0
      %594 = vmatmul.mubr.f32.gmra.mrb[0].mxu0 %v324
      %v595 = vpop.f32.mrb[0].mxu0
      %v596 = vadd.f32 %v299, %v595
      %v597 = vpop.f32.mrb[0].mxu0
      %598 = vmatprep.mubr.f32.mxu0 0.0
      %599 = vmatmul.mubr.f32.gmra.mrb[0].mxu0 %v327
      %v600 = vpop.f32.mrb[0].mxu0
      %v601 = vadd.f32 %v299, %v600
      %v602 = vpop.f32.mrb[0].mxu0
      %603 = vmatprep.mubr.f32.mxu0 0.0
      %604 = vmatmul.mubr.f32.gmra.mrb[0].mxu0 %v330
      %v605 = vpop.f32.mrb[0].mxu0
      %v606 = vadd.f32 %v299, %v605
      %v607 = vpop.f32.mrb[0].mxu0
      %608 = vmatprep.mubr.f32.mxu0 0.0
      %609 = vmatmul.mubr.f32.gmra.mrb[0].mxu0 %v333
      %v610 = vpop.f32.mrb[0].mxu0
      %v611 = vadd.f32 %v299, %v610
      %v612 = vpop.f32.mrb[0].mxu0
      %613 = vmatprep.mubr.f32.mxu0 0.0
      %614 = vmatmul.mubr.f32.gmra.mrb[0].mxu0 %v336
      %v615 = vpop.f32.mrb[0].mxu0
      %v616 = vadd.f32 %v299, %v615
      %v617 = vpop.f32.mrb[0].mxu0
      %618 = vmatprep.mubr.f32.mxu0 0.0
      %619 = vmatmul.mubr.f32.gmra.mrb[0].mxu0 %v339
      %v620 = vpop.f32.mrb[0].mxu0
      %v621 = vadd.f32 %v299, %v620
      %v622 = vpop.f32.mrb[0].mxu0
      %623 = vmatprep.mubr.f32.mxu0 0.0
      %624 = vmatmul.mubr.f32.gmra.mrb[0].mxu0 %v342
      %v625 = vpop.f32.mrb[0].mxu0
      %v626 = vadd.f32 %v299, %v625
      %v627 = vpop.f32.mrb[0].mxu0
      %628 = vmatprep.mubr.f32.mxu0 0.0
      %629 = vmatmul.mubr.f32.gmra.mrb[0].mxu0 %v345
      %v630 = vpop.f32.mrb[0].mxu0
      %v631 = vadd.f32 %v299, %v630
      %v632 = vpop.f32.mrb[0].mxu0
      %633 = vmatprep.mubr.f32.mxu0 0.0
      %634 = vmatmul.mubr.f32.gmra.mrb[0].mxu0 %v348
      %v635 = vpop.f32.mrb[0].mxu0
      %v636 = vadd.f32 %v299, %v635
      %v637 = vpop.f32.mrb[0].mxu0
      %638 = vmatprep.mubr.f32.mxu0 0.0
      %639 = vmatmul.mubr.f32.gmra.mrb[0].mxu0 %v351
      %v640 = vpop.f32.mrb[0].mxu0
      %v641 = vadd.f32 %v299, %v640
      %v642 = vpop.f32.mrb[0].mxu0
      %643 = vmatprep.mubr.f32.mxu0 0.0
      %644 = vmatmul.mubr.f32.gmra.mrb[0].mxu0 %v354
      %v645 = vpop.f32.mrb[0].mxu0
      %v646 = vadd.f32 %v299, %v645
      %v647 = vpop.f32.mrb[0].mxu0
      %648 = vmatprep.mubr.f32.mxu0 0.0
      %649 = vmatmul.mubr.f32.gmra.mrb[0].mxu0 %v357
      %v650 = vpop.f32.mrb[0].mxu0
      %v651 = vadd.f32 %v299, %v650
      %v652 = vpop.f32.mrb[0].mxu0
      %653 = vmatprep.mubr.f32.mxu0 0.0
      %654 = vmatmul.mubr.f32.gmra.mrb[0].mxu0 %v360
      %v655 = vpop.f32.mrb[0].mxu0
      %v656 = vadd.f32 %v299, %v655
      %v657 = vpop.f32.mrb[0].mxu0
      %658 = vmatprep.mubr.f32.mxu0 0.0
      %659 = vmatmul.mubr.f32.gmra.mrb[0].mxu0 %v363
      %v660 = vpop.f32.mrb[0].mxu0
      %v661 = vadd.f32 %v299, %v660
      %v662 = vpop.f32.mrb[0].mxu0
      %663 = vmatprep.mubr.f32.mxu0 0.0
      %664 = vmatmul.mubr.f32.gmra.mrb[0].mxu0 %v366
      %v665 = vpop.f32.mrb[0].mxu0
      %v666 = vadd.f32 %v299, %v665
      %v667 = vpop.f32.mrb[0].mxu0
      %668 = vmatprep.mubr.f32.mxu0 0.0
      %669 = vmatmul.mubr.f32.gmra.mrb[0].mxu0 %v369
      %v670 = vpop.f32.mrb[0].mxu0
      %v671 = vadd.f32 %v299, %v670
      %v672 = vpop.f32.mrb[0].mxu0
      %673 = vmatprep.mubr.f32.mxu0 0.0
      %674 = vmatmul.mubr.f32.gmra.mrb[0].mxu0 %v372
      %v675 = vpop.f32.mrb[0].mxu0
      %v676 = vadd.f32 %v299, %v675
      %v677 = vpop.f32.mrb[0].mxu0
      %678 = vmatprep.mubr.f32.mxu0 0.0
      %679 = vmatmul.mubr.f32.gmra.mrb[0].mxu0 %v375
      %v680 = vpop.f32.mrb[0].mxu0
      %v681 = vadd.f32 %v299, %v680
      %v682 = vpop.f32.mrb[0].mxu0
      %683 = vmatprep.mubr.f32.mxu0 0.0
      %684 = vmatmul.mubr.f32.gmra.mrb[0].mxu0 %v378
      %v685 = vpop.f32.mrb[0].mxu0
      %v686 = vadd.f32 %v299, %v685
      %v687 = vpop.f32.mrb[0].mxu0
      %688 = vmatprep.mubr.f32.mxu0 0.0
      %689 = vmatmul.mubr.f32.gmra.mrb[0].mxu0 %v381
      %v690 = vpop.f32.mrb[0].mxu0
      %v691 = vadd.f32 %v299, %v690
      %v692 = vpop.f32.mrb[0].mxu0
      %693 = vmatprep.mubr.f32.mxu0 0.0
      %694 = vmatmul.mubr.f32.gmra.mrb[0].mxu0 %v384
      %v695 = vpop.f32.mrb[0].mxu0
      %v696 = vadd.f32 %v299, %v695
      %v697 = vpop.f32.mrb[0].mxu0
      %698 = vmatprep.mubr.f32.mxu0 0.0
      %699 = vmatmul.mubr.f32.gmra.mrb[0].mxu0 %v387
      %v700 = vpop.f32.mrb[0].mxu0
      %v701 = vadd.f32 %v299, %v700
      %v702 = vpop.f32.mrb[0].mxu0
      %703 = vmatprep.mubr.f32.mxu0 0.0
      %704 = vmatmul.mubr.f32.gmra.mrb[0].mxu0 %v390
      %v705 = vpop.f32.mrb[0].mxu0
      %v706 = vadd.f32 %v299, %v705
      %v707 = vpop.f32.mrb[0].mxu0
      %708 = vmatprep.mubr.f32.mxu0 0.0
      %709 = vmatmul.mubr.f32.gmra.mrb[0].mxu0 %v393
      %v710 = vpop.f32.mrb[0].mxu0
      %v711 = vadd.f32 %v299, %v710
      %v712 = vpop.f32.mrb[0].mxu0
      %713 = vmatprep.mubr.f32.mxu0 0.0
      %714 = vmatmul.mubr.f32.gmra.mrb[0].mxu0 %v396
      %v715 = vpop.f32.mrb[0].mxu0
      %v716 = vadd.f32 %v299, %v715
      %v717 = vpop.f32.mrb[0].mxu0
      %718 = vmatprep.mubr.f32.mxu0 0.0
      %719 = vmatmul.mubr.f32.gmra.mrb[0].mxu0 %v399
      %v720 = vpop.f32.mrb[0].mxu0
      %v721 = vadd.f32 %v299, %v720
      %v722 = vpop.f32.mrb[0].mxu0
      %723 = vmatprep.mubr.f32.mxu0 0.0
      %724 = vmatmul.mubr.f32.gmra.mrb[0].mxu0 %v402
      %v725 = vpop.f32.mrb[0].mxu0
      %v726 = vadd.f32 %v299, %v725
      %v727 = vpop.f32.mrb[0].mxu0
      %728 = vmatprep.mubr.f32.mxu0 0.0
      %729 = vmatmul.mubr.f32.gmra.mrb[0].mxu0 %v405
      %v730 = vpop.f32.mrb[0].mxu0
      %v731 = vadd.f32 %v299, %v730
      %v732 = vpop.f32.mrb[0].mxu0
      %733 = vmatprep.mubr.f32.mxu0 0.0
      %734 = vmatmul.mubr.f32.gmra.mrb[0].mxu0 %v408
      %v735 = vpop.f32.mrb[0].mxu0
      %v736 = vadd.f32 %v299, %v735
      %v737 = vpop.f32.mrb[0].mxu0
      %738 = vmatprep.mubr.f32.mxu0 0.0
      %739 = vmatmul.mubr.f32.gmra.mrb[0].mxu0 %v411
      %v740 = vpop.f32.mrb[0].mxu0
      %v741 = vadd.f32 %v299, %v740
      %v742 = vpop.f32.mrb[0].mxu0
      %743 = vmatprep.mubr.f32.mxu0 0.0
      %744 = vmatmul.mubr.f32.gmra.mrb[0].mxu0 %v414
      %v745 = vpop.f32.mrb[0].mxu0
      %v746 = vadd.f32 %v299, %v745
      %v747 = vpop.f32.mrb[0].mxu0
      %748 = vmatprep.mubr.f32.mxu0 0.0
      %749 = vmatmul.mubr.f32.gmra.mrb[0].mxu0 %v417
      %v750 = vpop.f32.mrb[0].mxu0
      %v751 = vadd.f32 %v299, %v750
      %v752 = vpop.f32.mrb[0].mxu0
      %753 = vmatprep.mubr.f32.mxu0 0.0
      %754 = vmatmul.mubr.f32.gmra.mrb[0].mxu0 %v420
      %v755 = vpop.f32.mrb[0].mxu0
      %v756 = vadd.f32 %v299, %v755
      %v757 = vpop.f32.mrb[0].mxu0
      %758 = vmatprep.mubr.f32.mxu0 0.0
      %759 = vmatmul.mubr.f32.gmra.mrb[0].mxu0 %v423
      %v760 = vpop.f32.mrb[0].mxu0
      %v761 = vadd.f32 %v299, %v760
      %v762 = vpop.f32.mrb[0].mxu0
      %763 = vmatprep.mubr.f32.mxu0 0.0
      %764 = vmatmul.mubr.f32.gmra.mrb[0].mxu0 %v426
      %v765 = vpop.f32.mrb[0].mxu0
      %v766 = vadd.f32 %v299, %v765
      %v767 = vpop.f32.mrb[0].mxu0
      %768 = vmatprep.mubr.f32.mxu0 0.0
      %769 = vmatmul.mubr.f32.gmra.mrb[0].mxu0 %v429
      %v770 = vpop.f32.mrb[0].mxu0
      %v771 = vadd.f32 %v299, %v770
      %v772 = vpop.f32.mrb[0].mxu0
      %773 = vmatprep.mubr.f32.mxu0 0.0
      %774 = vmatmul.mubr.f32.gmra.mrb[0].mxu0 %v432
      %v775 = vpop.f32.mrb[0].mxu0
      %v776 = vadd.f32 %v299, %v775
      %v777 = vpop.f32.mrb[0].mxu0
      %778 = vmatprep.mubr.f32.mxu0 0.0
      %779 = vmatmul.mubr.f32.gmra.mrb[0].mxu0 %v435
      %v780 = vpop.f32.mrb[0].mxu0
      %v781 = vadd.f32 %v299, %v780
      %v782 = vpop.f32.mrb[0].mxu0
      %783 = vmatprep.mubr.f32.mxu0 0.0
      %784 = vmatmul.mubr.f32.gmra.mrb[0].mxu0 %v438
      %v785 = vpop.f32.mrb[0].mxu0
      %v786 = vadd.f32 %v299, %v785
      %v787 = vpop.f32.mrb[0].mxu0
      %788 = vmatprep.mubr.f32.mxu0 0.0
      %789 = vmatmul.mubr.f32.gmra.mrb[0].mxu0 %v441
      %v790 = vpop.f32.mrb[0].mxu0
      %v791 = vadd.f32 %v299, %v790
      %v792 = vpop.f32.mrb[0].mxu0
      %793 = vmatprep.mubr.f32.mxu0 0.0
      %794 = vmatmul.mubr.f32.gmra.mrb[0].mxu0 %v444
      %v795 = vpop.f32.mrb[0].mxu0
      %v796 = vadd.f32 %v299, %v795
      %v797 = vpop.f32.mrb[0].mxu0
      %798 = vmatprep.mubr.f32.mxu0 0.0
      %799 = vmatmul.mubr.f32.gmra.mrb[0].mxu0 %v447
      %v800 = vpop.f32.mrb[0].mxu0
      %v801 = vadd.f32 %v299, %v800
      %v802 = vpop.f32.mrb[0].mxu0
      %803 = vmatprep.mubr.f32.mxu0 0.0
      %804 = vmatmul.mubr.f32.gmra.mrb[0].mxu0 %v450
      %v805 = vpop.f32.mrb[0].mxu0
      %v806 = vadd.f32 %v299, %v805
      %v807 = vpop.f32.mrb[0].mxu0
      %808 = vmatprep.mubr.f32.mxu0 0.0
      %809 = vmatmul.mubr.f32.gmra.mrb[0].mxu0 %v453
      %v810 = vpop.f32.mrb[0].mxu0
      %v811 = vadd.f32 %v299, %v810
      %v812 = vpop.f32.mrb[0].mxu0
      %813 = vmatprep.mubr.f32.mxu0 0.0
      %814 = vmatmul.mubr.f32.gmra.mrb[0].mxu0 %v456
      %v815 = vpop.f32.mrb[0].mxu0
      %v816 = vadd.f32 %v299, %v815
      %v817 = vpop.f32.mrb[0].mxu0
      %818 = vmatprep.mubr.f32.mxu0 0.0
      %819 = vmatmul.mubr.f32.gmra.mrb[0].mxu0 %v459
      %v820 = vpop.f32.mrb[0].mxu0
      %v821 = vadd.f32 %v299, %v820
      %v822 = vpop.f32.mrb[0].mxu0
      %823 = vmatprep.mubr.f32.mxu0 0.0
      %824 = vmatmul.mubr.f32.gmra.mrb[0].mxu0 %v462
      %v825 = vpop.f32.mrb[0].mxu0
      %v826 = vadd.f32 %v299, %v825
      %v827 = vpop.f32.mrb[0].mxu0
      %828 = vmatprep.mubr.f32.mxu0 0.0
      %829 = vmatmul.mubr.f32.gmra.mrb[0].mxu0 %v465
      %v830 = vpop.f32.mrb[0].mxu0
      %v831 = vadd.f32 %v299, %v830
      %v832 = vpop.f32.mrb[0].mxu0
      %833 = vmatprep.mubr.f32.mxu0 0.0
      %834 = vmatmul.mubr.f32.gmra.mrb[0].mxu0 %v468
      %v835 = vpop.f32.mrb[0].mxu0
      %v836 = vadd.f32 %v299, %v835
      %v837 = vpop.f32.mrb[0].mxu0
      %838 = vmatprep.mubr.f32.mxu0 0.0
      %839 = vmatmul.mubr.f32.gmra.mrb[0].mxu0 %v471
      %v840 = vpop.f32.mrb[0].mxu0
      %v841 = vadd.f32 %v299, %v840
      %v842 = vpop.f32.mrb[0].mxu0
      %843 = vmatprep.mubr.f32.mxu0 0.0
      %844 = vmatmul.mubr.f32.gmra.mrb[0].mxu0 %v474
      %v845 = vpop.f32.mrb[0].mxu0
      %v846 = vadd.f32 %v299, %v845
      %v847 = vpop.f32.mrb[0].mxu0
      %848 = vmatprep.mubr.f32.mxu0 0.0
      %849 = vmatmul.mubr.f32.gmra.mrb[0].mxu0 %v477
      %v850 = vpop.f32.mrb[0].mxu0
      %v851 = vadd.f32 %v299, %v850
      %v852 = vpop.f32.mrb[0].mxu0
      %853 = vmatprep.mubr.f32.mxu0 0.0
      %854 = vmatmul.mubr.f32.gmra.mrb[0].mxu0 %v480
      %v855 = vpop.f32.mrb[0].mxu0
      %v856 = vadd.f32 %v299, %v855
      %v857 = vpop.f32.mrb[0].mxu0
      %858 = vmatprep.mubr.f32.mxu0 0.0
      %859 = vmatmul.mubr.f32.gmra.mrb[0].mxu0 %v483
      %v860 = vpop.f32.mrb[0].mxu0
      %v861 = vadd.f32 %v299, %v860
      %v862 = vpop.f32.mrb[0].mxu0
      %863 = vmatprep.mubr.f32.mxu0 0.0
      %864 = vmatmul.mubr.f32.gmra.mrb[0].mxu0 %v486
      %v865 = vpop.f32.mrb[0].mxu0
      %v866 = vadd.f32 %v299, %v865
      %v867 = vpop.f32.mrb[0].mxu0
      %868 = vmatprep.mubr.f32.mxu0 0.0
      %869 = vmatmul.mubr.f32.gmra.mrb[0].mxu0 %v489
      %v870 = vpop.f32.mrb[0].mxu0
      %v871 = vadd.f32 %v299, %v870
      %v872 = vpop.f32.mrb[0].mxu0
      %873 = vmatprep.mubr.f32.mxu0 0.0
      %874 = vmatmul.mubr.f32.gmra.mrb[0].mxu0 %v492
      %v875 = vpop.f32.mrb[0].mxu0
      %v876 = vadd.f32 %v299, %v875
      %v877 = vpop.f32.mrb[0].mxu0
      %878 = vdwg.mxu0
      %v879 = vmax.f32 %v561, 0.0
      %v880 = vmax.f32 %v566, 0.0
      %v881 = vmax.f32 %v571, 0.0
      %v882 = vmax.f32 %v576, 0.0
      %v883 = vmax.f32 %v581, 0.0
      %v884 = vmax.f32 %v586, 0.0
      %v885 = vmax.f32 %v591, 0.0
      %v886 = vmax.f32 %v596, 0.0
      %v887 = vmax.f32 %v601, 0.0
      %v888 = vmax.f32 %v606, 0.0
      %v889 = vmax.f32 %v611, 0.0
      %v890 = vmax.f32 %v616, 0.0
      %v891 = vmax.f32 %v621, 0.0
      %v892 = vmax.f32 %v626, 0.0
      %v893 = vmax.f32 %v631, 0.0
      %v894 = vmax.f32 %v636, 0.0
      %v895 = vmax.f32 %v641, 0.0
      %v896 = vmax.f32 %v646, 0.0
      %v897 = vmax.f32 %v651, 0.0
      %v898 = vmax.f32 %v656, 0.0
      %v899 = vmax.f32 %v661, 0.0
      %v900 = vmax.f32 %v666, 0.0
      %v901 = vmax.f32 %v671, 0.0
      %v902 = vmax.f32 %v676, 0.0
      %v903 = vmax.f32 %v681, 0.0
      %v904 = vmax.f32 %v686, 0.0
      %v905 = vmax.f32 %v691, 0.0
      %v906 = vmax.f32 %v696, 0.0
      %v907 = vmax.f32 %v701, 0.0
      %v908 = vmax.f32 %v706, 0.0
      %v909 = vmax.f32 %v711, 0.0
      %v910 = vmax.f32 %v716, 0.0
      %v911 = vmax.f32 %v721, 0.0
      %v912 = vmax.f32 %v726, 0.0
      %v913 = vmax.f32 %v731, 0.0
      %v914 = vmax.f32 %v736, 0.0
      %v915 = vmax.f32 %v741, 0.0
      %v916 = vmax.f32 %v746, 0.0
      %v917 = vmax.f32 %v751, 0.0
      %v918 = vmax.f32 %v756, 0.0
      %v919 = vmax.f32 %v761, 0.0
      %v920 = vmax.f32 %v766, 0.0
      %v921 = vmax.f32 %v771, 0.0
      %v922 = vmax.f32 %v776, 0.0
      %v923 = vmax.f32 %v781, 0.0
      %v924 = vmax.f32 %v786, 0.0
      %v925 = vmax.f32 %v791, 0.0
      %v926 = vmax.f32 %v796, 0.0
      %v927 = vmax.f32 %v801, 0.0
      %v928 = vmax.f32 %v806, 0.0
      %v929 = vmax.f32 %v811, 0.0
      %v930 = vmax.f32 %v816, 0.0
      %v931 = vmax.f32 %v821, 0.0
      %v932 = vmax.f32 %v826, 0.0
      %v933 = vmax.f32 %v831, 0.0
      %v934 = vmax.f32 %v836, 0.0
      %v935 = vmax.f32 %v841, 0.0
      %v936 = vmax.f32 %v846, 0.0
      %v937 = vmax.f32 %v851, 0.0
      %v938 = vmax.f32 %v856, 0.0
      %v939 = vmax.f32 %v861, 0.0
      %v940 = vmax.f32 %v866, 0.0
      %v941 = vmax.f32 %v871, 0.0
      %v942 = vmax.f32 %v876, 0.0
      %v943 = vld [vmem:[%s3] sm:$0xff]
      %v944 = vld [vmem:[%s3 + $0x8] sm:$0xff]
      %v945 = vld [vmem:[%s3 + $0x10] sm:$0xff]
      %v946 = vld [vmem:[%s3 + $0x18] sm:$0xff]
      %v947 = vld [vmem:[%s4] sm:$0x1]
      %v949 = vlaneseq
      %v950 = vshrl.u32 %v949, 7
      %v951 = vsub.s32 0, %v950
      %v952 = vrot.slane %v947, %v951
      %vm954 = vcmask 261120
      %v956 = vsel %vm954, %v879, 0
      %v959 = vsel %vm954, %v880, 0
      %v962 = vsel %vm954, %v881, 0
      %v965 = vsel %vm954, %v882, 0
      %v968 = vsel %vm954, %v883, 0
      %v971 = vsel %vm954, %v884, 0
      %v974 = vsel %vm954, %v885, 0
      %v977 = vsel %vm954, %v886, 0
      %v980 = vsel %vm954, %v887, 0
      %v983 = vsel %vm954, %v888, 0
      %v986 = vsel %vm954, %v889, 0
      %v989 = vsel %vm954, %v890, 0
      %v992 = vsel %vm954, %v891, 0
      %v995 = vsel %vm954, %v892, 0
      %v998 = vsel %vm954, %v893, 0
      %v1001 = vsel %vm954, %v894, 0
      %v1004 = vsel %vm954, %v895, 0
      %v1007 = vsel %vm954, %v896, 0
      %v1010 = vsel %vm954, %v897, 0
      %v1013 = vsel %vm954, %v898, 0
      %v1016 = vsel %vm954, %v899, 0
      %v1019 = vsel %vm954, %v900, 0
      %v1022 = vsel %vm954, %v901, 0
      %v1025 = vsel %vm954, %v902, 0
      %v1028 = vsel %vm954, %v903, 0
      %v1031 = vsel %vm954, %v904, 0
      %v1034 = vsel %vm954, %v905, 0
      %v1037 = vsel %vm954, %v906, 0
      %v1040 = vsel %vm954, %v907, 0
      %v1043 = vsel %vm954, %v908, 0
      %v1046 = vsel %vm954, %v909, 0
      %v1049 = vsel %vm954, %v910, 0
      %v1052 = vsel %vm954, %v911, 0
      %v1055 = vsel %vm954, %v912, 0
      %v1058 = vsel %vm954, %v913, 0
      %v1061 = vsel %vm954, %v914, 0
      %v1064 = vsel %vm954, %v915, 0
      %v1067 = vsel %vm954, %v916, 0
      %v1070 = vsel %vm954, %v917, 0
      %v1073 = vsel %vm954, %v918, 0
      %v1076 = vsel %vm954, %v919, 0
      %v1079 = vsel %vm954, %v920, 0
      %v1082 = vsel %vm954, %v921, 0
      %v1085 = vsel %vm954, %v922, 0
      %v1088 = vsel %vm954, %v923, 0
      %v1091 = vsel %vm954, %v924, 0
      %v1094 = vsel %vm954, %v925, 0
      %v1097 = vsel %vm954, %v926, 0
      %v1100 = vsel %vm954, %v927, 0
      %v1103 = vsel %vm954, %v928, 0
      %v1106 = vsel %vm954, %v929, 0
      %v1109 = vsel %vm954, %v930, 0
      %v1112 = vsel %vm954, %v931, 0
      %v1115 = vsel %vm954, %v932, 0
      %v1118 = vsel %vm954, %v933, 0
      %v1121 = vsel %vm954, %v934, 0
      %v1124 = vsel %vm954, %v935, 0
      %v1127 = vsel %vm954, %v936, 0
      %v1130 = vsel %vm954, %v937, 0
      %v1133 = vsel %vm954, %v938, 0
      %v1136 = vsel %vm954, %v939, 0
      %v1139 = vsel %vm954, %v940, 0
      %v1142 = vsel %vm954, %v941, 0
      %v1145 = vsel %vm954, %v942, 0
      %1147 = vmatprep.subr.mxu0 0.0
      %1148 = vmatpush1.msra.mxu0 %v943
      %1149 = vmatprep.subr.mxu0 0.0
      %1150 = vmatpush1.msra.mxu0 %v944
      %1151 = vmatprep.subr.mxu0 0.0
      %1152 = vmatpush1.msra.mxu0 %v945
      %1153 = vmatprep.subr.mxu0 0.0
      %1154 = vmatpush1.msra.mxu0 %v946
      %1155 = vmatprep.subr.mxu0 0.0
      %1156 = vmatpush1.msra.mxu0 0.0
      %1157 = vmatprep.subr.mxu0 0.0
      %1158 = vmatpush1.msra.mxu0 0.0
      %1159 = vmatprep.subr.mxu0 0.0
      %1160 = vmatpush1.msra.mxu0 0.0
      %1161 = vmatprep.subr.mxu0 0.0
      %1162 = vmatpush1.msra.mxu0 0.0
      %1163 = vmatprep.subr.mxu0 0.0
      %1164 = vmatpush1.msra.mxu0 0.0
      %1165 = vmatprep.subr.mxu0 0.0
      %1166 = vmatpush1.msra.mxu0 0.0
      %1167 = vmatprep.subr.mxu0 0.0
      %1168 = vmatpush1.msra.mxu0 0.0
      %1169 = vmatprep.subr.mxu0 0.0
      %1170 = vmatpush1.msra.mxu0 0.0
      %1171 = vmatprep.subr.mxu0 0.0
      %1172 = vmatpush1.msra.mxu0 0.0
      %1173 = vmatprep.subr.mxu0 0.0
      %1174 = vmatpush1.msra.mxu0 0.0
      %1175 = vmatprep.subr.mxu0 0.0
      %1176 = vmatpush1.msra.mxu0 0.0
      %1177 = vmatprep.subr.mxu0 0.0
      %1178 = vmatpush1.msra.mxu0 0.0
      %1179 = vmatprep.subr.mxu0 0.0
      %1180 = vmatpush1.msra.mxu0 0.0
      %1181 = vmatprep.subr.mxu0 0.0
      %1182 = vmatpush1.msra.mxu0 0.0
      %1183 = vmatprep.subr.mxu0 0.0
      %1184 = vmatpush1.msra.mxu0 0.0
      %1185 = vmatprep.subr.mxu0 0.0
      %1186 = vmatpush1.msra.mxu0 0.0
      %1187 = vmatprep.subr.mxu0 0.0
      %1188 = vmatpush1.msra.mxu0 0.0
      %1189 = vmatprep.subr.mxu0 0.0
      %1190 = vmatpush1.msra.mxu0 0.0
      %1191 = vmatprep.subr.mxu0 0.0
      %1192 = vmatpush1.msra.mxu0 0.0
      %1193 = vmatprep.subr.mxu0 0.0
      %1194 = vmatpush1.msra.mxu0 0.0
      %1195 = vmatprep.subr.mxu0 0.0
      %1196 = vmatpush1.msra.mxu0 0.0
      %1197 = vmatprep.subr.mxu0 0.0
      %1198 = vmatpush1.msra.mxu0 0.0
      %1199 = vmatprep.subr.mxu0 0.0
      %1200 = vmatpush1.msra.mxu0 0.0
      %1201 = vmatprep.subr.mxu0 0.0
      %1202 = vmatpush1.msra.mxu0 0.0
      %1203 = vmatprep.subr.mxu0 0.0
      %1204 = vmatpush1.msra.mxu0 0.0
      %1205 = vmatprep.subr.mxu0 0.0
      %1206 = vmatpush1.msra.mxu0 0.0
      %1207 = vmatprep.subr.mxu0 0.0
      %1208 = vmatpush1.msra.mxu0 0.0
      %1209 = vmatprep.subr.mxu0 0.0
      %1210 = vmatpush1.msra.mxu0 0.0
      %1211 = vmatprep.mubr.f32.mxu0 0.0
      %1212 = vmatmul.mubr.f32.gmra.mrb[0].mxu0 %v956
      %v1213 = vpop.f32.mrb[0].mxu0
      %v1214 = vadd.f32 %v952, %v1213
      %v1215 = vpop.f32.mrb[0].mxu0
      %1216 = vmatprep.mubr.f32.mxu0 0.0
      %1217 = vmatmul.mubr.f32.gmra.mrb[0].mxu0 %v959
      %v1218 = vpop.f32.mrb[0].mxu0
      %v1219 = vadd.f32 %v952, %v1218
      %v1220 = vpop.f32.mrb[0].mxu0
      %1221 = vmatprep.mubr.f32.mxu0 0.0
      %1222 = vmatmul.mubr.f32.gmra.mrb[0].mxu0 %v962
      %v1223 = vpop.f32.mrb[0].mxu0
      %v1224 = vadd.f32 %v952, %v1223
      %v1225 = vpop.f32.mrb[0].mxu0
      %1226 = vmatprep.mubr.f32.mxu0 0.0
      %1227 = vmatmul.mubr.f32.gmra.mrb[0].mxu0 %v965
      %v1228 = vpop.f32.mrb[0].mxu0
      %v1229 = vadd.f32 %v952, %v1228
      %v1230 = vpop.f32.mrb[0].mxu0
      %1231 = vmatprep.mubr.f32.mxu0 0.0
      %1232 = vmatmul.mubr.f32.gmra.mrb[0].mxu0 %v968
      %v1233 = vpop.f32.mrb[0].mxu0
      %v1234 = vadd.f32 %v952, %v1233
      %v1235 = vpop.f32.mrb[0].mxu0
      %1236 = vmatprep.mubr.f32.mxu0 0.0
      %1237 = vmatmul.mubr.f32.gmra.mrb[0].mxu0 %v971
      %v1238 = vpop.f32.mrb[0].mxu0
      %v1239 = vadd.f32 %v952, %v1238
      %v1240 = vpop.f32.mrb[0].mxu0
      %1241 = vmatprep.mubr.f32.mxu0 0.0
      %1242 = vmatmul.mubr.f32.gmra.mrb[0].mxu0 %v974
      %v1243 = vpop.f32.mrb[0].mxu0
      %v1244 = vadd.f32 %v952, %v1243
      %v1245 = vpop.f32.mrb[0].mxu0
      %1246 = vmatprep.mubr.f32.mxu0 0.0
      %1247 = vmatmul.mubr.f32.gmra.mrb[0].mxu0 %v977
      %v1248 = vpop.f32.mrb[0].mxu0
      %v1249 = vadd.f32 %v952, %v1248
      %v1250 = vpop.f32.mrb[0].mxu0
      %1251 = vmatprep.mubr.f32.mxu0 0.0
      %1252 = vmatmul.mubr.f32.gmra.mrb[0].mxu0 %v980
      %v1253 = vpop.f32.mrb[0].mxu0
      %v1254 = vadd.f32 %v952, %v1253
      %v1255 = vpop.f32.mrb[0].mxu0
      %1256 = vmatprep.mubr.f32.mxu0 0.0
      %1257 = vmatmul.mubr.f32.gmra.mrb[0].mxu0 %v983
      %v1258 = vpop.f32.mrb[0].mxu0
      %v1259 = vadd.f32 %v952, %v1258
      %v1260 = vpop.f32.mrb[0].mxu0
      %1261 = vmatprep.mubr.f32.mxu0 0.0
      %1262 = vmatmul.mubr.f32.gmra.mrb[0].mxu0 %v986
      %v1263 = vpop.f32.mrb[0].mxu0
      %v1264 = vadd.f32 %v952, %v1263
      %v1265 = vpop.f32.mrb[0].mxu0
      %1266 = vmatprep.mubr.f32.mxu0 0.0
      %1267 = vmatmul.mubr.f32.gmra.mrb[0].mxu0 %v989
      %v1268 = vpop.f32.mrb[0].mxu0
      %v1269 = vadd.f32 %v952, %v1268
      %v1270 = vpop.f32.mrb[0].mxu0
      %1271 = vmatprep.mubr.f32.mxu0 0.0
      %1272 = vmatmul.mubr.f32.gmra.mrb[0].mxu0 %v992
      %v1273 = vpop.f32.mrb[0].mxu0
      %v1274 = vadd.f32 %v952, %v1273
      %v1275 = vpop.f32.mrb[0].mxu0
      %1276 = vmatprep.mubr.f32.mxu0 0.0
      %1277 = vmatmul.mubr.f32.gmra.mrb[0].mxu0 %v995
      %v1278 = vpop.f32.mrb[0].mxu0
      %v1279 = vadd.f32 %v952, %v1278
      %v1280 = vpop.f32.mrb[0].mxu0
      %1281 = vmatprep.mubr.f32.mxu0 0.0
      %1282 = vmatmul.mubr.f32.gmra.mrb[0].mxu0 %v998
      %v1283 = vpop.f32.mrb[0].mxu0
      %v1284 = vadd.f32 %v952, %v1283
      %v1285 = vpop.f32.mrb[0].mxu0
      %1286 = vmatprep.mubr.f32.mxu0 0.0
      %1287 = vmatmul.mubr.f32.gmra.mrb[0].mxu0 %v1001
      %v1288 = vpop.f32.mrb[0].mxu0
      %v1289 = vadd.f32 %v952, %v1288
      %v1290 = vpop.f32.mrb[0].mxu0
      %1291 = vmatprep.mubr.f32.mxu0 0.0
      %1292 = vmatmul.mubr.f32.gmra.mrb[0].mxu0 %v1004
      %v1293 = vpop.f32.mrb[0].mxu0
      %v1294 = vadd.f32 %v952, %v1293
      %v1295 = vpop.f32.mrb[0].mxu0
      %1296 = vmatprep.mubr.f32.mxu0 0.0
      %1297 = vmatmul.mubr.f32.gmra.mrb[0].mxu0 %v1007
      %v1298 = vpop.f32.mrb[0].mxu0
      %v1299 = vadd.f32 %v952, %v1298
      %v1300 = vpop.f32.mrb[0].mxu0
      %1301 = vmatprep.mubr.f32.mxu0 0.0
      %1302 = vmatmul.mubr.f32.gmra.mrb[0].mxu0 %v1010
      %v1303 = vpop.f32.mrb[0].mxu0
      %v1304 = vadd.f32 %v952, %v1303
      %v1305 = vpop.f32.mrb[0].mxu0
      %1306 = vmatprep.mubr.f32.mxu0 0.0
      %1307 = vmatmul.mubr.f32.gmra.mrb[0].mxu0 %v1013
      %v1308 = vpop.f32.mrb[0].mxu0
      %v1309 = vadd.f32 %v952, %v1308
      %v1310 = vpop.f32.mrb[0].mxu0
      %1311 = vmatprep.mubr.f32.mxu0 0.0
      %1312 = vmatmul.mubr.f32.gmra.mrb[0].mxu0 %v1016
      %v1313 = vpop.f32.mrb[0].mxu0
      %v1314 = vadd.f32 %v952, %v1313
      %v1315 = vpop.f32.mrb[0].mxu0
      %1316 = vmatprep.mubr.f32.mxu0 0.0
      %1317 = vmatmul.mubr.f32.gmra.mrb[0].mxu0 %v1019
      %v1318 = vpop.f32.mrb[0].mxu0
      %v1319 = vadd.f32 %v952, %v1318
      %v1320 = vpop.f32.mrb[0].mxu0
      %1321 = vmatprep.mubr.f32.mxu0 0.0
      %1322 = vmatmul.mubr.f32.gmra.mrb[0].mxu0 %v1022
      %v1323 = vpop.f32.mrb[0].mxu0
      %v1324 = vadd.f32 %v952, %v1323
      %v1325 = vpop.f32.mrb[0].mxu0
      %1326 = vmatprep.mubr.f32.mxu0 0.0
      %1327 = vmatmul.mubr.f32.gmra.mrb[0].mxu0 %v1025
      %v1328 = vpop.f32.mrb[0].mxu0
      %v1329 = vadd.f32 %v952, %v1328
      %v1330 = vpop.f32.mrb[0].mxu0
      %1331 = vmatprep.mubr.f32.mxu0 0.0
      %1332 = vmatmul.mubr.f32.gmra.mrb[0].mxu0 %v1028
      %v1333 = vpop.f32.mrb[0].mxu0
      %v1334 = vadd.f32 %v952, %v1333
      %v1335 = vpop.f32.mrb[0].mxu0
      %1336 = vmatprep.mubr.f32.mxu0 0.0
      %1337 = vmatmul.mubr.f32.gmra.mrb[0].mxu0 %v1031
      %v1338 = vpop.f32.mrb[0].mxu0
      %v1339 = vadd.f32 %v952, %v1338
      %v1340 = vpop.f32.mrb[0].mxu0
      %1341 = vmatprep.mubr.f32.mxu0 0.0
      %1342 = vmatmul.mubr.f32.gmra.mrb[0].mxu0 %v1034
      %v1343 = vpop.f32.mrb[0].mxu0
      %v1344 = vadd.f32 %v952, %v1343
      %v1345 = vpop.f32.mrb[0].mxu0
      %1346 = vmatprep.mubr.f32.mxu0 0.0
      %1347 = vmatmul.mubr.f32.gmra.mrb[0].mxu0 %v1037
      %v1348 = vpop.f32.mrb[0].mxu0
      %v1349 = vadd.f32 %v952, %v1348
      %v1350 = vpop.f32.mrb[0].mxu0
      %1351 = vmatprep.mubr.f32.mxu0 0.0
      %1352 = vmatmul.mubr.f32.gmra.mrb[0].mxu0 %v1040
      %v1353 = vpop.f32.mrb[0].mxu0
      %v1354 = vadd.f32 %v952, %v1353
      %v1355 = vpop.f32.mrb[0].mxu0
      %1356 = vmatprep.mubr.f32.mxu0 0.0
      %1357 = vmatmul.mubr.f32.gmra.mrb[0].mxu0 %v1043
      %v1358 = vpop.f32.mrb[0].mxu0
      %v1359 = vadd.f32 %v952, %v1358
      %v1360 = vpop.f32.mrb[0].mxu0
      %1361 = vmatprep.mubr.f32.mxu0 0.0
      %1362 = vmatmul.mubr.f32.gmra.mrb[0].mxu0 %v1046
      %v1363 = vpop.f32.mrb[0].mxu0
      %v1364 = vadd.f32 %v952, %v1363
      %v1365 = vpop.f32.mrb[0].mxu0
      %1366 = vmatprep.mubr.f32.mxu0 0.0
      %1367 = vmatmul.mubr.f32.gmra.mrb[0].mxu0 %v1049
      %v1368 = vpop.f32.mrb[0].mxu0
      %v1369 = vadd.f32 %v952, %v1368
      %v1370 = vpop.f32.mrb[0].mxu0
      %1371 = vmatprep.mubr.f32.mxu0 0.0
      %1372 = vmatmul.mubr.f32.gmra.mrb[0].mxu0 %v1052
      %v1373 = vpop.f32.mrb[0].mxu0
      %v1374 = vadd.f32 %v952, %v1373
      %v1375 = vpop.f32.mrb[0].mxu0
      %1376 = vmatprep.mubr.f32.mxu0 0.0
      %1377 = vmatmul.mubr.f32.gmra.mrb[0].mxu0 %v1055
      %v1378 = vpop.f32.mrb[0].mxu0
      %v1379 = vadd.f32 %v952, %v1378
      %v1380 = vpop.f32.mrb[0].mxu0
      %1381 = vmatprep.mubr.f32.mxu0 0.0
      %1382 = vmatmul.mubr.f32.gmra.mrb[0].mxu0 %v1058
      %v1383 = vpop.f32.mrb[0].mxu0
      %v1384 = vadd.f32 %v952, %v1383
      %v1385 = vpop.f32.mrb[0].mxu0
      %1386 = vmatprep.mubr.f32.mxu0 0.0
      %1387 = vmatmul.mubr.f32.gmra.mrb[0].mxu0 %v1061
      %v1388 = vpop.f32.mrb[0].mxu0
      %v1389 = vadd.f32 %v952, %v1388
      %v1390 = vpop.f32.mrb[0].mxu0
      %1391 = vmatprep.mubr.f32.mxu0 0.0
      %1392 = vmatmul.mubr.f32.gmra.mrb[0].mxu0 %v1064
      %v1393 = vpop.f32.mrb[0].mxu0
      %v1394 = vadd.f32 %v952, %v1393
      %v1395 = vpop.f32.mrb[0].mxu0
      %1396 = vmatprep.mubr.f32.mxu0 0.0
      %1397 = vmatmul.mubr.f32.gmra.mrb[0].mxu0 %v1067
      %v1398 = vpop.f32.mrb[0].mxu0
      %v1399 = vadd.f32 %v952, %v1398
      %v1400 = vpop.f32.mrb[0].mxu0
      %1401 = vmatprep.mubr.f32.mxu0 0.0
      %1402 = vmatmul.mubr.f32.gmra.mrb[0].mxu0 %v1070
      %v1403 = vpop.f32.mrb[0].mxu0
      %v1404 = vadd.f32 %v952, %v1403
      %v1405 = vpop.f32.mrb[0].mxu0
      %1406 = vmatprep.mubr.f32.mxu0 0.0
      %1407 = vmatmul.mubr.f32.gmra.mrb[0].mxu0 %v1073
      %v1408 = vpop.f32.mrb[0].mxu0
      %v1409 = vadd.f32 %v952, %v1408
      %v1410 = vpop.f32.mrb[0].mxu0
      %1411 = vmatprep.mubr.f32.mxu0 0.0
      %1412 = vmatmul.mubr.f32.gmra.mrb[0].mxu0 %v1076
      %v1413 = vpop.f32.mrb[0].mxu0
      %v1414 = vadd.f32 %v952, %v1413
      %v1415 = vpop.f32.mrb[0].mxu0
      %1416 = vmatprep.mubr.f32.mxu0 0.0
      %1417 = vmatmul.mubr.f32.gmra.mrb[0].mxu0 %v1079
      %v1418 = vpop.f32.mrb[0].mxu0
      %v1419 = vadd.f32 %v952, %v1418
      %v1420 = vpop.f32.mrb[0].mxu0
      %1421 = vmatprep.mubr.f32.mxu0 0.0
      %1422 = vmatmul.mubr.f32.gmra.mrb[0].mxu0 %v1082
      %v1423 = vpop.f32.mrb[0].mxu0
      %v1424 = vadd.f32 %v952, %v1423
      %v1425 = vpop.f32.mrb[0].mxu0
      %1426 = vmatprep.mubr.f32.mxu0 0.0
      %1427 = vmatmul.mubr.f32.gmra.mrb[0].mxu0 %v1085
      %v1428 = vpop.f32.mrb[0].mxu0
      %v1429 = vadd.f32 %v952, %v1428
      %v1430 = vpop.f32.mrb[0].mxu0
      %1431 = vmatprep.mubr.f32.mxu0 0.0
      %1432 = vmatmul.mubr.f32.gmra.mrb[0].mxu0 %v1088
      %v1433 = vpop.f32.mrb[0].mxu0
      %v1434 = vadd.f32 %v952, %v1433
      %v1435 = vpop.f32.mrb[0].mxu0
      %1436 = vmatprep.mubr.f32.mxu0 0.0
      %1437 = vmatmul.mubr.f32.gmra.mrb[0].mxu0 %v1091
      %v1438 = vpop.f32.mrb[0].mxu0
      %v1439 = vadd.f32 %v952, %v1438
      %v1440 = vpop.f32.mrb[0].mxu0
      %1441 = vmatprep.mubr.f32.mxu0 0.0
      %1442 = vmatmul.mubr.f32.gmra.mrb[0].mxu0 %v1094
      %v1443 = vpop.f32.mrb[0].mxu0
      %v1444 = vadd.f32 %v952, %v1443
      %v1445 = vpop.f32.mrb[0].mxu0
      %1446 = vmatprep.mubr.f32.mxu0 0.0
      %1447 = vmatmul.mubr.f32.gmra.mrb[0].mxu0 %v1097
      %v1448 = vpop.f32.mrb[0].mxu0
      %v1449 = vadd.f32 %v952, %v1448
      %v1450 = vpop.f32.mrb[0].mxu0
      %1451 = vmatprep.mubr.f32.mxu0 0.0
      %1452 = vmatmul.mubr.f32.gmra.mrb[0].mxu0 %v1100
      %v1453 = vpop.f32.mrb[0].mxu0
      %v1454 = vadd.f32 %v952, %v1453
      %v1455 = vpop.f32.mrb[0].mxu0
      %1456 = vmatprep.mubr.f32.mxu0 0.0
      %1457 = vmatmul.mubr.f32.gmra.mrb[0].mxu0 %v1103
      %v1458 = vpop.f32.mrb[0].mxu0
      %v1459 = vadd.f32 %v952, %v1458
      %v1460 = vpop.f32.mrb[0].mxu0
      %1461 = vmatprep.mubr.f32.mxu0 0.0
      %1462 = vmatmul.mubr.f32.gmra.mrb[0].mxu0 %v1106
      %v1463 = vpop.f32.mrb[0].mxu0
      %v1464 = vadd.f32 %v952, %v1463
      %v1465 = vpop.f32.mrb[0].mxu0
      %1466 = vmatprep.mubr.f32.mxu0 0.0
      %1467 = vmatmul.mubr.f32.gmra.mrb[0].mxu0 %v1109
      %v1468 = vpop.f32.mrb[0].mxu0
      %v1469 = vadd.f32 %v952, %v1468
      %v1470 = vpop.f32.mrb[0].mxu0
      %1471 = vmatprep.mubr.f32.mxu0 0.0
      %1472 = vmatmul.mubr.f32.gmra.mrb[0].mxu0 %v1112
      %v1473 = vpop.f32.mrb[0].mxu0
      %v1474 = vadd.f32 %v952, %v1473
      %v1475 = vpop.f32.mrb[0].mxu0
      %1476 = vmatprep.mubr.f32.mxu0 0.0
      %1477 = vmatmul.mubr.f32.gmra.mrb[0].mxu0 %v1115
      %v1478 = vpop.f32.mrb[0].mxu0
      %v1479 = vadd.f32 %v952, %v1478
      %v1480 = vpop.f32.mrb[0].mxu0
      %1481 = vmatprep.mubr.f32.mxu0 0.0
      %1482 = vmatmul.mubr.f32.gmra.mrb[0].mxu0 %v1118
      %v1483 = vpop.f32.mrb[0].mxu0
      %v1484 = vadd.f32 %v952, %v1483
      %v1485 = vpop.f32.mrb[0].mxu0
      %1486 = vmatprep.mubr.f32.mxu0 0.0
      %1487 = vmatmul.mubr.f32.gmra.mrb[0].mxu0 %v1121
      %v1488 = vpop.f32.mrb[0].mxu0
      %v1489 = vadd.f32 %v952, %v1488
      %v1490 = vpop.f32.mrb[0].mxu0
      %1491 = vmatprep.mubr.f32.mxu0 0.0
      %1492 = vmatmul.mubr.f32.gmra.mrb[0].mxu0 %v1124
      %v1493 = vpop.f32.mrb[0].mxu0
      %v1494 = vadd.f32 %v952, %v1493
      %v1495 = vpop.f32.mrb[0].mxu0
      %1496 = vmatprep.mubr.f32.mxu0 0.0
      %1497 = vmatmul.mubr.f32.gmra.mrb[0].mxu0 %v1127
      %v1498 = vpop.f32.mrb[0].mxu0
      %v1499 = vadd.f32 %v952, %v1498
      %v1500 = vpop.f32.mrb[0].mxu0
      %1501 = vmatprep.mubr.f32.mxu0 0.0
      %1502 = vmatmul.mubr.f32.gmra.mrb[0].mxu0 %v1130
      %v1503 = vpop.f32.mrb[0].mxu0
      %v1504 = vadd.f32 %v952, %v1503
      %v1505 = vpop.f32.mrb[0].mxu0
      %1506 = vmatprep.mubr.f32.mxu0 0.0
      %1507 = vmatmul.mubr.f32.gmra.mrb[0].mxu0 %v1133
      %v1508 = vpop.f32.mrb[0].mxu0
      %v1509 = vadd.f32 %v952, %v1508
      %v1510 = vpop.f32.mrb[0].mxu0
      %1511 = vmatprep.mubr.f32.mxu0 0.0
      %1512 = vmatmul.mubr.f32.gmra.mrb[0].mxu0 %v1136
      %v1513 = vpop.f32.mrb[0].mxu0
      %v1514 = vadd.f32 %v952, %v1513
      %v1515 = vpop.f32.mrb[0].mxu0
      %1516 = vmatprep.mubr.f32.mxu0 0.0
      %1517 = vmatmul.mubr.f32.gmra.mrb[0].mxu0 %v1139
      %v1518 = vpop.f32.mrb[0].mxu0
      %v1519 = vadd.f32 %v952, %v1518
      %v1520 = vpop.f32.mrb[0].mxu0
      %1521 = vmatprep.mubr.f32.mxu0 0.0
      %1522 = vmatmul.mubr.f32.gmra.mrb[0].mxu0 %v1142
      %v1523 = vpop.f32.mrb[0].mxu0
      %v1524 = vadd.f32 %v952, %v1523
      %v1525 = vpop.f32.mrb[0].mxu0
      %1526 = vmatprep.mubr.f32.mxu0 0.0
      %1527 = vmatmul.mubr.f32.gmra.mrb[0].mxu0 %v1145
      %v1528 = vpop.f32.mrb[0].mxu0
      %v1529 = vadd.f32 %v952, %v1528
      %v1530 = vpop.f32.mrb[0].mxu0
      %1531 = vdwg.mxu0
      %v1532 = vxor.u32 %v1214, 2147483648
      %v1533 = vxor.u32 %v1219, 2147483648
      %v1534 = vxor.u32 %v1224, 2147483648
      %v1535 = vxor.u32 %v1229, 2147483648
      %v1536 = vxor.u32 %v1234, 2147483648
      %v1537 = vxor.u32 %v1239, 2147483648
      %v1538 = vxor.u32 %v1244, 2147483648
      %v1539 = vxor.u32 %v1249, 2147483648
      %v1540 = vxor.u32 %v1254, 2147483648
      %v1541 = vxor.u32 %v1259, 2147483648
      %v1542 = vxor.u32 %v1264, 2147483648
      %v1543 = vxor.u32 %v1269, 2147483648
      %v1544 = vxor.u32 %v1274, 2147483648
      %v1545 = vxor.u32 %v1279, 2147483648
      %v1546 = vxor.u32 %v1284, 2147483648
      %v1547 = vxor.u32 %v1289, 2147483648
      %v1548 = vxor.u32 %v1294, 2147483648
      %v1549 = vxor.u32 %v1299, 2147483648
      %v1550 = vxor.u32 %v1304, 2147483648
      %v1551 = vxor.u32 %v1309, 2147483648
      %v1552 = vxor.u32 %v1314, 2147483648
      %v1553 = vxor.u32 %v1319, 2147483648
      %v1554 = vxor.u32 %v1324, 2147483648
      %v1555 = vxor.u32 %v1329, 2147483648
      %v1556 = vxor.u32 %v1334, 2147483648
      %v1557 = vxor.u32 %v1339, 2147483648
      %v1558 = vxor.u32 %v1344, 2147483648
      %v1559 = vxor.u32 %v1349, 2147483648
      %v1560 = vxor.u32 %v1354, 2147483648
      %v1561 = vxor.u32 %v1359, 2147483648
      %v1562 = vxor.u32 %v1364, 2147483648
      %v1563 = vxor.u32 %v1369, 2147483648
      %v1564 = vxor.u32 %v1374, 2147483648
      %v1565 = vxor.u32 %v1379, 2147483648
      %v1566 = vxor.u32 %v1384, 2147483648
      %v1567 = vxor.u32 %v1389, 2147483648
      %v1568 = vxor.u32 %v1394, 2147483648
      %v1569 = vxor.u32 %v1399, 2147483648
      %v1570 = vxor.u32 %v1404, 2147483648
      %v1571 = vxor.u32 %v1409, 2147483648
      %v1572 = vxor.u32 %v1414, 2147483648
      %v1573 = vxor.u32 %v1419, 2147483648
      %v1574 = vxor.u32 %v1424, 2147483648
      %v1575 = vxor.u32 %v1429, 2147483648
      %v1576 = vxor.u32 %v1434, 2147483648
      %v1577 = vxor.u32 %v1439, 2147483648
      %v1578 = vxor.u32 %v1444, 2147483648
      %v1579 = vxor.u32 %v1449, 2147483648
      %v1580 = vxor.u32 %v1454, 2147483648
      %v1581 = vxor.u32 %v1459, 2147483648
      %v1582 = vxor.u32 %v1464, 2147483648
      %v1583 = vxor.u32 %v1469, 2147483648
      %v1584 = vxor.u32 %v1474, 2147483648
      %v1585 = vxor.u32 %v1479, 2147483648
      %v1586 = vxor.u32 %v1484, 2147483648
      %v1587 = vxor.u32 %v1489, 2147483648
      %v1588 = vxor.u32 %v1494, 2147483648
      %v1589 = vxor.u32 %v1499, 2147483648
      %v1590 = vxor.u32 %v1504, 2147483648
      %v1591 = vxor.u32 %v1509, 2147483648
      %v1592 = vxor.u32 %v1514, 2147483648
      %v1593 = vxor.u32 %v1519, 2147483648
      %v1594 = vxor.u32 %v1524, 2147483648
      %v1595 = vxor.u32 %v1529, 2147483648
      %v1596 = vmul.f32 %v1532, 1.442695
      %v1597 = vpow.pop %v1596
      %v1598 = vmul.f32 %v1533, 1.442695
      %v1599 = vpow.pop %v1598
      %v1600 = vmul.f32 %v1534, 1.442695
      %v1601 = vpow.pop %v1600
      %v1602 = vmul.f32 %v1535, 1.442695
      %v1603 = vpow.pop %v1602
      %v1604 = vmul.f32 %v1536, 1.442695
      %v1605 = vpow.pop %v1604
      %v1606 = vmul.f32 %v1537, 1.442695
      %v1607 = vpow.pop %v1606
      %v1608 = vmul.f32 %v1538, 1.442695
      %v1609 = vpow.pop %v1608
      %v1610 = vmul.f32 %v1539, 1.442695
      %v1611 = vpow.pop %v1610
      %v1612 = vmul.f32 %v1540, 1.442695
      %v1613 = vpow.pop %v1612
      %v1614 = vmul.f32 %v1541, 1.442695
      %v1615 = vpow.pop %v1614
      %v1616 = vmul.f32 %v1542, 1.442695
      %v1617 = vpow.pop %v1616
      %v1618 = vmul.f32 %v1543, 1.442695
      %v1619 = vpow.pop %v1618
      %v1620 = vmul.f32 %v1544, 1.442695
      %v1621 = vpow.pop %v1620
      %v1622 = vmul.f32 %v1545, 1.442695
      %v1623 = vpow.pop %v1622
      %v1624 = vmul.f32 %v1546, 1.442695
      %v1625 = vpow.pop %v1624
      %v1626 = vmul.f32 %v1547, 1.442695
      %v1627 = vpow.pop %v1626
      %v1628 = vmul.f32 %v1548, 1.442695
      %v1629 = vpow.pop %v1628
      %v1630 = vmul.f32 %v1549, 1.442695
      %v1631 = vpow.pop %v1630
      %v1632 = vmul.f32 %v1550, 1.442695
      %v1633 = vpow.pop %v1632
      %v1634 = vmul.f32 %v1551, 1.442695
      %v1635 = vpow.pop %v1634
      %v1636 = vmul.f32 %v1552, 1.442695
      %v1637 = vpow.pop %v1636
      %v1638 = vmul.f32 %v1553, 1.442695
      %v1639 = vpow.pop %v1638
      %v1640 = vmul.f32 %v1554, 1.442695
      %v1641 = vpow.pop %v1640
      %v1642 = vmul.f32 %v1555, 1.442695
      %v1643 = vpow.pop %v1642
      %v1644 = vmul.f32 %v1556, 1.442695
      %v1645 = vpow.pop %v1644
      %v1646 = vmul.f32 %v1557, 1.442695
      %v1647 = vpow.pop %v1646
      %v1648 = vmul.f32 %v1558, 1.442695
      %v1649 = vpow.pop %v1648
      %v1650 = vmul.f32 %v1559, 1.442695
      %v1651 = vpow.pop %v1650
      %v1652 = vmul.f32 %v1560, 1.442695
      %v1653 = vpow.pop %v1652
      %v1654 = vmul.f32 %v1561, 1.442695
      %v1655 = vpow.pop %v1654
      %v1656 = vmul.f32 %v1562, 1.442695
      %v1657 = vpow.pop %v1656
      %v1658 = vmul.f32 %v1563, 1.442695
      %v1659 = vpow.pop %v1658
      %v1660 = vmul.f32 %v1564, 1.442695
      %v1661 = vpow.pop %v1660
      %v1662 = vmul.f32 %v1565, 1.442695
      %v1663 = vpow.pop %v1662
      %v1664 = vmul.f32 %v1566, 1.442695
      %v1665 = vpow.pop %v1664
      %v1666 = vmul.f32 %v1567, 1.442695
      %v1667 = vpow.pop %v1666
      %v1668 = vmul.f32 %v1568, 1.442695
      %v1669 = vpow.pop %v1668
      %v1670 = vmul.f32 %v1569, 1.442695
      %v1671 = vpow.pop %v1670
      %v1672 = vmul.f32 %v1570, 1.442695
      %v1673 = vpow.pop %v1672
      %v1674 = vmul.f32 %v1571, 1.442695
      %v1675 = vpow.pop %v1674
      %v1676 = vmul.f32 %v1572, 1.442695
      %v1677 = vpow.pop %v1676
      %v1678 = vmul.f32 %v1573, 1.442695
      %v1679 = vpow.pop %v1678
      %v1680 = vmul.f32 %v1574, 1.442695
      %v1681 = vpow.pop %v1680
      %v1682 = vmul.f32 %v1575, 1.442695
      %v1683 = vpow.pop %v1682
      %v1684 = vmul.f32 %v1576, 1.442695
      %v1685 = vpow.pop %v1684
      %v1686 = vmul.f32 %v1577, 1.442695
      %v1687 = vpow.pop %v1686
      %v1688 = vmul.f32 %v1578, 1.442695
      %v1689 = vpow.pop %v1688
      %v1690 = vmul.f32 %v1579, 1.442695
      %v1691 = vpow.pop %v1690
      %v1692 = vmul.f32 %v1580, 1.442695
      %v1693 = vpow.pop %v1692
      %v1694 = vmul.f32 %v1581, 1.442695
      %v1695 = vpow.pop %v1694
      %v1696 = vmul.f32 %v1582, 1.442695
      %v1697 = vpow.pop %v1696
      %v1698 = vmul.f32 %v1583, 1.442695
      %v1699 = vpow.pop %v1698
      %v1700 = vmul.f32 %v1584, 1.442695
      %v1701 = vpow.pop %v1700
      %v1702 = vmul.f32 %v1585, 1.442695
      %v1703 = vpow.pop %v1702
      %v1704 = vmul.f32 %v1586, 1.442695
      %v1705 = vpow.pop %v1704
      %v1706 = vmul.f32 %v1587, 1.442695
      %v1707 = vpow.pop %v1706
      %v1708 = vmul.f32 %v1588, 1.442695
      %v1709 = vpow.pop %v1708
      %v1710 = vmul.f32 %v1589, 1.442695
      %v1711 = vpow.pop %v1710
      %v1712 = vmul.f32 %v1590, 1.442695
      %v1713 = vpow.pop %v1712
      %v1714 = vmul.f32 %v1591, 1.442695
      %v1715 = vpow.pop %v1714
      %v1716 = vmul.f32 %v1592, 1.442695
      %v1717 = vpow.pop %v1716
      %v1718 = vmul.f32 %v1593, 1.442695
      %v1719 = vpow.pop %v1718
      %v1720 = vmul.f32 %v1594, 1.442695
      %v1721 = vpow.pop %v1720
      %v1722 = vmul.f32 %v1595, 1.442695
      %v1723 = vpow.pop %v1722
      %v1724 = vadd.f32 %v1597, 1.0
      %v1725 = vadd.f32 %v1599, 1.0
      %v1726 = vadd.f32 %v1601, 1.0
      %v1727 = vadd.f32 %v1603, 1.0
      %v1728 = vadd.f32 %v1605, 1.0
      %v1729 = vadd.f32 %v1607, 1.0
      %v1730 = vadd.f32 %v1609, 1.0
      %v1731 = vadd.f32 %v1611, 1.0
      %v1732 = vadd.f32 %v1613, 1.0
      %v1733 = vadd.f32 %v1615, 1.0
      %v1734 = vadd.f32 %v1617, 1.0
      %v1735 = vadd.f32 %v1619, 1.0
      %v1736 = vadd.f32 %v1621, 1.0
      %v1737 = vadd.f32 %v1623, 1.0
      %v1738 = vadd.f32 %v1625, 1.0
      %v1739 = vadd.f32 %v1627, 1.0
      %v1740 = vadd.f32 %v1629, 1.0
      %v1741 = vadd.f32 %v1631, 1.0
      %v1742 = vadd.f32 %v1633, 1.0
      %v1743 = vadd.f32 %v1635, 1.0
      %v1744 = vadd.f32 %v1637, 1.0
      %v1745 = vadd.f32 %v1639, 1.0
      %v1746 = vadd.f32 %v1641, 1.0
      %v1747 = vadd.f32 %v1643, 1.0
      %v1748 = vadd.f32 %v1645, 1.0
      %v1749 = vadd.f32 %v1647, 1.0
      %v1750 = vadd.f32 %v1649, 1.0
      %v1751 = vadd.f32 %v1651, 1.0
      %v1752 = vadd.f32 %v1653, 1.0
      %v1753 = vadd.f32 %v1655, 1.0
      %v1754 = vadd.f32 %v1657, 1.0
      %v1755 = vadd.f32 %v1659, 1.0
      %v1756 = vadd.f32 %v1661, 1.0
      %v1757 = vadd.f32 %v1663, 1.0
      %v1758 = vadd.f32 %v1665, 1.0
      %v1759 = vadd.f32 %v1667, 1.0
      %v1760 = vadd.f32 %v1669, 1.0
      %v1761 = vadd.f32 %v1671, 1.0
      %v1762 = vadd.f32 %v1673, 1.0
      %v1763 = vadd.f32 %v1675, 1.0
      %v1764 = vadd.f32 %v1677, 1.0
      %v1765 = vadd.f32 %v1679, 1.0
      %v1766 = vadd.f32 %v1681, 1.0
      %v1767 = vadd.f32 %v1683, 1.0
      %v1768 = vadd.f32 %v1685, 1.0
      %v1769 = vadd.f32 %v1687, 1.0
      %v1770 = vadd.f32 %v1689, 1.0
      %v1771 = vadd.f32 %v1691, 1.0
      %v1772 = vadd.f32 %v1693, 1.0
      %v1773 = vadd.f32 %v1695, 1.0
      %v1774 = vadd.f32 %v1697, 1.0
      %v1775 = vadd.f32 %v1699, 1.0
      %v1776 = vadd.f32 %v1701, 1.0
      %v1777 = vadd.f32 %v1703, 1.0
      %v1778 = vadd.f32 %v1705, 1.0
      %v1779 = vadd.f32 %v1707, 1.0
      %v1780 = vadd.f32 %v1709, 1.0
      %v1781 = vadd.f32 %v1711, 1.0
      %v1782 = vadd.f32 %v1713, 1.0
      %v1783 = vadd.f32 %v1715, 1.0
      %v1784 = vadd.f32 %v1717, 1.0
      %v1785 = vadd.f32 %v1719, 1.0
      %v1786 = vadd.f32 %v1721, 1.0
      %v1787 = vadd.f32 %v1723, 1.0
      %v1788 = vrcp.pop %v1724
      %v1789 = vmul.f32 1.0, %v1788
      %v1790 = vrcp.pop %v1725
      %v1791 = vmul.f32 1.0, %v1790
      %v1792 = vrcp.pop %v1726
      %v1793 = vmul.f32 1.0, %v1792
      %v1794 = vrcp.pop %v1727
      %v1795 = vmul.f32 1.0, %v1794
      %v1796 = vrcp.pop %v1728
      %v1797 = vmul.f32 1.0, %v1796
      %v1798 = vrcp.pop %v1729
      %v1799 = vmul.f32 1.0, %v1798
      %v1800 = vrcp.pop %v1730
      %v1801 = vmul.f32 1.0, %v1800
      %v1802 = vrcp.pop %v1731
      %v1803 = vmul.f32 1.0, %v1802
      %v1804 = vrcp.pop %v1732
      %v1805 = vmul.f32 1.0, %v1804
      %v1806 = vrcp.pop %v1733
      %v1807 = vmul.f32 1.0, %v1806
      %v1808 = vrcp.pop %v1734
      %v1809 = vmul.f32 1.0, %v1808
      %v1810 = vrcp.pop %v1735
      %v1811 = vmul.f32 1.0, %v1810
      %v1812 = vrcp.pop %v1736
      %v1813 = vmul.f32 1.0, %v1812
      %v1814 = vrcp.pop %v1737
      %v1815 = vmul.f32 1.0, %v1814
      %v1816 = vrcp.pop %v1738
      %v1817 = vmul.f32 1.0, %v1816
      %v1818 = vrcp.pop %v1739
      %v1819 = vmul.f32 1.0, %v1818
      %v1820 = vrcp.pop %v1740
      %v1821 = vmul.f32 1.0, %v1820
      %v1822 = vrcp.pop %v1741
      %v1823 = vmul.f32 1.0, %v1822
      %v1824 = vrcp.pop %v1742
      %v1825 = vmul.f32 1.0, %v1824
      %v1826 = vrcp.pop %v1743
      %v1827 = vmul.f32 1.0, %v1826
      %v1828 = vrcp.pop %v1744
      %v1829 = vmul.f32 1.0, %v1828
      %v1830 = vrcp.pop %v1745
      %v1831 = vmul.f32 1.0, %v1830
      %v1832 = vrcp.pop %v1746
      %v1833 = vmul.f32 1.0, %v1832
      %v1834 = vrcp.pop %v1747
      %v1835 = vmul.f32 1.0, %v1834
      %v1836 = vrcp.pop %v1748
      %v1837 = vmul.f32 1.0, %v1836
      %v1838 = vrcp.pop %v1749
      %v1839 = vmul.f32 1.0, %v1838
      %v1840 = vrcp.pop %v1750
      %v1841 = vmul.f32 1.0, %v1840
      %v1842 = vrcp.pop %v1751
      %v1843 = vmul.f32 1.0, %v1842
      %v1844 = vrcp.pop %v1752
      %v1845 = vmul.f32 1.0, %v1844
      %v1846 = vrcp.pop %v1753
      %v1847 = vmul.f32 1.0, %v1846
      %v1848 = vrcp.pop %v1754
      %v1849 = vmul.f32 1.0, %v1848
      %v1850 = vrcp.pop %v1755
      %v1851 = vmul.f32 1.0, %v1850
      %v1852 = vrcp.pop %v1756
      %v1853 = vmul.f32 1.0, %v1852
      %v1854 = vrcp.pop %v1757
      %v1855 = vmul.f32 1.0, %v1854
      %v1856 = vrcp.pop %v1758
      %v1857 = vmul.f32 1.0, %v1856
      %v1858 = vrcp.pop %v1759
      %v1859 = vmul.f32 1.0, %v1858
      %v1860 = vrcp.pop %v1760
      %v1861 = vmul.f32 1.0, %v1860
      %v1862 = vrcp.pop %v1761
      %v1863 = vmul.f32 1.0, %v1862
      %v1864 = vrcp.pop %v1762
      %v1865 = vmul.f32 1.0, %v1864
      %v1866 = vrcp.pop %v1763
      %v1867 = vmul.f32 1.0, %v1866
      %v1868 = vrcp.pop %v1764
      %v1869 = vmul.f32 1.0, %v1868
      %v1870 = vrcp.pop %v1765
      %v1871 = vmul.f32 1.0, %v1870
      %v1872 = vrcp.pop %v1766
      %v1873 = vmul.f32 1.0, %v1872
      %v1874 = vrcp.pop %v1767
      %v1875 = vmul.f32 1.0, %v1874
      %v1876 = vrcp.pop %v1768
      %v1877 = vmul.f32 1.0, %v1876
      %v1878 = vrcp.pop %v1769
      %v1879 = vmul.f32 1.0, %v1878
      %v1880 = vrcp.pop %v1770
      %v1881 = vmul.f32 1.0, %v1880
      %v1882 = vrcp.pop %v1771
      %v1883 = vmul.f32 1.0, %v1882
      %v1884 = vrcp.pop %v1772
      %v1885 = vmul.f32 1.0, %v1884
      %v1886 = vrcp.pop %v1773
      %v1887 = vmul.f32 1.0, %v1886
      %v1888 = vrcp.pop %v1774
      %v1889 = vmul.f32 1.0, %v1888
      %v1890 = vrcp.pop %v1775
      %v1891 = vmul.f32 1.0, %v1890
      %v1892 = vrcp.pop %v1776
      %v1893 = vmul.f32 1.0, %v1892
      %v1894 = vrcp.pop %v1777
      %v1895 = vmul.f32 1.0, %v1894
      %v1896 = vrcp.pop %v1778
      %v1897 = vmul.f32 1.0, %v1896
      %v1898 = vrcp.pop %v1779
      %v1899 = vmul.f32 1.0, %v1898
      %v1900 = vrcp.pop %v1780
      %v1901 = vmul.f32 1.0, %v1900
      %v1902 = vrcp.pop %v1781
      %v1903 = vmul.f32 1.0, %v1902
      %v1904 = vrcp.pop %v1782
      %v1905 = vmul.f32 1.0, %v1904
      %v1906 = vrcp.pop %v1783
      %v1907 = vmul.f32 1.0, %v1906
      %v1908 = vrcp.pop %v1784
      %v1909 = vmul.f32 1.0, %v1908
      %v1910 = vrcp.pop %v1785
      %v1911 = vmul.f32 1.0, %v1910
      %v1912 = vrcp.pop %v1786
      %v1913 = vmul.f32 1.0, %v1912
      %v1914 = vrcp.pop %v1787
      %v1915 = vmul.f32 1.0, %v1914
      %vm1916 = vcmask 64512
      %1917 = vst.msk [vmem:[%s226] sm:$0xff] %vm1916, %v1789
      %1918 = vst.msk [vmem:[%s226 + $0x8] sm:$0xff] %vm1916, %v1791
      %1919 = vst.msk [vmem:[%s226 + $0x10] sm:$0xff] %vm1916, %v1793
      %1920 = vst.msk [vmem:[%s226 + $0x18] sm:$0xff] %vm1916, %v1795
      %1921 = vst.msk [vmem:[%s226 + $0x20] sm:$0xff] %vm1916, %v1797
      %1922 = vst.msk [vmem:[%s226 + $0x28] sm:$0xff] %vm1916, %v1799
      %1923 = vst.msk [vmem:[%s226 + $0x30] sm:$0xff] %vm1916, %v1801
      %1924 = vst.msk [vmem:[%s226 + $0x38] sm:$0xff] %vm1916, %v1803
      %1925 = vst.msk [vmem:[%s226 + $0x40] sm:$0xff] %vm1916, %v1805
      %1926 = vst.msk [vmem:[%s226 + $0x48] sm:$0xff] %vm1916, %v1807
      %1927 = vst.msk [vmem:[%s226 + $0x50] sm:$0xff] %vm1916, %v1809
      %1928 = vst.msk [vmem:[%s226 + $0x58] sm:$0xff] %vm1916, %v1811
      %1929 = vst.msk [vmem:[%s226 + $0x60] sm:$0xff] %vm1916, %v1813
      %1930 = vst.msk [vmem:[%s226 + $0x68] sm:$0xff] %vm1916, %v1815
      %1931 = vst.msk [vmem:[%s226 + $0x70] sm:$0xff] %vm1916, %v1817
      %1932 = vst.msk [vmem:[%s226 + $0x78] sm:$0xff] %vm1916, %v1819
      %1933 = vst.msk [vmem:[%s226 + $0x80] sm:$0xff] %vm1916, %v1821
      %1934 = vst.msk [vmem:[%s226 + $0x88] sm:$0xff] %vm1916, %v1823
      %1935 = vst.msk [vmem:[%s226 + $0x90] sm:$0xff] %vm1916, %v1825
      %1936 = vst.msk [vmem:[%s226 + $0x98] sm:$0xff] %vm1916, %v1827
      %1937 = vst.msk [vmem:[%s226 + $0xa0] sm:$0xff] %vm1916, %v1829
      %1938 = vst.msk [vmem:[%s226 + $0xa8] sm:$0xff] %vm1916, %v1831
      %1939 = vst.msk [vmem:[%s226 + $0xb0] sm:$0xff] %vm1916, %v1833
      %1940 = vst.msk [vmem:[%s226 + $0xb8] sm:$0xff] %vm1916, %v1835
      %1941 = vst.msk [vmem:[%s226 + $0xc0] sm:$0xff] %vm1916, %v1837
      %1942 = vst.msk [vmem:[%s226 + $0xc8] sm:$0xff] %vm1916, %v1839
      %1943 = vst.msk [vmem:[%s226 + $0xd0] sm:$0xff] %vm1916, %v1841
      %1944 = vst.msk [vmem:[%s226 + $0xd8] sm:$0xff] %vm1916, %v1843
      %1945 = vst.msk [vmem:[%s226 + $0xe0] sm:$0xff] %vm1916, %v1845
      %1946 = vst.msk [vmem:[%s226 + $0xe8] sm:$0xff] %vm1916, %v1847
      %1947 = vst.msk [vmem:[%s226 + $0xf0] sm:$0xff] %vm1916, %v1849
      %1948 = vst.msk [vmem:[%s226 + $0xf8] sm:$0xff] %vm1916, %v1851
      %1949 = vst.msk [vmem:[%s226 + $0x100] sm:$0xff] %vm1916, %v1853
      %1950 = vst.msk [vmem:[%s226 + $0x108] sm:$0xff] %vm1916, %v1855
      %1951 = vst.msk [vmem:[%s226 + $0x110] sm:$0xff] %vm1916, %v1857
      %1952 = vst.msk [vmem:[%s226 + $0x118] sm:$0xff] %vm1916, %v1859
      %1953 = vst.msk [vmem:[%s226 + $0x120] sm:$0xff] %vm1916, %v1861
      %1954 = vst.msk [vmem:[%s226 + $0x128] sm:$0xff] %vm1916, %v1863
      %1955 = vst.msk [vmem:[%s226 + $0x130] sm:$0xff] %vm1916, %v1865
      %1956 = vst.msk [vmem:[%s226 + $0x138] sm:$0xff] %vm1916, %v1867
      %1957 = vst.msk [vmem:[%s226 + $0x140] sm:$0xff] %vm1916, %v1869
      %1958 = vst.msk [vmem:[%s226 + $0x148] sm:$0xff] %vm1916, %v1871
      %1959 = vst.msk [vmem:[%s226 + $0x150] sm:$0xff] %vm1916, %v1873
      %1960 = vst.msk [vmem:[%s226 + $0x158] sm:$0xff] %vm1916, %v1875
      %1961 = vst.msk [vmem:[%s226 + $0x160] sm:$0xff] %vm1916, %v1877
      %1962 = vst.msk [vmem:[%s226 + $0x168] sm:$0xff] %vm1916, %v1879
      %1963 = vst.msk [vmem:[%s226 + $0x170] sm:$0xff] %vm1916, %v1881
      %1964 = vst.msk [vmem:[%s226 + $0x178] sm:$0xff] %vm1916, %v1883
      %1965 = vst.msk [vmem:[%s226 + $0x180] sm:$0xff] %vm1916, %v1885
      %1966 = vst.msk [vmem:[%s226 + $0x188] sm:$0xff] %vm1916, %v1887
      %1967 = vst.msk [vmem:[%s226 + $0x190] sm:$0xff] %vm1916, %v1889
      %1968 = vst.msk [vmem:[%s226 + $0x198] sm:$0xff] %vm1916, %v1891
      %1969 = vst.msk [vmem:[%s226 + $0x1a0] sm:$0xff] %vm1916, %v1893
      %1970 = vst.msk [vmem:[%s226 + $0x1a8] sm:$0xff] %vm1916, %v1895
      %1971 = vst.msk [vmem:[%s226 + $0x1b0] sm:$0xff] %vm1916, %v1897
      %1972 = vst.msk [vmem:[%s226 + $0x1b8] sm:$0xff] %vm1916, %v1899
      %1973 = vst.msk [vmem:[%s226 + $0x1c0] sm:$0xff] %vm1916, %v1901
      %1974 = vst.msk [vmem:[%s226 + $0x1c8] sm:$0xff] %vm1916, %v1903
      %1975 = vst.msk [vmem:[%s226 + $0x1d0] sm:$0xff] %vm1916, %v1905
      %1976 = vst.msk [vmem:[%s226 + $0x1d8] sm:$0xff] %vm1916, %v1907
      %1977 = vst.msk [vmem:[%s226 + $0x1e0] sm:$0xff] %vm1916, %v1909
      %1978 = vst.msk [vmem:[%s226 + $0x1e8] sm:$0xff] %vm1916, %v1911
      %1979 = vst.msk [vmem:[%s226 + $0x1f0] sm:$0xff] %vm1916, %v1913
      %1980 = vst.msk [vmem:[%s226 + $0x1f8] sm:$0xff] %vm1916, %v1915
      %s1981 = smul.u32 64, %s16
      %p1982 = scmp.lt.s32.totalorder %s1981, 127
      %s1983 = scalar_select %p1982, %s1981, 127
      %s1984 = smul.addr %s1983, 8
      %s1985 = scalar_lea.vmem %s5, %s1984
      // Predicated region
      $region41: #{tpu_custom_call.1} parent=39 // pred_check
        %p1986 = pneg %p144
      $region42: #{tpu_custom_call.1} parent=39 // pred_check_branch
        %1988 = sbr.rel (%p1986) target = $region44
      $region43: #{tpu_custom_call.1} parent=39 // pred_region
        %s1989 = smul.u32 64, %s16
      $region44: #{tpu_custom_call.1} parent=39 // pred_fallthru
        _
    $region40: #{tpu_custom_call.1} parent=5 // pred_fallthru
      _
    %p1990 = scmp.le.s32.totalorder 2, %s11
    // Predicated region
    $region45: #{tpu_custom_call.1} parent=5 // pred_check
      %p1991 = pneg %p1990
    $region46: #{tpu_custom_call.1} parent=5 // pred_check_branch
      %1993 = sbr.rel (%p1991) target = $region48
    $region47: #{tpu_custom_call.1} parent=5 // pred_region
      %s1994 = ssub.s32 %s11, 2
      // Predicated region
      $region49: #{tpu_custom_call.1} parent=47 // pred_check
        %p1995 = pneg %p150
      $region50: #{tpu_custom_call.1} parent=47 // pred_check_branch
        %1997 = sbr.rel (%p1995) target = $region52
      $region51: #{tpu_custom_call.1} parent=47 // pred_region
        %s1998 = smul.u32 64, %s17
        %p1999 = scmp.lt.s32.totalorder %s1998, 127
        %s2000 = scalar_select %p1999, %s1998, 127
        %s2001 = smul.addr %s2000, 8
        %s2002 = scalar_lea.vmem %s5, %s2001
      $region52: #{tpu_custom_call.1} parent=47 // pred_fallthru
        _
    $region48: #{tpu_custom_call.1} parent=5 // pred_fallthru
      _
  $region6: #{tpu_custom_call.1} parent=0 // loop_footer
    %s15 = sadd.s32 1, %s11
  $region7: #{tpu_custom_call.1} parent=0 // loop_footer_branch
    %10 = sbr.rel target = $region3
  $region8: #{tpu_custom_call.1} parent=0 // loop_exit
    _

// kernel: tpu_custom_call.1
$region0: #{tpu_custom_call.1}
  #allocation0 [shape = 'u32[]', space=smem, size = 0x4, offset = 0x4, fixed_abs, tag = 'smem constant byte address 0x4 - core index']
  #allocation1 [shape = 'u32[144,128]{1,0:T(1,128)}', space=vmem, size = 0x12000, scoped, tag = 'internal scratch']
  %s0 = inlined_call_operand.vmem [shape: f32[1024,16], index: 0, kind: input, shape index: {}]
  %s1 = inlined_call_operand.vmem [shape: f32[16,32], index: 1, kind: input, shape index: {}]
  %s2 = inlined_call_operand.vmem [shape: f32[1,32], index: 2, kind: input, shape index: {}]
  %s3 = inlined_call_operand.vmem [shape: f32[32,8], index: 3, kind: input, shape index: {}]
  %s4 = inlined_call_operand.vmem [shape: f32[1,8], index: 4, kind: input, shape index: {}]
  %s5 = inlined_call_operand.vmem [shape: f32[1024,8], index: 5, kind: output, shape index: {}]
  %s6 = sld [smem:[#allocation0]]
  $region53: #{tpu_custom_call.1} parent=0
    _
  %s8 = ssub.s32 1, %s6
  %s9 = scalar_select 0, %s8, %s6
  loop: start=0, step=1, limit=4
  $region2: #{tpu_custom_call.1} parent=0 // loop_pre_header
    _
  $region3: #{tpu_custom_call.1} parent=0 // loop_header
    %s11 = sphi 0, %s15
    %p12 = scmp.ge.s32.totalorder %s11, 4
    %s21 = sphi 0, %s23
    %s24 = sphi 0, %s21
    %s25 = sphi 0, %s24
    %s41 = sphi 0, %s25
    %s45 = sphi 0, %s45
    %s47 = sphi 0, %s45
    %s48 = sphi 0, %s47
    %s62 = sphi 0, %s48
    %s66 = sphi 0, %s66
    %s68 = sphi 0, %s66
    %s69 = sphi 0, %s68
    %s83 = sphi 0, %s69
    %s87 = sphi 0, %s87
    %s89 = sphi 0, %s87
    %s90 = sphi 0, %s89
    %s104 = sphi 0, %s90
    %s108 = sphi 0, %s108
    %s110 = sphi 0, %s108
    %s111 = sphi 0, %s110
    %s125 = sphi 0, %s111
    %s131 = sphi 0, %s133
    %s134 = sphi 0, %s131
    %s135 = sphi 0, %s134
    %s151 = sphi 0, %s135
  $region4: #{tpu_custom_call.1} parent=0 // loop_header_branch
    %14 = sbr.rel (%p12) target = $region8
  $region5: #{tpu_custom_call.1} parent=0 // loop_body
    %s16 = ssub.s32 %s11, 1
    %s17 = ssub.s32 %s11, 2
    %s18 = sadd.s32 %s11, 1
    %s19 = ssub.s32 %s11, %s18
    %p20 = scmp.eq.s32.totalorder %s19, 0
    %s22 = sadd.s32 %s21, 1
    %s23 = scalar_select %p20, %s21, %s22
    %p26 = pneg %p20
    %p27 = scmp.eq.s32.totalorder %s11, 1
    %p28 = por %p26, %p27
    %p29 = scmp.ne.s32.totalorder %s21, %s24
    %p30 = scmp.eq.s32.totalorder %s11, 0
    %p31 = por %p29, %p30
    %p32 = scmp.ne.s32.totalorder %s21, %s24
    %p33 = scmp.eq.s32.totalorder %s16, 1
    %p34 = por %p32, %p33
    %p35 = scmp.ne.s32.totalorder %s24, %s25
    %p36 = scmp.eq.s32.totalorder %s16, 0
    %p37 = por %p35, %p36
    %p38 = scmp.ne.s32.totalorder %s24, %s25
    %p39 = scmp.eq.s32.totalorder %s17, 1
    %p40 = por %p38, %p39
    %p42 = scmp.ne.s32.totalorder %s25, %s41
    %p43 = scmp.eq.s32.totalorder %s17, 0
    %p44 = por %p42, %p43
    %s46 = sadd.s32 %s45, 1
    %p49 = scmp.eq.s32.totalorder %s11, 1
    %p50 = scmp.ne.s32.totalorder %s45, %s47
    %p51 = scmp.eq.s32.totalorder %s11, 0
    %p52 = por %p50, %p51
    %p53 = scmp.ne.s32.totalorder %s45, %s47
    %p54 = scmp.eq.s32.totalorder %s16, 1
    %p55 = por %p53, %p54
    %p56 = scmp.ne.s32.totalorder %s47, %s48
    %p57 = scmp.eq.s32.totalorder %s16, 0
    %p58 = por %p56, %p57
    %p59 = scmp.ne.s32.totalorder %s47, %s48
    %p60 = scmp.eq.s32.totalorder %s17, 1
    %p61 = por %p59, %p60
    %p63 = scmp.ne.s32.totalorder %s48, %s62
    %p64 = scmp.eq.s32.totalorder %s17, 0
    %p65 = por %p63, %p64
    %s67 = sadd.s32 %s66, 1
    %p70 = scmp.eq.s32.totalorder %s11, 1
    %p71 = scmp.ne.s32.totalorder %s66, %s68
    %p72 = scmp.eq.s32.totalorder %s11, 0
    %p73 = por %p71, %p72
    %p74 = scmp.ne.s32.totalorder %s66, %s68
    %p75 = scmp.eq.s32.totalorder %s16, 1
    %p76 = por %p74, %p75
    %p77 = scmp.ne.s32.totalorder %s68, %s69
    %p78 = scmp.eq.s32.totalorder %s16, 0
    %p79 = por %p77, %p78
    %p80 = scmp.ne.s32.totalorder %s68, %s69
    %p81 = scmp.eq.s32.totalorder %s17, 1
    %p82 = por %p80, %p81
    %p84 = scmp.ne.s32.totalorder %s69, %s83
    %p85 = scmp.eq.s32.totalorder %s17, 0
    %p86 = por %p84, %p85
    %s88 = sadd.s32 %s87, 1
    %p91 = scmp.eq.s32.totalorder %s11, 1
    %p92 = scmp.ne.s32.totalorder %s87, %s89
    %p93 = scmp.eq.s32.totalorder %s11, 0
    %p94 = por %p92, %p93
    %p95 = scmp.ne.s32.totalorder %s87, %s89
    %p96 = scmp.eq.s32.totalorder %s16, 1
    %p97 = por %p95, %p96
    %p98 = scmp.ne.s32.totalorder %s89, %s90
    %p99 = scmp.eq.s32.totalorder %s16, 0
    %p100 = por %p98, %p99
    %p101 = scmp.ne.s32.totalorder %s89, %s90
    %p102 = scmp.eq.s32.totalorder %s17, 1
    %p103 = por %p101, %p102
    %p105 = scmp.ne.s32.totalorder %s90, %s104
    %p106 = scmp.eq.s32.totalorder %s17, 0
    %p107 = por %p105, %p106
    %s109 = sadd.s32 %s108, 1
    %p112 = scmp.eq.s32.totalorder %s11, 1
    %p113 = scmp.ne.s32.totalorder %s108, %s110
    %p114 = scmp.eq.s32.totalorder %s11, 0
    %p115 = por %p113, %p114
    %p116 = scmp.ne.s32.totalorder %s108, %s110
    %p117 = scmp.eq.s32.totalorder %s16, 1
    %p118 = por %p116, %p117
    %p119 = scmp.ne.s32.totalorder %s110, %s111
    %p120 = scmp.eq.s32.totalorder %s16, 0
    %p121 = por %p119, %p120
    %p122 = scmp.ne.s32.totalorder %s110, %s111
    %p123 = scmp.eq.s32.totalorder %s17, 1
    %p124 = por %p122, %p123
    %p126 = scmp.ne.s32.totalorder %s111, %s125
    %p127 = scmp.eq.s32.totalorder %s17, 0
    %p128 = por %p126, %p127
    %s129 = ssub.s32 %s11, %s18
    %p130 = scmp.eq.s32.totalorder %s129, 0
    %s132 = sadd.s32 %s131, 1
    %s133 = scalar_select %p130, %s131, %s132
    %p136 = pneg %p130
    %p137 = scmp.eq.s32.totalorder %s11, 1
    %p138 = por %p136, %p137
    %p139 = scmp.ne.s32.totalorder %s131, %s134
    %p140 = scmp.eq.s32.totalorder %s11, 0
    %p141 = por %p139, %p140
    %p142 = scmp.ne.s32.totalorder %s131, %s134
    %p143 = scmp.eq.s32.totalorder %s16, 1
    %p144 = por %p142, %p143
    %p145 = scmp.ne.s32.totalorder %s134, %s135
    %p146 = scmp.eq.s32.totalorder %s16, 0
    %p147 = por %p145, %p146
    %p148 = scmp.ne.s32.totalorder %s134, %s135
    %p149 = scmp.eq.s32.totalorder %s17, 1
    %p150 = por %p148, %p149
    %p152 = scmp.ne.s32.totalorder %s135, %s151
    %p153 = scmp.eq.s32.totalorder %s17, 0
    %p154 = por %p152, %p153
    %p155 = scmp.le.s32.totalorder 1, %s11
    %p156 = scmp.lt.s32.totalorder %s11, 3
    %p157 = pnand %p155, %p156
    %p158 = pneg %p157
    // Predicated region
    $region9: #{tpu_custom_call.1} parent=5 // pred_check
      _
    $region10: #{tpu_custom_call.1} parent=5 // pred_check_branch
      %160 = sbr.rel (%p157) target = $region12
    $region11: #{tpu_custom_call.1} parent=5 // pred_region
      %s161 = ssub.s32 %s11, 1
      // Predicated region
      $region13: #{tpu_custom_call.1} parent=11 // pred_check
        %p162 = pneg %p58
      $region14: #{tpu_custom_call.1} parent=11 // pred_check_branch
        %164 = sbr.rel (%p162) target = $region16
      $region15: #{tpu_custom_call.1} parent=11 // pred_region
        _
      $region16: #{tpu_custom_call.1} parent=11 // pred_fallthru
        _
      // Predicated region
      $region17: #{tpu_custom_call.1} parent=11 // pred_check
        %p165 = pneg %p79
      $region18: #{tpu_custom_call.1} parent=11 // pred_check_branch
        %167 = sbr.rel (%p165) target = $region20
      $region19: #{tpu_custom_call.1} parent=11 // pred_region
        _
      $region20: #{tpu_custom_call.1} parent=11 // pred_fallthru
        _
      // Predicated region
      $region21: #{tpu_custom_call.1} parent=11 // pred_check
        %p168 = pneg %p100
      $region22: #{tpu_custom_call.1} parent=11 // pred_check_branch
        %170 = sbr.rel (%p168) target = $region24
      $region23: #{tpu_custom_call.1} parent=11 // pred_region
        _
      $region24: #{tpu_custom_call.1} parent=11 // pred_fallthru
        _
      // Predicated region
      $region25: #{tpu_custom_call.1} parent=11 // pred_check
        %p171 = pneg %p121
      $region26: #{tpu_custom_call.1} parent=11 // pred_check_branch
        %173 = sbr.rel (%p171) target = $region28
      $region27: #{tpu_custom_call.1} parent=11 // pred_region
        _
      $region28: #{tpu_custom_call.1} parent=11 // pred_fallthru
        _
    $region12: #{tpu_custom_call.1} parent=5 // pred_fallthru
      _
    %p174 = scmp.lt.s32.totalorder %s11, 2
    // Predicated region
    $region29: #{tpu_custom_call.1} parent=5 // pred_check
      %p175 = pneg %p174
    $region30: #{tpu_custom_call.1} parent=5 // pred_check_branch
      %177 = sbr.rel (%p175) target = $region32
    $region31: #{tpu_custom_call.1} parent=5 // pred_region
      // Predicated region
      $region33: #{tpu_custom_call.1} parent=31 // pred_check
        %p178 = pneg %p31
      $region34: #{tpu_custom_call.1} parent=31 // pred_check_branch
        %180 = sbr.rel (%p178) target = $region36
      $region35: #{tpu_custom_call.1} parent=31 // pred_region
        %s181 = smul.u32 64, %s11
        %p182 = scmp.lt.s32.totalorder %s181, 127
        %s183 = scalar_select %p182, %s181, 127
        %s184 = smul.addr %s183, 8
        %s185 = scalar_lea.vmem %s0, %s184
        %s186 = smul.u32 64, %s11
      $region36: #{tpu_custom_call.1} parent=31 // pred_fallthru
        _
    $region32: #{tpu_custom_call.1} parent=5 // pred_fallthru
      _
    %p187 = scmp.le.s32.totalorder 1, %s11
    %p188 = scmp.lt.s32.totalorder %s11, 3
    %p189 = pnand %p187, %p188
    %p190 = pneg %p189
    // Predicated region
    $region37: #{tpu_custom_call.1} parent=5 // pred_check
      _
    $region38: #{tpu_custom_call.1} parent=5 // pred_check_branch
      %192 = sbr.rel (%p189) target = $region40
    $region39: #{tpu_custom_call.1} parent=5 // pred_region
      %s193 = ssub.s32 %s11, 1
      %s194 = smul.u32 64, %s16
      %p195 = scmp.lt.s32.totalorder %s194, 127
      %s196 = scalar_select %p195, %s194, 127
      %s197 = smul.addr %s196, 8
      %s198 = scalar_lea.vmem %s0, %s197
      %p199 = pneg %p37
      %p200 = pneg %p34
      %p201 = pneg %p58
      %p202 = pneg %p55
      %p203 = pneg %p79
      %p204 = pneg %p76
      %p205 = pneg %p100
      %p206 = pneg %p97
      %p207 = pneg %p121
      %p208 = pneg %p118
      %p209 = pneg %p147
      %p210 = pneg %p144
      %s211 = smul.u32 64, %s16
      %p212 = scmp.lt.s32.totalorder %s211, 127
      %s213 = scalar_select %p212, %s211, 127
      %s214 = smul.addr %s213, 8
      %s215 = scalar_lea.vmem %s5, %s214
      %s216 = smul.u32 64, %s16
      %p217 = scmp.lt.s32.totalorder %s216, 127
      %s218 = scalar_select %p217, %s216, 127
      %s219 = smul.addr %s218, 8
      %s220 = scalar_lea.vmem %s0, %s219
      %s221 = smul.u32 64, %s16
      %s222 = smul.u32 64, %s16
      %p223 = scmp.lt.s32.totalorder %s222, 127
      %s224 = scalar_select %p223, %s222, 127
      %s225 = smul.addr %s224, 8
      %s226 = scalar_lea.vmem %s5, %s225
      %s227 = smul.u32 64, %s16
      %v228 = vld [vmem:[%s220] sm:$0xff]
      %v229 = vld [vmem:[%s220 + $0x8] sm:$0xff]
      %v230 = vld [vmem:[%s220 + $0x10] sm:$0xff]
      %v231 = vld [vmem:[%s220 + $0x18] sm:$0xff]
      %v232 = vld [vmem:[%s220 + $0x20] sm:$0xff]
      %v233 = vld [vmem:[%s220 + $0x28] sm:$0xff]
      %v234 = vld [vmem:[%s220 + $0x30] sm:$0xff]
      %v235 = vld [vmem:[%s220 + $0x38] sm:$0xff]
      %v236 = vld [vmem:[%s220 + $0x40] sm:$0xff]
      %v237 = vld [vmem:[%s220 + $0x48] sm:$0xff]
      %v238 = vld [vmem:[%s220 + $0x50] sm:$0xff]
      %v239 = vld [vmem:[%s220 + $0x58] sm:$0xff]
      %v240 = vld [vmem:[%s220 + $0x60] sm:$0xff]
      %v241 = vld [vmem:[%s220 + $0x68] sm:$0xff]
      %v242 = vld [vmem:[%s220 + $0x70] sm:$0xff]
      %v243 = vld [vmem:[%s220 + $0x78] sm:$0xff]
      %v244 = vld [vmem:[%s220 + $0x80] sm:$0xff]
      %v245 = vld [vmem:[%s220 + $0x88] sm:$0xff]
      %v246 = vld [vmem:[%s220 + $0x90] sm:$0xff]
      %v247 = vld [vmem:[%s220 + $0x98] sm:$0xff]
      %v248 = vld [vmem:[%s220 + $0xa0] sm:$0xff]
      %v249 = vld [vmem:[%s220 + $0xa8] sm:$0xff]
      %v250 = vld [vmem:[%s220 + $0xb0] sm:$0xff]
      %v251 = vld [vmem:[%s220 + $0xb8] sm:$0xff]
      %v252 = vld [vmem:[%s220 + $0xc0] sm:$0xff]
      %v253 = vld [vmem:[%s220 + $0xc8] sm:$0xff]
      %v254 = vld [vmem:[%s220 + $0xd0] sm:$0xff]
      %v255 = vld [vmem:[%s220 + $0xd8] sm:$0xff]
      %v256 = vld [vmem:[%s220 + $0xe0] sm:$0xff]
      %v257 = vld [vmem:[%s220 + $0xe8] sm:$0xff]
      %v258 = vld [vmem:[%s220 + $0xf0] sm:$0xff]
      %v259 = vld [vmem:[%s220 + $0xf8] sm:$0xff]
      %v260 = vld [vmem:[%s220 + $0x100] sm:$0xff]
      %v261 = vld [vmem:[%s220 + $0x108] sm:$0xff]
      %v262 = vld [vmem:[%s220 + $0x110] sm:$0xff]
      %v263 = vld [vmem:[%s220 + $0x118] sm:$0xff]
      %v264 = vld [vmem:[%s220 + $0x120] sm:$0xff]
      %v265 = vld [vmem:[%s220 + $0x128] sm:$0xff]
      %v266 = vld [vmem:[%s220 + $0x130] sm:$0xff]
      %v267 = vld [vmem:[%s220 + $0x138] sm:$0xff]
      %v268 = vld [vmem:[%s220 + $0x140] sm:$0xff]
      %v269 = vld [vmem:[%s220 + $0x148] sm:$0xff]
      %v270 = vld [vmem:[%s220 + $0x150] sm:$0xff]
      %v271 = vld [vmem:[%s220 + $0x158] sm:$0xff]
      %v272 = vld [vmem:[%s220 + $0x160] sm:$0xff]
      %v273 = vld [vmem:[%s220 + $0x168] sm:$0xff]
      %v274 = vld [vmem:[%s220 + $0x170] sm:$0xff]
      %v275 = vld [vmem:[%s220 + $0x178] sm:$0xff]
      %v276 = vld [vmem:[%s220 + $0x180] sm:$0xff]
      %v277 = vld [vmem:[%s220 + $0x188] sm:$0xff]
      %v278 = vld [vmem:[%s220 + $0x190] sm:$0xff]
      %v279 = vld [vmem:[%s220 + $0x198] sm:$0xff]
      %v280 = vld [vmem:[%s220 + $0x1a0] sm:$0xff]
      %v281 = vld [vmem:[%s220 + $0x1a8] sm:$0xff]
      %v282 = vld [vmem:[%s220 + $0x1b0] sm:$0xff]
      %v283 = vld [vmem:[%s220 + $0x1b8] sm:$0xff]
      %v284 = vld [vmem:[%s220 + $0x1c0] sm:$0xff]
      %v285 = vld [vmem:[%s220 + $0x1c8] sm:$0xff]
      %v286 = vld [vmem:[%s220 + $0x1d0] sm:$0xff]
      %v287 = vld [vmem:[%s220 + $0x1d8] sm:$0xff]
      %v288 = vld [vmem:[%s220 + $0x1e0] sm:$0xff]
      %v289 = vld [vmem:[%s220 + $0x1e8] sm:$0xff]
      %v290 = vld [vmem:[%s220 + $0x1f0] sm:$0xff]
      %v291 = vld [vmem:[%s220 + $0x1f8] sm:$0xff]
      %v292 = vld [vmem:[%s1] sm:$0xff]
      %v293 = vld [vmem:[%s1 + $0x8] sm:$0xff]
      %v294 = vld [vmem:[%s2] sm:$0x1]
      %v296 = vlaneseq
      %v297 = vshrl.u32 %v296, 7
      %v298 = vsub.s32 0, %v297
      %v299 = vrot.slane %v294, %v298
      %vm301 = vcmask 130048
      %v303 = vsel %vm301, %v228, 0
      %v306 = vsel %vm301, %v229, 0
      %v309 = vsel %vm301, %v230, 0
      %v312 = vsel %vm301, %v231, 0
      %v315 = vsel %vm301, %v232, 0
      %v318 = vsel %vm301, %v233, 0
      %v321 = vsel %vm301, %v234, 0
      %v324 = vsel %vm301, %v235, 0
      %v327 = vsel %vm301, %v236, 0
      %v330 = vsel %vm301, %v237, 0
      %v333 = vsel %vm301, %v238, 0
      %v336 = vsel %vm301, %v239, 0
      %v339 = vsel %vm301, %v240, 0
      %v342 = vsel %vm301, %v241, 0
      %v345 = vsel %vm301, %v242, 0
      %v348 = vsel %vm301, %v243, 0
      %v351 = vsel %vm301, %v244, 0
      %v354 = vsel %vm301, %v245, 0
      %v357 = vsel %vm301, %v246, 0
      %v360 = vsel %vm301, %v247, 0
      %v363 = vsel %vm301, %v248, 0
      %v366 = vsel %vm301, %v249, 0
      %v369 = vsel %vm301, %v250, 0
      %v372 = vsel %vm301, %v251, 0
      %v375 = vsel %vm301, %v252, 0
      %v378 = vsel %vm301, %v253, 0
      %v381 = vsel %vm301, %v254, 0
      %v384 = vsel %vm301, %v255, 0
      %v387 = vsel %vm301, %v256, 0
      %v390 = vsel %vm301, %v257, 0
      %v393 = vsel %vm301, %v258, 0
      %v396 = vsel %vm301, %v259, 0
      %v399 = vsel %vm301, %v260, 0
      %v402 = vsel %vm301, %v261, 0
      %v405 = vsel %vm301, %v262, 0
      %v408 = vsel %vm301, %v263, 0
      %v411 = vsel %vm301, %v264, 0
      %v414 = vsel %vm301, %v265, 0
      %v417 = vsel %vm301, %v266, 0
      %v420 = vsel %vm301, %v267, 0
      %v423 = vsel %vm301, %v268, 0
      %v426 = vsel %vm301, %v269, 0
      %v429 = vsel %vm301, %v270, 0
      %v432 = vsel %vm301, %v271, 0
      %v435 = vsel %vm301, %v272, 0
      %v438 = vsel %vm301, %v273, 0
      %v441 = vsel %vm301, %v274, 0
      %v444 = vsel %vm301, %v275, 0
      %v447 = vsel %vm301, %v276, 0
      %v450 = vsel %vm301, %v277, 0
      %v453 = vsel %vm301, %v278, 0
      %v456 = vsel %vm301, %v279, 0
      %v459 = vsel %vm301, %v280, 0
      %v462 = vsel %vm301, %v281, 0
      %v465 = vsel %vm301, %v282, 0
      %v468 = vsel %vm301, %v283, 0
      %v471 = vsel %vm301, %v284, 0
      %v474 = vsel %vm301, %v285, 0
      %v477 = vsel %vm301, %v286, 0
      %v480 = vsel %vm301, %v287, 0
      %v483 = vsel %vm301, %v288, 0
      %v486 = vsel %vm301, %v289, 0
      %v489 = vsel %vm301, %v290, 0
      %v492 = vsel %vm301, %v291, 0
      %494 = vmatprep.subr.mxu0 0.0
      %495 = vmatpush1.msra.mxu0 %v292
      %496 = vmatprep.subr.mxu0 0.0
      %497 = vmatpush1.msra.mxu0 %v293
      %498 = vmatprep.subr.mxu0 0.0
      %499 = vmatpush1.msra.mxu0 0.0
      %500 = vmatprep.subr.mxu0 0.0
      %501 = vmatpush1.msra.mxu0 0.0
      %502 = vmatprep.subr.mxu0 0.0
      %503 = vmatpush1.msra.mxu0 0.0
      %504 = vmatprep.subr.mxu0 0.0
      %505 = vmatpush1.msra.mxu0 0.0
      %506 = vmatprep.subr.mxu0 0.0
      %507 = vmatpush1.msra.mxu0 0.0
      %508 = vmatprep.subr.mxu0 0.0
      %509 = vmatpush1.msra.mxu0 0.0
      %510 = vmatprep.subr.mxu0 0.0
      %511 = vmatpush1.msra.mxu0 0.0
      %512 = vmatprep.subr.mxu0 0.0
      %513 = vmatpush1.msra.mxu0 0.0
      %514 = vmatprep.subr.mxu0 0.0
      %515 = vmatpush1.msra.mxu0 0.0
      %516 = vmatprep.subr.mxu0 0.0
      %517 = vmatpush1.msra.mxu0 0.0
      %518 = vmatprep.subr.mxu0 0.0
      %519 = vmatpush1.msra.mxu0 0.0
      %520 = vmatprep.subr.mxu0 0.0
      %521 = vmatpush1.msra.mxu0 0.0
      %522 = vmatprep.subr.mxu0 0.0
      %523 = vmatpush1.msra.mxu0 0.0
      %524 = vmatprep.subr.mxu0 0.0
      %525 = vmatpush1.msra.mxu0 0.0
      %526 = vmatprep.subr.mxu0 0.0
      %527 = vmatpush1.msra.mxu0 0.0
      %528 = vmatprep.subr.mxu0 0.0
      %529 = vmatpush1.msra.mxu0 0.0
      %530 = vmatprep.subr.mxu0 0.0
      %531 = vmatpush1.msra.mxu0 0.0
      %532 = vmatprep.subr.mxu0 0.0
      %533 = vmatpush1.msra.mxu0 0.0
      %534 = vmatprep.subr.mxu0 0.0
      %535 = vmatpush1.msra.mxu0 0.0
      %536 = vmatprep.subr.mxu0 0.0
      %537 = vmatpush1.msra.mxu0 0.0
      %538 = vmatprep.subr.mxu0 0.0
      %539 = vmatpush1.msra.mxu0 0.0
      %540 = vmatprep.subr.mxu0 0.0
      %541 = vmatpush1.msra.mxu0 0.0
      %542 = vmatprep.subr.mxu0 0.0
      %543 = vmatpush1.msra.mxu0 0.0
      %544 = vmatprep.subr.mxu0 0.0
      %545 = vmatpush1.msra.mxu0 0.0
      %546 = vmatprep.subr.mxu0 0.0
      %547 = vmatpush1.msra.mxu0 0.0
      %548 = vmatprep.subr.mxu0 0.0
      %549 = vmatpush1.msra.mxu0 0.0
      %550 = vmatprep.subr.mxu0 0.0
      %551 = vmatpush1.msra.mxu0 0.0
      %552 = vmatprep.subr.mxu0 0.0
      %553 = vmatpush1.msra.mxu0 0.0
      %554 = vmatprep.subr.mxu0 0.0
      %555 = vmatpush1.msra.mxu0 0.0
      %556 = vmatprep.subr.mxu0 0.0
      %557 = vmatpush1.msra.mxu0 0.0
      %558 = vmatprep.mubr.f32.mxu0 0.0
      %559 = vmatmul.mubr.f32.gmra.mrb[0].mxu0 %v303
      %v560 = vpop.f32.mrb[0].mxu0
      %v561 = vadd.f32 %v299, %v560
      %v562 = vpop.f32.mrb[0].mxu0
      %563 = vmatprep.mubr.f32.mxu0 0.0
      %564 = vmatmul.mubr.f32.gmra.mrb[0].mxu0 %v306
      %v565 = vpop.f32.mrb[0].mxu0
      %v566 = vadd.f32 %v299, %v565
      %v567 = vpop.f32.mrb[0].mxu0
      %568 = vmatprep.mubr.f32.mxu0 0.0
      %569 = vmatmul.mubr.f32.gmra.mrb[0].mxu0 %v309
      %v570 = vpop.f32.mrb[0].mxu0
      %v571 = vadd.f32 %v299, %v570
      %v572 = vpop.f32.mrb[0].mxu0
      %573 = vmatprep.mubr.f32.mxu0 0.0
      %574 = vmatmul.mubr.f32.gmra.mrb[0].mxu0 %v312
      %v575 = vpop.f32.mrb[0].mxu0
      %v576 = vadd.f32 %v299, %v575
      %v577 = vpop.f32.mrb[0].mxu0
      %578 = vmatprep.mubr.f32.mxu0 0.0
      %579 = vmatmul.mubr.f32.gmra.mrb[0].mxu0 %v315
      %v580 = vpop.f32.mrb[0].mxu0
      %v581 = vadd.f32 %v299, %v580
      %v582 = vpop.f32.mrb[0].mxu0
      %583 = vmatprep.mubr.f32.mxu0 0.0
      %584 = vmatmul.mubr.f32.gmra.mrb[0].mxu0 %v318
      %v585 = vpop.f32.mrb[0].mxu0
      %v586 = vadd.f32 %v299, %v585
      %v587 = vpop.f32.mrb[0].mxu0
      %588 = vmatprep.mubr.f32.mxu0 0.0
      %589 = vmatmul.mubr.f32.gmra.mrb[0].mxu0 %v321
      %v590 = vpop.f32.mrb[0].mxu0
      %v591 = vadd.f32 %v299, %v590
      %v592 = vpop.f32.mrb[0].mxu0
      %593 = vmatprep.mubr.f32.mxu0 0.0
      %594 = vmatmul.mubr.f32.gmra.mrb[0].mxu0 %v324
      %v595 = vpop.f32.mrb[0].mxu0
      %v596 = vadd.f32 %v299, %v595
      %v597 = vpop.f32.mrb[0].mxu0
      %598 = vmatprep.mubr.f32.mxu0 0.0
      %599 = vmatmul.mubr.f32.gmra.mrb[0].mxu0 %v327
      %v600 = vpop.f32.mrb[0].mxu0
      %v601 = vadd.f32 %v299, %v600
      %v602 = vpop.f32.mrb[0].mxu0
      %603 = vmatprep.mubr.f32.mxu0 0.0
      %604 = vmatmul.mubr.f32.gmra.mrb[0].mxu0 %v330
      %v605 = vpop.f32.mrb[0].mxu0
      %v606 = vadd.f32 %v299, %v605
      %v607 = vpop.f32.mrb[0].mxu0
      %608 = vmatprep.mubr.f32.mxu0 0.0
      %609 = vmatmul.mubr.f32.gmra.mrb[0].mxu0 %v333
      %v610 = vpop.f32.mrb[0].mxu0
      %v611 = vadd.f32 %v299, %v610
      %v612 = vpop.f32.mrb[0].mxu0
      %613 = vmatprep.mubr.f32.mxu0 0.0
      %614 = vmatmul.mubr.f32.gmra.mrb[0].mxu0 %v336
      %v615 = vpop.f32.mrb[0].mxu0
      %v616 = vadd.f32 %v299, %v615
      %v617 = vpop.f32.mrb[0].mxu0
      %618 = vmatprep.mubr.f32.mxu0 0.0
      %619 = vmatmul.mubr.f32.gmra.mrb[0].mxu0 %v339
      %v620 = vpop.f32.mrb[0].mxu0
      %v621 = vadd.f32 %v299, %v620
      %v622 = vpop.f32.mrb[0].mxu0
      %623 = vmatprep.mubr.f32.mxu0 0.0
      %624 = vmatmul.mubr.f32.gmra.mrb[0].mxu0 %v342
      %v625 = vpop.f32.mrb[0].mxu0
      %v626 = vadd.f32 %v299, %v625
      %v627 = vpop.f32.mrb[0].mxu0
      %628 = vmatprep.mubr.f32.mxu0 0.0
      %629 = vmatmul.mubr.f32.gmra.mrb[0].mxu0 %v345
      %v630 = vpop.f32.mrb[0].mxu0
      %v631 = vadd.f32 %v299, %v630
      %v632 = vpop.f32.mrb[0].mxu0
      %633 = vmatprep.mubr.f32.mxu0 0.0
      %634 = vmatmul.mubr.f32.gmra.mrb[0].mxu0 %v348
      %v635 = vpop.f32.mrb[0].mxu0
      %v636 = vadd.f32 %v299, %v635
      %v637 = vpop.f32.mrb[0].mxu0
      %638 = vmatprep.mubr.f32.mxu0 0.0
      %639 = vmatmul.mubr.f32.gmra.mrb[0].mxu0 %v351
      %v640 = vpop.f32.mrb[0].mxu0
      %v641 = vadd.f32 %v299, %v640
      %v642 = vpop.f32.mrb[0].mxu0
      %643 = vmatprep.mubr.f32.mxu0 0.0
      %644 = vmatmul.mubr.f32.gmra.mrb[0].mxu0 %v354
      %v645 = vpop.f32.mrb[0].mxu0
      %v646 = vadd.f32 %v299, %v645
      %v647 = vpop.f32.mrb[0].mxu0
      %648 = vmatprep.mubr.f32.mxu0 0.0
      %649 = vmatmul.mubr.f32.gmra.mrb[0].mxu0 %v357
      %v650 = vpop.f32.mrb[0].mxu0
      %v651 = vadd.f32 %v299, %v650
      %v652 = vpop.f32.mrb[0].mxu0
      %653 = vmatprep.mubr.f32.mxu0 0.0
      %654 = vmatmul.mubr.f32.gmra.mrb[0].mxu0 %v360
      %v655 = vpop.f32.mrb[0].mxu0
      %v656 = vadd.f32 %v299, %v655
      %v657 = vpop.f32.mrb[0].mxu0
      %658 = vmatprep.mubr.f32.mxu0 0.0
      %659 = vmatmul.mubr.f32.gmra.mrb[0].mxu0 %v363
      %v660 = vpop.f32.mrb[0].mxu0
      %v661 = vadd.f32 %v299, %v660
      %v662 = vpop.f32.mrb[0].mxu0
      %663 = vmatprep.mubr.f32.mxu0 0.0
      %664 = vmatmul.mubr.f32.gmra.mrb[0].mxu0 %v366
      %v665 = vpop.f32.mrb[0].mxu0
      %v666 = vadd.f32 %v299, %v665
      %v667 = vpop.f32.mrb[0].mxu0
      %668 = vmatprep.mubr.f32.mxu0 0.0
      %669 = vmatmul.mubr.f32.gmra.mrb[0].mxu0 %v369
      %v670 = vpop.f32.mrb[0].mxu0
      %v671 = vadd.f32 %v299, %v670
      %v672 = vpop.f32.mrb[0].mxu0
      %673 = vmatprep.mubr.f32.mxu0 0.0
      %674 = vmatmul.mubr.f32.gmra.mrb[0].mxu0 %v372
      %v675 = vpop.f32.mrb[0].mxu0
      %v676 = vadd.f32 %v299, %v675
      %v677 = vpop.f32.mrb[0].mxu0
      %678 = vmatprep.mubr.f32.mxu0 0.0
      %679 = vmatmul.mubr.f32.gmra.mrb[0].mxu0 %v375
      %v680 = vpop.f32.mrb[0].mxu0
      %v681 = vadd.f32 %v299, %v680
      %v682 = vpop.f32.mrb[0].mxu0
      %683 = vmatprep.mubr.f32.mxu0 0.0
      %684 = vmatmul.mubr.f32.gmra.mrb[0].mxu0 %v378
      %v685 = vpop.f32.mrb[0].mxu0
      %v686 = vadd.f32 %v299, %v685
      %v687 = vpop.f32.mrb[0].mxu0
      %688 = vmatprep.mubr.f32.mxu0 0.0
      %689 = vmatmul.mubr.f32.gmra.mrb[0].mxu0 %v381
      %v690 = vpop.f32.mrb[0].mxu0
      %v691 = vadd.f32 %v299, %v690
      %v692 = vpop.f32.mrb[0].mxu0
      %693 = vmatprep.mubr.f32.mxu0 0.0
      %694 = vmatmul.mubr.f32.gmra.mrb[0].mxu0 %v384
      %v695 = vpop.f32.mrb[0].mxu0
      %v696 = vadd.f32 %v299, %v695
      %v697 = vpop.f32.mrb[0].mxu0
      %698 = vmatprep.mubr.f32.mxu0 0.0
      %699 = vmatmul.mubr.f32.gmra.mrb[0].mxu0 %v387
      %v700 = vpop.f32.mrb[0].mxu0
      %v701 = vadd.f32 %v299, %v700
      %v702 = vpop.f32.mrb[0].mxu0
      %703 = vmatprep.mubr.f32.mxu0 0.0
      %704 = vmatmul.mubr.f32.gmra.mrb[0].mxu0 %v390
      %v705 = vpop.f32.mrb[0].mxu0
      %v706 = vadd.f32 %v299, %v705
      %v707 = vpop.f32.mrb[0].mxu0
      %708 = vmatprep.mubr.f32.mxu0 0.0
      %709 = vmatmul.mubr.f32.gmra.mrb[0].mxu0 %v393
      %v710 = vpop.f32.mrb[0].mxu0
      %v711 = vadd.f32 %v299, %v710
      %v712 = vpop.f32.mrb[0].mxu0
      %713 = vmatprep.mubr.f32.mxu0 0.0
      %714 = vmatmul.mubr.f32.gmra.mrb[0].mxu0 %v396
      %v715 = vpop.f32.mrb[0].mxu0
      %v716 = vadd.f32 %v299, %v715
      %v717 = vpop.f32.mrb[0].mxu0
      %718 = vmatprep.mubr.f32.mxu0 0.0
      %719 = vmatmul.mubr.f32.gmra.mrb[0].mxu0 %v399
      %v720 = vpop.f32.mrb[0].mxu0
      %v721 = vadd.f32 %v299, %v720
      %v722 = vpop.f32.mrb[0].mxu0
      %723 = vmatprep.mubr.f32.mxu0 0.0
      %724 = vmatmul.mubr.f32.gmra.mrb[0].mxu0 %v402
      %v725 = vpop.f32.mrb[0].mxu0
      %v726 = vadd.f32 %v299, %v725
      %v727 = vpop.f32.mrb[0].mxu0
      %728 = vmatprep.mubr.f32.mxu0 0.0
      %729 = vmatmul.mubr.f32.gmra.mrb[0].mxu0 %v405
      %v730 = vpop.f32.mrb[0].mxu0
      %v731 = vadd.f32 %v299, %v730
      %v732 = vpop.f32.mrb[0].mxu0
      %733 = vmatprep.mubr.f32.mxu0 0.0
      %734 = vmatmul.mubr.f32.gmra.mrb[0].mxu0 %v408
      %v735 = vpop.f32.mrb[0].mxu0
      %v736 = vadd.f32 %v299, %v735
      %v737 = vpop.f32.mrb[0].mxu0
      %738 = vmatprep.mubr.f32.mxu0 0.0
      %739 = vmatmul.mubr.f32.gmra.mrb[0].mxu0 %v411
      %v740 = vpop.f32.mrb[0].mxu0
      %v741 = vadd.f32 %v299, %v740
      %v742 = vpop.f32.mrb[0].mxu0
      %743 = vmatprep.mubr.f32.mxu0 0.0
      %744 = vmatmul.mubr.f32.gmra.mrb[0].mxu0 %v414
      %v745 = vpop.f32.mrb[0].mxu0
      %v746 = vadd.f32 %v299, %v745
      %v747 = vpop.f32.mrb[0].mxu0
      %748 = vmatprep.mubr.f32.mxu0 0.0
      %749 = vmatmul.mubr.f32.gmra.mrb[0].mxu0 %v417
      %v750 = vpop.f32.mrb[0].mxu0
      %v751 = vadd.f32 %v299, %v750
      %v752 = vpop.f32.mrb[0].mxu0
      %753 = vmatprep.mubr.f32.mxu0 0.0
      %754 = vmatmul.mubr.f32.gmra.mrb[0].mxu0 %v420
      %v755 = vpop.f32.mrb[0].mxu0
      %v756 = vadd.f32 %v299, %v755
      %v757 = vpop.f32.mrb[0].mxu0
      %758 = vmatprep.mubr.f32.mxu0 0.0
      %759 = vmatmul.mubr.f32.gmra.mrb[0].mxu0 %v423
      %v760 = vpop.f32.mrb[0].mxu0
      %v761 = vadd.f32 %v299, %v760
      %v762 = vpop.f32.mrb[0].mxu0
      %763 = vmatprep.mubr.f32.mxu0 0.0
      %764 = vmatmul.mubr.f32.gmra.mrb[0].mxu0 %v426
      %v765 = vpop.f32.mrb[0].mxu0
      %v766 = vadd.f32 %v299, %v765
      %v767 = vpop.f32.mrb[0].mxu0
      %768 = vmatprep.mubr.f32.mxu0 0.0
      %769 = vmatmul.mubr.f32.gmra.mrb[0].mxu0 %v429
      %v770 = vpop.f32.mrb[0].mxu0
      %v771 = vadd.f32 %v299, %v770
      %v772 = vpop.f32.mrb[0].mxu0
      %773 = vmatprep.mubr.f32.mxu0 0.0
      %774 = vmatmul.mubr.f32.gmra.mrb[0].mxu0 %v432
      %v775 = vpop.f32.mrb[0].mxu0
      %v776 = vadd.f32 %v299, %v775
      %v777 = vpop.f32.mrb[0].mxu0
      %778 = vmatprep.mubr.f32.mxu0 0.0
      %779 = vmatmul.mubr.f32.gmra.mrb[0].mxu0 %v435
      %v780 = vpop.f32.mrb[0].mxu0
      %v781 = vadd.f32 %v299, %v780
      %v782 = vpop.f32.mrb[0].mxu0
      %783 = vmatprep.mubr.f32.mxu0 0.0
      %784 = vmatmul.mubr.f32.gmra.mrb[0].mxu0 %v438
      %v785 = vpop.f32.mrb[0].mxu0
      %v786 = vadd.f32 %v299, %v785
      %v787 = vpop.f32.mrb[0].mxu0
      %788 = vmatprep.mubr.f32.mxu0 0.0
      %789 = vmatmul.mubr.f32.gmra.mrb[0].mxu0 %v441
      %v790 = vpop.f32.mrb[0].mxu0
      %v791 = vadd.f32 %v299, %v790
      %v792 = vpop.f32.mrb[0].mxu0
      %793 = vmatprep.mubr.f32.mxu0 0.0
      %794 = vmatmul.mubr.f32.gmra.mrb[0].mxu0 %v444
      %v795 = vpop.f32.mrb[0].mxu0
      %v796 = vadd.f32 %v299, %v795
      %v797 = vpop.f32.mrb[0].mxu0
      %798 = vmatprep.mubr.f32.mxu0 0.0
      %799 = vmatmul.mubr.f32.gmra.mrb[0].mxu0 %v447
      %v800 = vpop.f32.mrb[0].mxu0
      %v801 = vadd.f32 %v299, %v800
      %v802 = vpop.f32.mrb[0].mxu0
      %803 = vmatprep.mubr.f32.mxu0 0.0
      %804 = vmatmul.mubr.f32.gmra.mrb[0].mxu0 %v450
      %v805 = vpop.f32.mrb[0].mxu0
      %v806 = vadd.f32 %v299, %v805
      %v807 = vpop.f32.mrb[0].mxu0
      %808 = vmatprep.mubr.f32.mxu0 0.0
      %809 = vmatmul.mubr.f32.gmra.mrb[0].mxu0 %v453
      %v810 = vpop.f32.mrb[0].mxu0
      %v811 = vadd.f32 %v299, %v810
      %v812 = vpop.f32.mrb[0].mxu0
      %813 = vmatprep.mubr.f32.mxu0 0.0
      %814 = vmatmul.mubr.f32.gmra.mrb[0].mxu0 %v456
      %v815 = vpop.f32.mrb[0].mxu0
      %v816 = vadd.f32 %v299, %v815
      %v817 = vpop.f32.mrb[0].mxu0
      %818 = vmatprep.mubr.f32.mxu0 0.0
      %819 = vmatmul.mubr.f32.gmra.mrb[0].mxu0 %v459
      %v820 = vpop.f32.mrb[0].mxu0
      %v821 = vadd.f32 %v299, %v820
      %v822 = vpop.f32.mrb[0].mxu0
      %823 = vmatprep.mubr.f32.mxu0 0.0
      %824 = vmatmul.mubr.f32.gmra.mrb[0].mxu0 %v462
      %v825 = vpop.f32.mrb[0].mxu0
      %v826 = vadd.f32 %v299, %v825
      %v827 = vpop.f32.mrb[0].mxu0
      %828 = vmatprep.mubr.f32.mxu0 0.0
      %829 = vmatmul.mubr.f32.gmra.mrb[0].mxu0 %v465
      %v830 = vpop.f32.mrb[0].mxu0
      %v831 = vadd.f32 %v299, %v830
      %v832 = vpop.f32.mrb[0].mxu0
      %833 = vmatprep.mubr.f32.mxu0 0.0
      %834 = vmatmul.mubr.f32.gmra.mrb[0].mxu0 %v468
      %v835 = vpop.f32.mrb[0].mxu0
      %v836 = vadd.f32 %v299, %v835
      %v837 = vpop.f32.mrb[0].mxu0
      %838 = vmatprep.mubr.f32.mxu0 0.0
      %839 = vmatmul.mubr.f32.gmra.mrb[0].mxu0 %v471
      %v840 = vpop.f32.mrb[0].mxu0
      %v841 = vadd.f32 %v299, %v840
      %v842 = vpop.f32.mrb[0].mxu0
      %843 = vmatprep.mubr.f32.mxu0 0.0
      %844 = vmatmul.mubr.f32.gmra.mrb[0].mxu0 %v474
      %v845 = vpop.f32.mrb[0].mxu0
      %v846 = vadd.f32 %v299, %v845
      %v847 = vpop.f32.mrb[0].mxu0
      %848 = vmatprep.mubr.f32.mxu0 0.0
      %849 = vmatmul.mubr.f32.gmra.mrb[0].mxu0 %v477
      %v850 = vpop.f32.mrb[0].mxu0
      %v851 = vadd.f32 %v299, %v850
      %v852 = vpop.f32.mrb[0].mxu0
      %853 = vmatprep.mubr.f32.mxu0 0.0
      %854 = vmatmul.mubr.f32.gmra.mrb[0].mxu0 %v480
      %v855 = vpop.f32.mrb[0].mxu0
      %v856 = vadd.f32 %v299, %v855
      %v857 = vpop.f32.mrb[0].mxu0
      %858 = vmatprep.mubr.f32.mxu0 0.0
      %859 = vmatmul.mubr.f32.gmra.mrb[0].mxu0 %v483
      %v860 = vpop.f32.mrb[0].mxu0
      %v861 = vadd.f32 %v299, %v860
      %v862 = vpop.f32.mrb[0].mxu0
      %863 = vmatprep.mubr.f32.mxu0 0.0
      %864 = vmatmul.mubr.f32.gmra.mrb[0].mxu0 %v486
      %v865 = vpop.f32.mrb[0].mxu0
      %v866 = vadd.f32 %v299, %v865
      %v867 = vpop.f32.mrb[0].mxu0
      %868 = vmatprep.mubr.f32.mxu0 0.0
      %869 = vmatmul.mubr.f32.gmra.mrb[0].mxu0 %v489
      %v870 = vpop.f32.mrb[0].mxu0
      %v871 = vadd.f32 %v299, %v870
      %v872 = vpop.f32.mrb[0].mxu0
      %873 = vmatprep.mubr.f32.mxu0 0.0
      %874 = vmatmul.mubr.f32.gmra.mrb[0].mxu0 %v492
      %v875 = vpop.f32.mrb[0].mxu0
      %v876 = vadd.f32 %v299, %v875
      %v877 = vpop.f32.mrb[0].mxu0
      %878 = vdwg.mxu0
      %v879 = vmax.f32 %v561, 0.0
      %v880 = vmax.f32 %v566, 0.0
      %v881 = vmax.f32 %v571, 0.0
      %v882 = vmax.f32 %v576, 0.0
      %v883 = vmax.f32 %v581, 0.0
      %v884 = vmax.f32 %v586, 0.0
      %v885 = vmax.f32 %v591, 0.0
      %v886 = vmax.f32 %v596, 0.0
      %v887 = vmax.f32 %v601, 0.0
      %v888 = vmax.f32 %v606, 0.0
      %v889 = vmax.f32 %v611, 0.0
      %v890 = vmax.f32 %v616, 0.0
      %v891 = vmax.f32 %v621, 0.0
      %v892 = vmax.f32 %v626, 0.0
      %v893 = vmax.f32 %v631, 0.0
      %v894 = vmax.f32 %v636, 0.0
      %v895 = vmax.f32 %v641, 0.0
      %v896 = vmax.f32 %v646, 0.0
      %v897 = vmax.f32 %v651, 0.0
      %v898 = vmax.f32 %v656, 0.0
      %v899 = vmax.f32 %v661, 0.0
      %v900 = vmax.f32 %v666, 0.0
      %v901 = vmax.f32 %v671, 0.0
      %v902 = vmax.f32 %v676, 0.0
      %v903 = vmax.f32 %v681, 0.0
      %v904 = vmax.f32 %v686, 0.0
      %v905 = vmax.f32 %v691, 0.0
      %v906 = vmax.f32 %v696, 0.0
      %v907 = vmax.f32 %v701, 0.0
      %v908 = vmax.f32 %v706, 0.0
      %v909 = vmax.f32 %v711, 0.0
      %v910 = vmax.f32 %v716, 0.0
      %v911 = vmax.f32 %v721, 0.0
      %v912 = vmax.f32 %v726, 0.0
      %v913 = vmax.f32 %v731, 0.0
      %v914 = vmax.f32 %v736, 0.0
      %v915 = vmax.f32 %v741, 0.0
      %v916 = vmax.f32 %v746, 0.0
      %v917 = vmax.f32 %v751, 0.0
      %v918 = vmax.f32 %v756, 0.0
      %v919 = vmax.f32 %v761, 0.0
      %v920 = vmax.f32 %v766, 0.0
      %v921 = vmax.f32 %v771, 0.0
      %v922 = vmax.f32 %v776, 0.0
      %v923 = vmax.f32 %v781, 0.0
      %v924 = vmax.f32 %v786, 0.0
      %v925 = vmax.f32 %v791, 0.0
      %v926 = vmax.f32 %v796, 0.0
      %v927 = vmax.f32 %v801, 0.0
      %v928 = vmax.f32 %v806, 0.0
      %v929 = vmax.f32 %v811, 0.0
      %v930 = vmax.f32 %v816, 0.0
      %v931 = vmax.f32 %v821, 0.0
      %v932 = vmax.f32 %v826, 0.0
      %v933 = vmax.f32 %v831, 0.0
      %v934 = vmax.f32 %v836, 0.0
      %v935 = vmax.f32 %v841, 0.0
      %v936 = vmax.f32 %v846, 0.0
      %v937 = vmax.f32 %v851, 0.0
      %v938 = vmax.f32 %v856, 0.0
      %v939 = vmax.f32 %v861, 0.0
      %v940 = vmax.f32 %v866, 0.0
      %v941 = vmax.f32 %v871, 0.0
      %v942 = vmax.f32 %v876, 0.0
      %v943 = vld [vmem:[%s3] sm:$0xff]
      %v944 = vld [vmem:[%s3 + $0x8] sm:$0xff]
      %v945 = vld [vmem:[%s3 + $0x10] sm:$0xff]
      %v946 = vld [vmem:[%s3 + $0x18] sm:$0xff]
      %v947 = vld [vmem:[%s4] sm:$0x1]
      %v949 = vlaneseq
      %v950 = vshrl.u32 %v949, 7
      %v951 = vsub.s32 0, %v950
      %v952 = vrot.slane %v947, %v951
      %vm954 = vcmask 261120
      %v956 = vsel %vm954, %v879, 0
      %v959 = vsel %vm954, %v880, 0
      %v962 = vsel %vm954, %v881, 0
      %v965 = vsel %vm954, %v882, 0
      %v968 = vsel %vm954, %v883, 0
      %v971 = vsel %vm954, %v884, 0
      %v974 = vsel %vm954, %v885, 0
      %v977 = vsel %vm954, %v886, 0
      %v980 = vsel %vm954, %v887, 0
      %v983 = vsel %vm954, %v888, 0
      %v986 = vsel %vm954, %v889, 0
      %v989 = vsel %vm954, %v890, 0
      %v992 = vsel %vm954, %v891, 0
      %v995 = vsel %vm954, %v892, 0
      %v998 = vsel %vm954, %v893, 0
      %v1001 = vsel %vm954, %v894, 0
      %v1004 = vsel %vm954, %v895, 0
      %v1007 = vsel %vm954, %v896, 0
      %v1010 = vsel %vm954, %v897, 0
      %v1013 = vsel %vm954, %v898, 0
      %v1016 = vsel %vm954, %v899, 0
      %v1019 = vsel %vm954, %v900, 0
      %v1022 = vsel %vm954, %v901, 0
      %v1025 = vsel %vm954, %v902, 0
      %v1028 = vsel %vm954, %v903, 0
      %v1031 = vsel %vm954, %v904, 0
      %v1034 = vsel %vm954, %v905, 0
      %v1037 = vsel %vm954, %v906, 0
      %v1040 = vsel %vm954, %v907, 0
      %v1043 = vsel %vm954, %v908, 0
      %v1046 = vsel %vm954, %v909, 0
      %v1049 = vsel %vm954, %v910, 0
      %v1052 = vsel %vm954, %v911, 0
      %v1055 = vsel %vm954, %v912, 0
      %v1058 = vsel %vm954, %v913, 0
      %v1061 = vsel %vm954, %v914, 0
      %v1064 = vsel %vm954, %v915, 0
      %v1067 = vsel %vm954, %v916, 0
      %v1070 = vsel %vm954, %v917, 0
      %v1073 = vsel %vm954, %v918, 0
      %v1076 = vsel %vm954, %v919, 0
      %v1079 = vsel %vm954, %v920, 0
      %v1082 = vsel %vm954, %v921, 0
      %v1085 = vsel %vm954, %v922, 0
      %v1088 = vsel %vm954, %v923, 0
      %v1091 = vsel %vm954, %v924, 0
      %v1094 = vsel %vm954, %v925, 0
      %v1097 = vsel %vm954, %v926, 0
      %v1100 = vsel %vm954, %v927, 0
      %v1103 = vsel %vm954, %v928, 0
      %v1106 = vsel %vm954, %v929, 0
      %v1109 = vsel %vm954, %v930, 0
      %v1112 = vsel %vm954, %v931, 0
      %v1115 = vsel %vm954, %v932, 0
      %v1118 = vsel %vm954, %v933, 0
      %v1121 = vsel %vm954, %v934, 0
      %v1124 = vsel %vm954, %v935, 0
      %v1127 = vsel %vm954, %v936, 0
      %v1130 = vsel %vm954, %v937, 0
      %v1133 = vsel %vm954, %v938, 0
      %v1136 = vsel %vm954, %v939, 0
      %v1139 = vsel %vm954, %v940, 0
      %v1142 = vsel %vm954, %v941, 0
      %v1145 = vsel %vm954, %v942, 0
      %1147 = vmatprep.subr.mxu0 0.0
      %1148 = vmatpush1.msra.mxu0 %v943
      %1149 = vmatprep.subr.mxu0 0.0
      %1150 = vmatpush1.msra.mxu0 %v944
      %1151 = vmatprep.subr.mxu0 0.0
      %1152 = vmatpush1.msra.mxu0 %v945
      %1153 = vmatprep.subr.mxu0 0.0
      %1154 = vmatpush1.msra.mxu0 %v946
      %1155 = vmatprep.subr.mxu0 0.0
      %1156 = vmatpush1.msra.mxu0 0.0
      %1157 = vmatprep.subr.mxu0 0.0
      %1158 = vmatpush1.msra.mxu0 0.0
      %1159 = vmatprep.subr.mxu0 0.0
      %1160 = vmatpush1.msra.mxu0 0.0
      %1161 = vmatprep.subr.mxu0 0.0
      %1162 = vmatpush1.msra.mxu0 0.0
      %1163 = vmatprep.subr.mxu0 0.0
      %1164 = vmatpush1.msra.mxu0 0.0
      %1165 = vmatprep.subr.mxu0 0.0
      %1166 = vmatpush1.msra.mxu0 0.0
      %1167 = vmatprep.subr.mxu0 0.0
      %1168 = vmatpush1.msra.mxu0 0.0
      %1169 = vmatprep.subr.mxu0 0.0
      %1170 = vmatpush1.msra.mxu0 0.0
      %1171 = vmatprep.subr.mxu0 0.0
      %1172 = vmatpush1.msra.mxu0 0.0
      %1173 = vmatprep.subr.mxu0 0.0
      %1174 = vmatpush1.msra.mxu0 0.0
      %1175 = vmatprep.subr.mxu0 0.0
      %1176 = vmatpush1.msra.mxu0 0.0
      %1177 = vmatprep.subr.mxu0 0.0
      %1178 = vmatpush1.msra.mxu0 0.0
      %1179 = vmatprep.subr.mxu0 0.0
      %1180 = vmatpush1.msra.mxu0 0.0
      %1181 = vmatprep.subr.mxu0 0.0
      %1182 = vmatpush1.msra.mxu0 0.0
      %1183 = vmatprep.subr.mxu0 0.0
      %1184 = vmatpush1.msra.mxu0 0.0
      %1185 = vmatprep.subr.mxu0 0.0
      %1186 = vmatpush1.msra.mxu0 0.0
      %1187 = vmatprep.subr.mxu0 0.0
      %1188 = vmatpush1.msra.mxu0 0.0
      %1189 = vmatprep.subr.mxu0 0.0
      %1190 = vmatpush1.msra.mxu0 0.0
      %1191 = vmatprep.subr.mxu0 0.0
      %1192 = vmatpush1.msra.mxu0 0.0
      %1193 = vmatprep.subr.mxu0 0.0
      %1194 = vmatpush1.msra.mxu0 0.0
      %1195 = vmatprep.subr.mxu0 0.0
      %1196 = vmatpush1.msra.mxu0 0.0
      %1197 = vmatprep.subr.mxu0 0.0
      %1198 = vmatpush1.msra.mxu0 0.0
      %1199 = vmatprep.subr.mxu0 0.0
      %1200 = vmatpush1.msra.mxu0 0.0
      %1201 = vmatprep.subr.mxu0 0.0
      %1202 = vmatpush1.msra.mxu0 0.0
      %1203 = vmatprep.subr.mxu0 0.0
      %1204 = vmatpush1.msra.mxu0 0.0
      %1205 = vmatprep.subr.mxu0 0.0
      %1206 = vmatpush1.msra.mxu0 0.0
      %1207 = vmatprep.subr.mxu0 0.0
      %1208 = vmatpush1.msra.mxu0 0.0
      %1209 = vmatprep.subr.mxu0 0.0
      %1210 = vmatpush1.msra.mxu0 0.0
      %1211 = vmatprep.mubr.f32.mxu0 0.0
      %1212 = vmatmul.mubr.f32.gmra.mrb[0].mxu0 %v956
      %v1213 = vpop.f32.mrb[0].mxu0
      %v1214 = vadd.f32 %v952, %v1213
      %v1215 = vpop.f32.mrb[0].mxu0
      %1216 = vmatprep.mubr.f32.mxu0 0.0
      %1217 = vmatmul.mubr.f32.gmra.mrb[0].mxu0 %v959
      %v1218 = vpop.f32.mrb[0].mxu0
      %v1219 = vadd.f32 %v952, %v1218
      %v1220 = vpop.f32.mrb[0].mxu0
      %1221 = vmatprep.mubr.f32.mxu0 0.0
      %1222 = vmatmul.mubr.f32.gmra.mrb[0].mxu0 %v962
      %v1223 = vpop.f32.mrb[0].mxu0
      %v1224 = vadd.f32 %v952, %v1223
      %v1225 = vpop.f32.mrb[0].mxu0
      %1226 = vmatprep.mubr.f32.mxu0 0.0
      %1227 = vmatmul.mubr.f32.gmra.mrb[0].mxu0 %v965
      %v1228 = vpop.f32.mrb[0].mxu0
      %v1229 = vadd.f32 %v952, %v1228
      %v1230 = vpop.f32.mrb[0].mxu0
      %1231 = vmatprep.mubr.f32.mxu0 0.0
      %1232 = vmatmul.mubr.f32.gmra.mrb[0].mxu0 %v968
      %v1233 = vpop.f32.mrb[0].mxu0
      %v1234 = vadd.f32 %v952, %v1233
      %v1235 = vpop.f32.mrb[0].mxu0
      %1236 = vmatprep.mubr.f32.mxu0 0.0
      %1237 = vmatmul.mubr.f32.gmra.mrb[0].mxu0 %v971
      %v1238 = vpop.f32.mrb[0].mxu0
      %v1239 = vadd.f32 %v952, %v1238
      %v1240 = vpop.f32.mrb[0].mxu0
      %1241 = vmatprep.mubr.f32.mxu0 0.0
      %1242 = vmatmul.mubr.f32.gmra.mrb[0].mxu0 %v974
      %v1243 = vpop.f32.mrb[0].mxu0
      %v1244 = vadd.f32 %v952, %v1243
      %v1245 = vpop.f32.mrb[0].mxu0
      %1246 = vmatprep.mubr.f32.mxu0 0.0
      %1247 = vmatmul.mubr.f32.gmra.mrb[0].mxu0 %v977
      %v1248 = vpop.f32.mrb[0].mxu0
      %v1249 = vadd.f32 %v952, %v1248
      %v1250 = vpop.f32.mrb[0].mxu0
      %1251 = vmatprep.mubr.f32.mxu0 0.0
      %1252 = vmatmul.mubr.f32.gmra.mrb[0].mxu0 %v980
      %v1253 = vpop.f32.mrb[0].mxu0
      %v1254 = vadd.f32 %v952, %v1253
      %v1255 = vpop.f32.mrb[0].mxu0
      %1256 = vmatprep.mubr.f32.mxu0 0.0
      %1257 = vmatmul.mubr.f32.gmra.mrb[0].mxu0 %v983
      %v1258 = vpop.f32.mrb[0].mxu0
      %v1259 = vadd.f32 %v952, %v1258
      %v1260 = vpop.f32.mrb[0].mxu0
      %1261 = vmatprep.mubr.f32.mxu0 0.0
      %1262 = vmatmul.mubr.f32.gmra.mrb[0].mxu0 %v986
      %v1263 = vpop.f32.mrb[0].mxu0
      %v1264 = vadd.f32 %v952, %v1263
      %v1265 = vpop.f32.mrb[0].mxu0
      %1266 = vmatprep.mubr.f32.mxu0 0.0
      %1267 = vmatmul.mubr.f32.gmra.mrb[0].mxu0 %v989
      %v1268 = vpop.f32.mrb[0].mxu0
      %v1269 = vadd.f32 %v952, %v1268
      %v1270 = vpop.f32.mrb[0].mxu0
      %1271 = vmatprep.mubr.f32.mxu0 0.0
      %1272 = vmatmul.mubr.f32.gmra.mrb[0].mxu0 %v992
      %v1273 = vpop.f32.mrb[0].mxu0
      %v1274 = vadd.f32 %v952, %v1273
      %v1275 = vpop.f32.mrb[0].mxu0
      %1276 = vmatprep.mubr.f32.mxu0 0.0
      %1277 = vmatmul.mubr.f32.gmra.mrb[0].mxu0 %v995
      %v1278 = vpop.f32.mrb[0].mxu0
      %v1279 = vadd.f32 %v952, %v1278
      %v1280 = vpop.f32.mrb[0].mxu0
      %1281 = vmatprep.mubr.f32.mxu0 0.0
      %1282 = vmatmul.mubr.f32.gmra.mrb[0].mxu0 %v998
      %v1283 = vpop.f32.mrb[0].mxu0
      %v1284 = vadd.f32 %v952, %v1283
      %v1285 = vpop.f32.mrb[0].mxu0
      %1286 = vmatprep.mubr.f32.mxu0 0.0
      %1287 = vmatmul.mubr.f32.gmra.mrb[0].mxu0 %v1001
      %v1288 = vpop.f32.mrb[0].mxu0
      %v1289 = vadd.f32 %v952, %v1288
      %v1290 = vpop.f32.mrb[0].mxu0
      %1291 = vmatprep.mubr.f32.mxu0 0.0
      %1292 = vmatmul.mubr.f32.gmra.mrb[0].mxu0 %v1004
      %v1293 = vpop.f32.mrb[0].mxu0
      %v1294 = vadd.f32 %v952, %v1293
      %v1295 = vpop.f32.mrb[0].mxu0
      %1296 = vmatprep.mubr.f32.mxu0 0.0
      %1297 = vmatmul.mubr.f32.gmra.mrb[0].mxu0 %v1007
      %v1298 = vpop.f32.mrb[0].mxu0
      %v1299 = vadd.f32 %v952, %v1298
      %v1300 = vpop.f32.mrb[0].mxu0
      %1301 = vmatprep.mubr.f32.mxu0 0.0
      %1302 = vmatmul.mubr.f32.gmra.mrb[0].mxu0 %v1010
      %v1303 = vpop.f32.mrb[0].mxu0
      %v1304 = vadd.f32 %v952, %v1303
      %v1305 = vpop.f32.mrb[0].mxu0
      %1306 = vmatprep.mubr.f32.mxu0 0.0
      %1307 = vmatmul.mubr.f32.gmra.mrb[0].mxu0 %v1013
      %v1308 = vpop.f32.mrb[0].mxu0
      %v1309 = vadd.f32 %v952, %v1308
      %v1310 = vpop.f32.mrb[0].mxu0
      %1311 = vmatprep.mubr.f32.mxu0 0.0
      %1312 = vmatmul.mubr.f32.gmra.mrb[0].mxu0 %v1016
      %v1313 = vpop.f32.mrb[0].mxu0
      %v1314 = vadd.f32 %v952, %v1313
      %v1315 = vpop.f32.mrb[0].mxu0
      %1316 = vmatprep.mubr.f32.mxu0 0.0
      %1317 = vmatmul.mubr.f32.gmra.mrb[0].mxu0 %v1019
      %v1318 = vpop.f32.mrb[0].mxu0
      %v1319 = vadd.f32 %v952, %v1318
      %v1320 = vpop.f32.mrb[0].mxu0
      %1321 = vmatprep.mubr.f32.mxu0 0.0
      %1322 = vmatmul.mubr.f32.gmra.mrb[0].mxu0 %v1022
      %v1323 = vpop.f32.mrb[0].mxu0
      %v1324 = vadd.f32 %v952, %v1323
      %v1325 = vpop.f32.mrb[0].mxu0
      %1326 = vmatprep.mubr.f32.mxu0 0.0
      %1327 = vmatmul.mubr.f32.gmra.mrb[0].mxu0 %v1025
      %v1328 = vpop.f32.mrb[0].mxu0
      %v1329 = vadd.f32 %v952, %v1328
      %v1330 = vpop.f32.mrb[0].mxu0
      %1331 = vmatprep.mubr.f32.mxu0 0.0
      %1332 = vmatmul.mubr.f32.gmra.mrb[0].mxu0 %v1028
      %v1333 = vpop.f32.mrb[0].mxu0
      %v1334 = vadd.f32 %v952, %v1333
      %v1335 = vpop.f32.mrb[0].mxu0
      %1336 = vmatprep.mubr.f32.mxu0 0.0
      %1337 = vmatmul.mubr.f32.gmra.mrb[0].mxu0 %v1031
      %v1338 = vpop.f32.mrb[0].mxu0
      %v1339 = vadd.f32 %v952, %v1338
      %v1340 = vpop.f32.mrb[0].mxu0
      %1341 = vmatprep.mubr.f32.mxu0 0.0
      %1342 = vmatmul.mubr.f32.gmra.mrb[0].mxu0 %v1034
      %v1343 = vpop.f32.mrb[0].mxu0
      %v1344 = vadd.f32 %v952, %v1343
      %v1345 = vpop.f32.mrb[0].mxu0
      %1346 = vmatprep.mubr.f32.mxu0 0.0
      %1347 = vmatmul.mubr.f32.gmra.mrb[0].mxu0 %v1037
      %v1348 = vpop.f32.mrb[0].mxu0
      %v1349 = vadd.f32 %v952, %v1348
      %v1350 = vpop.f32.mrb[0].mxu0
      %1351 = vmatprep.mubr.f32.mxu0 0.0
      %1352 = vmatmul.mubr.f32.gmra.mrb[0].mxu0 %v1040
      %v1353 = vpop.f32.mrb[0].mxu0
      %v1354 = vadd.f32 %v952, %v1353
      %v1355 = vpop.f32.mrb[0].mxu0
      %1356 = vmatprep.mubr.f32.mxu0 0.0
      %1357 = vmatmul.mubr.f32.gmra.mrb[0].mxu0 %v1043
      %v1358 = vpop.f32.mrb[0].mxu0
      %v1359 = vadd.f32 %v952, %v1358
      %v1360 = vpop.f32.mrb[0].mxu0
      %1361 = vmatprep.mubr.f32.mxu0 0.0
      %1362 = vmatmul.mubr.f32.gmra.mrb[0].mxu0 %v1046
      %v1363 = vpop.f32.mrb[0].mxu0
      %v1364 = vadd.f32 %v952, %v1363
      %v1365 = vpop.f32.mrb[0].mxu0
      %1366 = vmatprep.mubr.f32.mxu0 0.0
      %1367 = vmatmul.mubr.f32.gmra.mrb[0].mxu0 %v1049
      %v1368 = vpop.f32.mrb[0].mxu0
      %v1369 = vadd.f32 %v952, %v1368
      %v1370 = vpop.f32.mrb[0].mxu0
      %1371 = vmatprep.mubr.f32.mxu0 0.0
      %1372 = vmatmul.mubr.f32.gmra.mrb[0].mxu0 %v1052
      %v1373 = vpop.f32.mrb[0].mxu0
      %v1374 = vadd.f32 %v952, %v1373
      %v1375 = vpop.f32.mrb[0].mxu0
      %1376 = vmatprep.mubr.f32.mxu0 0.0
      %1377 = vmatmul.mubr.f32.gmra.mrb[0].mxu0 %v1055
      %v1378 = vpop.f32.mrb[0].mxu0
      %v1379 = vadd.f32 %v952, %v1378
      %v1380 = vpop.f32.mrb[0].mxu0
      %1381 = vmatprep.mubr.f32.mxu0 0.0
      %1382 = vmatmul.mubr.f32.gmra.mrb[0].mxu0 %v1058
      %v1383 = vpop.f32.mrb[0].mxu0
      %v1384 = vadd.f32 %v952, %v1383
      %v1385 = vpop.f32.mrb[0].mxu0
      %1386 = vmatprep.mubr.f32.mxu0 0.0
      %1387 = vmatmul.mubr.f32.gmra.mrb[0].mxu0 %v1061
      %v1388 = vpop.f32.mrb[0].mxu0
      %v1389 = vadd.f32 %v952, %v1388
      %v1390 = vpop.f32.mrb[0].mxu0
      %1391 = vmatprep.mubr.f32.mxu0 0.0
      %1392 = vmatmul.mubr.f32.gmra.mrb[0].mxu0 %v1064
      %v1393 = vpop.f32.mrb[0].mxu0
      %v1394 = vadd.f32 %v952, %v1393
      %v1395 = vpop.f32.mrb[0].mxu0
      %1396 = vmatprep.mubr.f32.mxu0 0.0
      %1397 = vmatmul.mubr.f32.gmra.mrb[0].mxu0 %v1067
      %v1398 = vpop.f32.mrb[0].mxu0
      %v1399 = vadd.f32 %v952, %v1398
      %v1400 = vpop.f32.mrb[0].mxu0
      %1401 = vmatprep.mubr.f32.mxu0 0.0
      %1402 = vmatmul.mubr.f32.gmra.mrb[0].mxu0 %v1070
      %v1403 = vpop.f32.mrb[0].mxu0
      %v1404 = vadd.f32 %v952, %v1403
      %v1405 = vpop.f32.mrb[0].mxu0
      %1406 = vmatprep.mubr.f32.mxu0 0.0
      %1407 = vmatmul.mubr.f32.gmra.mrb[0].mxu0 %v1073
      %v1408 = vpop.f32.mrb[0].mxu0
      %v1409 = vadd.f32 %v952, %v1408
      %v1410 = vpop.f32.mrb[0].mxu0
      %1411 = vmatprep.mubr.f32.mxu0 0.0
      %1412 = vmatmul.mubr.f32.gmra.mrb[0].mxu0 %v1076
      %v1413 = vpop.f32.mrb[0].mxu0
      %v1414 = vadd.f32 %v952, %v1413
      %v1415 = vpop.f32.mrb[0].mxu0
      %1416 = vmatprep.mubr.f32.mxu0 0.0
      %1417 = vmatmul.mubr.f32.gmra.mrb[0].mxu0 %v1079
      %v1418 = vpop.f32.mrb[0].mxu0
      %v1419 = vadd.f32 %v952, %v1418
      %v1420 = vpop.f32.mrb[0].mxu0
      %1421 = vmatprep.mubr.f32.mxu0 0.0
      %1422 = vmatmul.mubr.f32.gmra.mrb[0].mxu0 %v1082
      %v1423 = vpop.f32.mrb[0].mxu0
      %v1424 = vadd.f32 %v952, %v1423
      %v1425 = vpop.f32.mrb[0].mxu0
      %1426 = vmatprep.mubr.f32.mxu0 0.0
      %1427 = vmatmul.mubr.f32.gmra.mrb[0].mxu0 %v1085
      %v1428 = vpop.f32.mrb[0].mxu0
      %v1429 = vadd.f32 %v952, %v1428
      %v1430 = vpop.f32.mrb[0].mxu0
      %1431 = vmatprep.mubr.f32.mxu0 0.0
      %1432 = vmatmul.mubr.f32.gmra.mrb[0].mxu0 %v1088
      %v1433 = vpop.f32.mrb[0].mxu0
      %v1434 = vadd.f32 %v952, %v1433
      %v1435 = vpop.f32.mrb[0].mxu0
      %1436 = vmatprep.mubr.f32.mxu0 0.0
      %1437 = vmatmul.mubr.f32.gmra.mrb[0].mxu0 %v1091
      %v1438 = vpop.f32.mrb[0].mxu0
      %v1439 = vadd.f32 %v952, %v1438
      %v1440 = vpop.f32.mrb[0].mxu0
      %1441 = vmatprep.mubr.f32.mxu0 0.0
      %1442 = vmatmul.mubr.f32.gmra.mrb[0].mxu0 %v1094
      %v1443 = vpop.f32.mrb[0].mxu0
      %v1444 = vadd.f32 %v952, %v1443
      %v1445 = vpop.f32.mrb[0].mxu0
      %1446 = vmatprep.mubr.f32.mxu0 0.0
      %1447 = vmatmul.mubr.f32.gmra.mrb[0].mxu0 %v1097
      %v1448 = vpop.f32.mrb[0].mxu0
      %v1449 = vadd.f32 %v952, %v1448
      %v1450 = vpop.f32.mrb[0].mxu0
      %1451 = vmatprep.mubr.f32.mxu0 0.0
      %1452 = vmatmul.mubr.f32.gmra.mrb[0].mxu0 %v1100
      %v1453 = vpop.f32.mrb[0].mxu0
      %v1454 = vadd.f32 %v952, %v1453
      %v1455 = vpop.f32.mrb[0].mxu0
      %1456 = vmatprep.mubr.f32.mxu0 0.0
      %1457 = vmatmul.mubr.f32.gmra.mrb[0].mxu0 %v1103
      %v1458 = vpop.f32.mrb[0].mxu0
      %v1459 = vadd.f32 %v952, %v1458
      %v1460 = vpop.f32.mrb[0].mxu0
      %1461 = vmatprep.mubr.f32.mxu0 0.0
      %1462 = vmatmul.mubr.f32.gmra.mrb[0].mxu0 %v1106
      %v1463 = vpop.f32.mrb[0].mxu0
      %v1464 = vadd.f32 %v952, %v1463
      %v1465 = vpop.f32.mrb[0].mxu0
      %1466 = vmatprep.mubr.f32.mxu0 0.0
      %1467 = vmatmul.mubr.f32.gmra.mrb[0].mxu0 %v1109
      %v1468 = vpop.f32.mrb[0].mxu0
      %v1469 = vadd.f32 %v952, %v1468
      %v1470 = vpop.f32.mrb[0].mxu0
      %1471 = vmatprep.mubr.f32.mxu0 0.0
      %1472 = vmatmul.mubr.f32.gmra.mrb[0].mxu0 %v1112
      %v1473 = vpop.f32.mrb[0].mxu0
      %v1474 = vadd.f32 %v952, %v1473
      %v1475 = vpop.f32.mrb[0].mxu0
      %1476 = vmatprep.mubr.f32.mxu0 0.0
      %1477 = vmatmul.mubr.f32.gmra.mrb[0].mxu0 %v1115
      %v1478 = vpop.f32.mrb[0].mxu0
      %v1479 = vadd.f32 %v952, %v1478
      %v1480 = vpop.f32.mrb[0].mxu0
      %1481 = vmatprep.mubr.f32.mxu0 0.0
      %1482 = vmatmul.mubr.f32.gmra.mrb[0].mxu0 %v1118
      %v1483 = vpop.f32.mrb[0].mxu0
      %v1484 = vadd.f32 %v952, %v1483
      %v1485 = vpop.f32.mrb[0].mxu0
      %1486 = vmatprep.mubr.f32.mxu0 0.0
      %1487 = vmatmul.mubr.f32.gmra.mrb[0].mxu0 %v1121
      %v1488 = vpop.f32.mrb[0].mxu0
      %v1489 = vadd.f32 %v952, %v1488
      %v1490 = vpop.f32.mrb[0].mxu0
      %1491 = vmatprep.mubr.f32.mxu0 0.0
      %1492 = vmatmul.mubr.f32.gmra.mrb[0].mxu0 %v1124
      %v1493 = vpop.f32.mrb[0].mxu0
      %v1494 = vadd.f32 %v952, %v1493
      %v1495 = vpop.f32.mrb[0].mxu0
      %1496 = vmatprep.mubr.f32.mxu0 0.0
      %1497 = vmatmul.mubr.f32.gmra.mrb[0].mxu0 %v1127
      %v1498 = vpop.f32.mrb[0].mxu0
      %v1499 = vadd.f32 %v952, %v1498
      %v1500 = vpop.f32.mrb[0].mxu0
      %1501 = vmatprep.mubr.f32.mxu0 0.0
      %1502 = vmatmul.mubr.f32.gmra.mrb[0].mxu0 %v1130
      %v1503 = vpop.f32.mrb[0].mxu0
      %v1504 = vadd.f32 %v952, %v1503
      %v1505 = vpop.f32.mrb[0].mxu0
      %1506 = vmatprep.mubr.f32.mxu0 0.0
      %1507 = vmatmul.mubr.f32.gmra.mrb[0].mxu0 %v1133
      %v1508 = vpop.f32.mrb[0].mxu0
      %v1509 = vadd.f32 %v952, %v1508
      %v1510 = vpop.f32.mrb[0].mxu0
      %1511 = vmatprep.mubr.f32.mxu0 0.0
      %1512 = vmatmul.mubr.f32.gmra.mrb[0].mxu0 %v1136
      %v1513 = vpop.f32.mrb[0].mxu0
      %v1514 = vadd.f32 %v952, %v1513
      %v1515 = vpop.f32.mrb[0].mxu0
      %1516 = vmatprep.mubr.f32.mxu0 0.0
      %1517 = vmatmul.mubr.f32.gmra.mrb[0].mxu0 %v1139
      %v1518 = vpop.f32.mrb[0].mxu0
      %v1519 = vadd.f32 %v952, %v1518
      %v1520 = vpop.f32.mrb[0].mxu0
      %1521 = vmatprep.mubr.f32.mxu0 0.0
      %1522 = vmatmul.mubr.f32.gmra.mrb[0].mxu0 %v1142
      %v1523 = vpop.f32.mrb[0].mxu0
      %v1524 = vadd.f32 %v952, %v1523
      %v1525 = vpop.f32.mrb[0].mxu0
      %1526 = vmatprep.mubr.f32.mxu0 0.0
      %1527 = vmatmul.mubr.f32.gmra.mrb[0].mxu0 %v1145
      %v1528 = vpop.f32.mrb[0].mxu0
      %v1529 = vadd.f32 %v952, %v1528
      %v1530 = vpop.f32.mrb[0].mxu0
      %1531 = vdwg.mxu0
      %v1532 = vxor.u32 %v1214, 2147483648
      %v1533 = vxor.u32 %v1219, 2147483648
      %v1534 = vxor.u32 %v1224, 2147483648
      %v1535 = vxor.u32 %v1229, 2147483648
      %v1536 = vxor.u32 %v1234, 2147483648
      %v1537 = vxor.u32 %v1239, 2147483648
      %v1538 = vxor.u32 %v1244, 2147483648
      %v1539 = vxor.u32 %v1249, 2147483648
      %v1540 = vxor.u32 %v1254, 2147483648
      %v1541 = vxor.u32 %v1259, 2147483648
      %v1542 = vxor.u32 %v1264, 2147483648
      %v1543 = vxor.u32 %v1269, 2147483648
      %v1544 = vxor.u32 %v1274, 2147483648
      %v1545 = vxor.u32 %v1279, 2147483648
      %v1546 = vxor.u32 %v1284, 2147483648
      %v1547 = vxor.u32 %v1289, 2147483648
      %v1548 = vxor.u32 %v1294, 2147483648
      %v1549 = vxor.u32 %v1299, 2147483648
      %v1550 = vxor.u32 %v1304, 2147483648
      %v1551 = vxor.u32 %v1309, 2147483648
      %v1552 = vxor.u32 %v1314, 2147483648
      %v1553 = vxor.u32 %v1319, 2147483648
      %v1554 = vxor.u32 %v1324, 2147483648
      %v1555 = vxor.u32 %v1329, 2147483648
      %v1556 = vxor.u32 %v1334, 2147483648
      %v1557 = vxor.u32 %v1339, 2147483648
      %v1558 = vxor.u32 %v1344, 2147483648
      %v1559 = vxor.u32 %v1349, 2147483648
      %v1560 = vxor.u32 %v1354, 2147483648
      %v1561 = vxor.u32 %v1359, 2147483648
      %v1562 = vxor.u32 %v1364, 2147483648
      %v1563 = vxor.u32 %v1369, 2147483648
      %v1564 = vxor.u32 %v1374, 2147483648
      %v1565 = vxor.u32 %v1379, 2147483648
      %v1566 = vxor.u32 %v1384, 2147483648
      %v1567 = vxor.u32 %v1389, 2147483648
      %v1568 = vxor.u32 %v1394, 2147483648
      %v1569 = vxor.u32 %v1399, 2147483648
      %v1570 = vxor.u32 %v1404, 2147483648
      %v1571 = vxor.u32 %v1409, 2147483648
      %v1572 = vxor.u32 %v1414, 2147483648
      %v1573 = vxor.u32 %v1419, 2147483648
      %v1574 = vxor.u32 %v1424, 2147483648
      %v1575 = vxor.u32 %v1429, 2147483648
      %v1576 = vxor.u32 %v1434, 2147483648
      %v1577 = vxor.u32 %v1439, 2147483648
      %v1578 = vxor.u32 %v1444, 2147483648
      %v1579 = vxor.u32 %v1449, 2147483648
      %v1580 = vxor.u32 %v1454, 2147483648
      %v1581 = vxor.u32 %v1459, 2147483648
      %v1582 = vxor.u32 %v1464, 2147483648
      %v1583 = vxor.u32 %v1469, 2147483648
      %v1584 = vxor.u32 %v1474, 2147483648
      %v1585 = vxor.u32 %v1479, 2147483648
      %v1586 = vxor.u32 %v1484, 2147483648
      %v1587 = vxor.u32 %v1489, 2147483648
      %v1588 = vxor.u32 %v1494, 2147483648
      %v1589 = vxor.u32 %v1499, 2147483648
      %v1590 = vxor.u32 %v1504, 2147483648
      %v1591 = vxor.u32 %v1509, 2147483648
      %v1592 = vxor.u32 %v1514, 2147483648
      %v1593 = vxor.u32 %v1519, 2147483648
      %v1594 = vxor.u32 %v1524, 2147483648
      %v1595 = vxor.u32 %v1529, 2147483648
      %v1596 = vmul.f32 %v1532, 1.442695
      %v1597 = vpow.pop %v1596
      %v1598 = vmul.f32 %v1533, 1.442695
      %v1599 = vpow.pop %v1598
      %v1600 = vmul.f32 %v1534, 1.442695
      %v1601 = vpow.pop %v1600
      %v1602 = vmul.f32 %v1535, 1.442695
      %v1603 = vpow.pop %v1602
      %v1604 = vmul.f32 %v1536, 1.442695
      %v1605 = vpow.pop %v1604
      %v1606 = vmul.f32 %v1537, 1.442695
      %v1607 = vpow.pop %v1606
      %v1608 = vmul.f32 %v1538, 1.442695
      %v1609 = vpow.pop %v1608
      %v1610 = vmul.f32 %v1539, 1.442695
      %v1611 = vpow.pop %v1610
      %v1612 = vmul.f32 %v1540, 1.442695
      %v1613 = vpow.pop %v1612
      %v1614 = vmul.f32 %v1541, 1.442695
      %v1615 = vpow.pop %v1614
      %v1616 = vmul.f32 %v1542, 1.442695
      %v1617 = vpow.pop %v1616
      %v1618 = vmul.f32 %v1543, 1.442695
      %v1619 = vpow.pop %v1618
      %v1620 = vmul.f32 %v1544, 1.442695
      %v1621 = vpow.pop %v1620
      %v1622 = vmul.f32 %v1545, 1.442695
      %v1623 = vpow.pop %v1622
      %v1624 = vmul.f32 %v1546, 1.442695
      %v1625 = vpow.pop %v1624
      %v1626 = vmul.f32 %v1547, 1.442695
      %v1627 = vpow.pop %v1626
      %v1628 = vmul.f32 %v1548, 1.442695
      %v1629 = vpow.pop %v1628
      %v1630 = vmul.f32 %v1549, 1.442695
      %v1631 = vpow.pop %v1630
      %v1632 = vmul.f32 %v1550, 1.442695
      %v1633 = vpow.pop %v1632
      %v1634 = vmul.f32 %v1551, 1.442695
      %v1635 = vpow.pop %v1634
      %v1636 = vmul.f32 %v1552, 1.442695
      %v1637 = vpow.pop %v1636
      %v1638 = vmul.f32 %v1553, 1.442695
      %v1639 = vpow.pop %v1638
      %v1640 = vmul.f32 %v1554, 1.442695
      %v1641 = vpow.pop %v1640
      %v1642 = vmul.f32 %v1555, 1.442695
      %v1643 = vpow.pop %v1642
      %v1644 = vmul.f32 %v1556, 1.442695
      %v1645 = vpow.pop %v1644
      %v1646 = vmul.f32 %v1557, 1.442695
      %v1647 = vpow.pop %v1646
      %v1648 = vmul.f32 %v1558, 1.442695
      %v1649 = vpow.pop %v1648
      %v1650 = vmul.f32 %v1559, 1.442695
      %v1651 = vpow.pop %v1650
      %v1652 = vmul.f32 %v1560, 1.442695
      %v1653 = vpow.pop %v1652
      %v1654 = vmul.f32 %v1561, 1.442695
      %v1655 = vpow.pop %v1654
      %v1656 = vmul.f32 %v1562, 1.442695
      %v1657 = vpow.pop %v1656
      %v1658 = vmul.f32 %v1563, 1.442695
      %v1659 = vpow.pop %v1658
      %v1660 = vmul.f32 %v1564, 1.442695
      %v1661 = vpow.pop %v1660
      %v1662 = vmul.f32 %v1565, 1.442695
      %v1663 = vpow.pop %v1662
      %v1664 = vmul.f32 %v1566, 1.442695
      %v1665 = vpow.pop %v1664
      %v1666 = vmul.f32 %v1567, 1.442695
      %v1667 = vpow.pop %v1666
      %v1668 = vmul.f32 %v1568, 1.442695
      %v1669 = vpow.pop %v1668
      %v1670 = vmul.f32 %v1569, 1.442695
      %v1671 = vpow.pop %v1670
      %v1672 = vmul.f32 %v1570, 1.442695
      %v1673 = vpow.pop %v1672
      %v1674 = vmul.f32 %v1571, 1.442695
      %v1675 = vpow.pop %v1674
      %v1676 = vmul.f32 %v1572, 1.442695
      %v1677 = vpow.pop %v1676
      %v1678 = vmul.f32 %v1573, 1.442695
      %v1679 = vpow.pop %v1678
      %v1680 = vmul.f32 %v1574, 1.442695
      %v1681 = vpow.pop %v1680
      %v1682 = vmul.f32 %v1575, 1.442695
      %v1683 = vpow.pop %v1682
      %v1684 = vmul.f32 %v1576, 1.442695
      %v1685 = vpow.pop %v1684
      %v1686 = vmul.f32 %v1577, 1.442695
      %v1687 = vpow.pop %v1686
      %v1688 = vmul.f32 %v1578, 1.442695
      %v1689 = vpow.pop %v1688
      %v1690 = vmul.f32 %v1579, 1.442695
      %v1691 = vpow.pop %v1690
      %v1692 = vmul.f32 %v1580, 1.442695
      %v1693 = vpow.pop %v1692
      %v1694 = vmul.f32 %v1581, 1.442695
      %v1695 = vpow.pop %v1694
      %v1696 = vmul.f32 %v1582, 1.442695
      %v1697 = vpow.pop %v1696
      %v1698 = vmul.f32 %v1583, 1.442695
      %v1699 = vpow.pop %v1698
      %v1700 = vmul.f32 %v1584, 1.442695
      %v1701 = vpow.pop %v1700
      %v1702 = vmul.f32 %v1585, 1.442695
      %v1703 = vpow.pop %v1702
      %v1704 = vmul.f32 %v1586, 1.442695
      %v1705 = vpow.pop %v1704
      %v1706 = vmul.f32 %v1587, 1.442695
      %v1707 = vpow.pop %v1706
      %v1708 = vmul.f32 %v1588, 1.442695
      %v1709 = vpow.pop %v1708
      %v1710 = vmul.f32 %v1589, 1.442695
      %v1711 = vpow.pop %v1710
      %v1712 = vmul.f32 %v1590, 1.442695
      %v1713 = vpow.pop %v1712
      %v1714 = vmul.f32 %v1591, 1.442695
      %v1715 = vpow.pop %v1714
      %v1716 = vmul.f32 %v1592, 1.442695
      %v1717 = vpow.pop %v1716
      %v1718 = vmul.f32 %v1593, 1.442695
      %v1719 = vpow.pop %v1718
      %v1720 = vmul.f32 %v1594, 1.442695
      %v1721 = vpow.pop %v1720
      %v1722 = vmul.f32 %v1595, 1.442695
      %v1723 = vpow.pop %v1722
      %v1724 = vadd.f32 %v1597, 1.0
      %v1725 = vadd.f32 %v1599, 1.0
      %v1726 = vadd.f32 %v1601, 1.0
      %v1727 = vadd.f32 %v1603, 1.0
      %v1728 = vadd.f32 %v1605, 1.0
      %v1729 = vadd.f32 %v1607, 1.0
      %v1730 = vadd.f32 %v1609, 1.0
      %v1731 = vadd.f32 %v1611, 1.0
      %v1732 = vadd.f32 %v1613, 1.0
      %v1733 = vadd.f32 %v1615, 1.0
      %v1734 = vadd.f32 %v1617, 1.0
      %v1735 = vadd.f32 %v1619, 1.0
      %v1736 = vadd.f32 %v1621, 1.0
      %v1737 = vadd.f32 %v1623, 1.0
      %v1738 = vadd.f32 %v1625, 1.0
      %v1739 = vadd.f32 %v1627, 1.0
      %v1740 = vadd.f32 %v1629, 1.0
      %v1741 = vadd.f32 %v1631, 1.0
      %v1742 = vadd.f32 %v1633, 1.0
      %v1743 = vadd.f32 %v1635, 1.0
      %v1744 = vadd.f32 %v1637, 1.0
      %v1745 = vadd.f32 %v1639, 1.0
      %v1746 = vadd.f32 %v1641, 1.0
      %v1747 = vadd.f32 %v1643, 1.0
      %v1748 = vadd.f32 %v1645, 1.0
      %v1749 = vadd.f32 %v1647, 1.0
      %v1750 = vadd.f32 %v1649, 1.0
      %v1751 = vadd.f32 %v1651, 1.0
      %v1752 = vadd.f32 %v1653, 1.0
      %v1753 = vadd.f32 %v1655, 1.0
      %v1754 = vadd.f32 %v1657, 1.0
      %v1755 = vadd.f32 %v1659, 1.0
      %v1756 = vadd.f32 %v1661, 1.0
      %v1757 = vadd.f32 %v1663, 1.0
      %v1758 = vadd.f32 %v1665, 1.0
      %v1759 = vadd.f32 %v1667, 1.0
      %v1760 = vadd.f32 %v1669, 1.0
      %v1761 = vadd.f32 %v1671, 1.0
      %v1762 = vadd.f32 %v1673, 1.0
      %v1763 = vadd.f32 %v1675, 1.0
      %v1764 = vadd.f32 %v1677, 1.0
      %v1765 = vadd.f32 %v1679, 1.0
      %v1766 = vadd.f32 %v1681, 1.0
      %v1767 = vadd.f32 %v1683, 1.0
      %v1768 = vadd.f32 %v1685, 1.0
      %v1769 = vadd.f32 %v1687, 1.0
      %v1770 = vadd.f32 %v1689, 1.0
      %v1771 = vadd.f32 %v1691, 1.0
      %v1772 = vadd.f32 %v1693, 1.0
      %v1773 = vadd.f32 %v1695, 1.0
      %v1774 = vadd.f32 %v1697, 1.0
      %v1775 = vadd.f32 %v1699, 1.0
      %v1776 = vadd.f32 %v1701, 1.0
      %v1777 = vadd.f32 %v1703, 1.0
      %v1778 = vadd.f32 %v1705, 1.0
      %v1779 = vadd.f32 %v1707, 1.0
      %v1780 = vadd.f32 %v1709, 1.0
      %v1781 = vadd.f32 %v1711, 1.0
      %v1782 = vadd.f32 %v1713, 1.0
      %v1783 = vadd.f32 %v1715, 1.0
      %v1784 = vadd.f32 %v1717, 1.0
      %v1785 = vadd.f32 %v1719, 1.0
      %v1786 = vadd.f32 %v1721, 1.0
      %v1787 = vadd.f32 %v1723, 1.0
      %v1788 = vrcp.pop %v1724
      %v1789 = vmul.f32 1.0, %v1788
      %v1790 = vrcp.pop %v1725
      %v1791 = vmul.f32 1.0, %v1790
      %v1792 = vrcp.pop %v1726
      %v1793 = vmul.f32 1.0, %v1792
      %v1794 = vrcp.pop %v1727
      %v1795 = vmul.f32 1.0, %v1794
      %v1796 = vrcp.pop %v1728
      %v1797 = vmul.f32 1.0, %v1796
      %v1798 = vrcp.pop %v1729
      %v1799 = vmul.f32 1.0, %v1798
      %v1800 = vrcp.pop %v1730
      %v1801 = vmul.f32 1.0, %v1800
      %v1802 = vrcp.pop %v1731
      %v1803 = vmul.f32 1.0, %v1802
      %v1804 = vrcp.pop %v1732
      %v1805 = vmul.f32 1.0, %v1804
      %v1806 = vrcp.pop %v1733
      %v1807 = vmul.f32 1.0, %v1806
      %v1808 = vrcp.pop %v1734
      %v1809 = vmul.f32 1.0, %v1808
      %v1810 = vrcp.pop %v1735
      %v1811 = vmul.f32 1.0, %v1810
      %v1812 = vrcp.pop %v1736
      %v1813 = vmul.f32 1.0, %v1812
      %v1814 = vrcp.pop %v1737
      %v1815 = vmul.f32 1.0, %v1814
      %v1816 = vrcp.pop %v1738
      %v1817 = vmul.f32 1.0, %v1816
      %v1818 = vrcp.pop %v1739
      %v1819 = vmul.f32 1.0, %v1818
      %v1820 = vrcp.pop %v1740
      %v1821 = vmul.f32 1.0, %v1820
      %v1822 = vrcp.pop %v1741
      %v1823 = vmul.f32 1.0, %v1822
      %v1824 = vrcp.pop %v1742
      %v1825 = vmul.f32 1.0, %v1824
      %v1826 = vrcp.pop %v1743
      %v1827 = vmul.f32 1.0, %v1826
      %v1828 = vrcp.pop %v1744
      %v1829 = vmul.f32 1.0, %v1828
      %v1830 = vrcp.pop %v1745
      %v1831 = vmul.f32 1.0, %v1830
      %v1832 = vrcp.pop %v1746
      %v1833 = vmul.f32 1.0, %v1832
      %v1834 = vrcp.pop %v1747
      %v1835 = vmul.f32 1.0, %v1834
      %v1836 = vrcp.pop %v1748
      %v1837 = vmul.f32 1.0, %v1836
      %v1838 = vrcp.pop %v1749
      %v1839 = vmul.f32 1.0, %v1838
      %v1840 = vrcp.pop %v1750
      %v1841 = vmul.f32 1.0, %v1840
      %v1842 = vrcp.pop %v1751
      %v1843 = vmul.f32 1.0, %v1842
      %v1844 = vrcp.pop %v1752
      %v1845 = vmul.f32 1.0, %v1844
      %v1846 = vrcp.pop %v1753
      %v1847 = vmul.f32 1.0, %v1846
      %v1848 = vrcp.pop %v1754
      %v1849 = vmul.f32 1.0, %v1848
      %v1850 = vrcp.pop %v1755
      %v1851 = vmul.f32 1.0, %v1850
      %v1852 = vrcp.pop %v1756
      %v1853 = vmul.f32 1.0, %v1852
      %v1854 = vrcp.pop %v1757
      %v1855 = vmul.f32 1.0, %v1854
      %v1856 = vrcp.pop %v1758
      %v1857 = vmul.f32 1.0, %v1856
      %v1858 = vrcp.pop %v1759
      %v1859 = vmul.f32 1.0, %v1858
      %v1860 = vrcp.pop %v1760
      %v1861 = vmul.f32 1.0, %v1860
      %v1862 = vrcp.pop %v1761
      %v1863 = vmul.f32 1.0, %v1862
      %v1864 = vrcp.pop %v1762
      %v1865 = vmul.f32 1.0, %v1864
      %v1866 = vrcp.pop %v1763
      %v1867 = vmul.f32 1.0, %v1866
      %v1868 = vrcp.pop %v1764
      %v1869 = vmul.f32 1.0, %v1868
      %v1870 = vrcp.pop %v1765
      %v1871 = vmul.f32 1.0, %v1870
      %v1872 = vrcp.pop %v1766
      %v1873 = vmul.f32 1.0, %v1872
      %v1874 = vrcp.pop %v1767
      %v1875 = vmul.f32 1.0, %v1874
      %v1876 = vrcp.pop %v1768
      %v1877 = vmul.f32 1.0, %v1876
      %v1878 = vrcp.pop %v1769
      %v1879 = vmul.f32 1.0, %v1878
      %v1880 = vrcp.pop %v1770
      %v1881 = vmul.f32 1.0, %v1880
      %v1882 = vrcp.pop %v1771
      %v1883 = vmul.f32 1.0, %v1882
      %v1884 = vrcp.pop %v1772
      %v1885 = vmul.f32 1.0, %v1884
      %v1886 = vrcp.pop %v1773
      %v1887 = vmul.f32 1.0, %v1886
      %v1888 = vrcp.pop %v1774
      %v1889 = vmul.f32 1.0, %v1888
      %v1890 = vrcp.pop %v1775
      %v1891 = vmul.f32 1.0, %v1890
      %v1892 = vrcp.pop %v1776
      %v1893 = vmul.f32 1.0, %v1892
      %v1894 = vrcp.pop %v1777
      %v1895 = vmul.f32 1.0, %v1894
      %v1896 = vrcp.pop %v1778
      %v1897 = vmul.f32 1.0, %v1896
      %v1898 = vrcp.pop %v1779
      %v1899 = vmul.f32 1.0, %v1898
      %v1900 = vrcp.pop %v1780
      %v1901 = vmul.f32 1.0, %v1900
      %v1902 = vrcp.pop %v1781
      %v1903 = vmul.f32 1.0, %v1902
      %v1904 = vrcp.pop %v1782
      %v1905 = vmul.f32 1.0, %v1904
      %v1906 = vrcp.pop %v1783
      %v1907 = vmul.f32 1.0, %v1906
      %v1908 = vrcp.pop %v1784
      %v1909 = vmul.f32 1.0, %v1908
      %v1910 = vrcp.pop %v1785
      %v1911 = vmul.f32 1.0, %v1910
      %v1912 = vrcp.pop %v1786
      %v1913 = vmul.f32 1.0, %v1912
      %v1914 = vrcp.pop %v1787
      %v1915 = vmul.f32 1.0, %v1914
      %vm1916 = vcmask 64512
      %1917 = vst.msk [vmem:[%s226] sm:$0xff] %vm1916, %v1789
      %1918 = vst.msk [vmem:[%s226 + $0x8] sm:$0xff] %vm1916, %v1791
      %1919 = vst.msk [vmem:[%s226 + $0x10] sm:$0xff] %vm1916, %v1793
      %1920 = vst.msk [vmem:[%s226 + $0x18] sm:$0xff] %vm1916, %v1795
      %1921 = vst.msk [vmem:[%s226 + $0x20] sm:$0xff] %vm1916, %v1797
      %1922 = vst.msk [vmem:[%s226 + $0x28] sm:$0xff] %vm1916, %v1799
      %1923 = vst.msk [vmem:[%s226 + $0x30] sm:$0xff] %vm1916, %v1801
      %1924 = vst.msk [vmem:[%s226 + $0x38] sm:$0xff] %vm1916, %v1803
      %1925 = vst.msk [vmem:[%s226 + $0x40] sm:$0xff] %vm1916, %v1805
      %1926 = vst.msk [vmem:[%s226 + $0x48] sm:$0xff] %vm1916, %v1807
      %1927 = vst.msk [vmem:[%s226 + $0x50] sm:$0xff] %vm1916, %v1809
      %1928 = vst.msk [vmem:[%s226 + $0x58] sm:$0xff] %vm1916, %v1811
      %1929 = vst.msk [vmem:[%s226 + $0x60] sm:$0xff] %vm1916, %v1813
      %1930 = vst.msk [vmem:[%s226 + $0x68] sm:$0xff] %vm1916, %v1815
      %1931 = vst.msk [vmem:[%s226 + $0x70] sm:$0xff] %vm1916, %v1817
      %1932 = vst.msk [vmem:[%s226 + $0x78] sm:$0xff] %vm1916, %v1819
      %1933 = vst.msk [vmem:[%s226 + $0x80] sm:$0xff] %vm1916, %v1821
      %1934 = vst.msk [vmem:[%s226 + $0x88] sm:$0xff] %vm1916, %v1823
      %1935 = vst.msk [vmem:[%s226 + $0x90] sm:$0xff] %vm1916, %v1825
      %1936 = vst.msk [vmem:[%s226 + $0x98] sm:$0xff] %vm1916, %v1827
      %1937 = vst.msk [vmem:[%s226 + $0xa0] sm:$0xff] %vm1916, %v1829
      %1938 = vst.msk [vmem:[%s226 + $0xa8] sm:$0xff] %vm1916, %v1831
      %1939 = vst.msk [vmem:[%s226 + $0xb0] sm:$0xff] %vm1916, %v1833
      %1940 = vst.msk [vmem:[%s226 + $0xb8] sm:$0xff] %vm1916, %v1835
      %1941 = vst.msk [vmem:[%s226 + $0xc0] sm:$0xff] %vm1916, %v1837
      %1942 = vst.msk [vmem:[%s226 + $0xc8] sm:$0xff] %vm1916, %v1839
      %1943 = vst.msk [vmem:[%s226 + $0xd0] sm:$0xff] %vm1916, %v1841
      %1944 = vst.msk [vmem:[%s226 + $0xd8] sm:$0xff] %vm1916, %v1843
      %1945 = vst.msk [vmem:[%s226 + $0xe0] sm:$0xff] %vm1916, %v1845
      %1946 = vst.msk [vmem:[%s226 + $0xe8] sm:$0xff] %vm1916, %v1847
      %1947 = vst.msk [vmem:[%s226 + $0xf0] sm:$0xff] %vm1916, %v1849
      %1948 = vst.msk [vmem:[%s226 + $0xf8] sm:$0xff] %vm1916, %v1851
      %1949 = vst.msk [vmem:[%s226 + $0x100] sm:$0xff] %vm1916, %v1853
      %1950 = vst.msk [vmem:[%s226 + $0x108] sm:$0xff] %vm1916, %v1855
      %1951 = vst.msk [vmem:[%s226 + $0x110] sm:$0xff] %vm1916, %v1857
      %1952 = vst.msk [vmem:[%s226 + $0x118] sm:$0xff] %vm1916, %v1859
      %1953 = vst.msk [vmem:[%s226 + $0x120] sm:$0xff] %vm1916, %v1861
      %1954 = vst.msk [vmem:[%s226 + $0x128] sm:$0xff] %vm1916, %v1863
      %1955 = vst.msk [vmem:[%s226 + $0x130] sm:$0xff] %vm1916, %v1865
      %1956 = vst.msk [vmem:[%s226 + $0x138] sm:$0xff] %vm1916, %v1867
      %1957 = vst.msk [vmem:[%s226 + $0x140] sm:$0xff] %vm1916, %v1869
      %1958 = vst.msk [vmem:[%s226 + $0x148] sm:$0xff] %vm1916, %v1871
      %1959 = vst.msk [vmem:[%s226 + $0x150] sm:$0xff] %vm1916, %v1873
      %1960 = vst.msk [vmem:[%s226 + $0x158] sm:$0xff] %vm1916, %v1875
      %1961 = vst.msk [vmem:[%s226 + $0x160] sm:$0xff] %vm1916, %v1877
      %1962 = vst.msk [vmem:[%s226 + $0x168] sm:$0xff] %vm1916, %v1879
      %1963 = vst.msk [vmem:[%s226 + $0x170] sm:$0xff] %vm1916, %v1881
      %1964 = vst.msk [vmem:[%s226 + $0x178] sm:$0xff] %vm1916, %v1883
      %1965 = vst.msk [vmem:[%s226 + $0x180] sm:$0xff] %vm1916, %v1885
      %1966 = vst.msk [vmem:[%s226 + $0x188] sm:$0xff] %vm1916, %v1887
      %1967 = vst.msk [vmem:[%s226 + $0x190] sm:$0xff] %vm1916, %v1889
      %1968 = vst.msk [vmem:[%s226 + $0x198] sm:$0xff] %vm1916, %v1891
      %1969 = vst.msk [vmem:[%s226 + $0x1a0] sm:$0xff] %vm1916, %v1893
      %1970 = vst.msk [vmem:[%s226 + $0x1a8] sm:$0xff] %vm1916, %v1895
      %1971 = vst.msk [vmem:[%s226 + $0x1b0] sm:$0xff] %vm1916, %v1897
      %1972 = vst.msk [vmem:[%s226 + $0x1b8] sm:$0xff] %vm1916, %v1899
      %1973 = vst.msk [vmem:[%s226 + $0x1c0] sm:$0xff] %vm1916, %v1901
      %1974 = vst.msk [vmem:[%s226 + $0x1c8] sm:$0xff] %vm1916, %v1903
      %1975 = vst.msk [vmem:[%s226 + $0x1d0] sm:$0xff] %vm1916, %v1905
      %1976 = vst.msk [vmem:[%s226 + $0x1d8] sm:$0xff] %vm1916, %v1907
      %1977 = vst.msk [vmem:[%s226 + $0x1e0] sm:$0xff] %vm1916, %v1909
      %1978 = vst.msk [vmem:[%s226 + $0x1e8] sm:$0xff] %vm1916, %v1911
      %1979 = vst.msk [vmem:[%s226 + $0x1f0] sm:$0xff] %vm1916, %v1913
      %1980 = vst.msk [vmem:[%s226 + $0x1f8] sm:$0xff] %vm1916, %v1915
      %s1981 = smul.u32 64, %s16
      %p1982 = scmp.lt.s32.totalorder %s1981, 127
      %s1983 = scalar_select %p1982, %s1981, 127
      %s1984 = smul.addr %s1983, 8
      %s1985 = scalar_lea.vmem %s5, %s1984
      // Predicated region
      $region41: #{tpu_custom_call.1} parent=39 // pred_check
        %p1986 = pneg %p144
      $region42: #{tpu_custom_call.1} parent=39 // pred_check_branch
        %1988 = sbr.rel (%p1986) target = $region44
      $region43: #{tpu_custom_call.1} parent=39 // pred_region
        %s1989 = smul.u32 64, %s16
      $region44: #{tpu_custom_call.1} parent=39 // pred_fallthru
        _
    $region40: #{tpu_custom_call.1} parent=5 // pred_fallthru
      _
    %p1990 = scmp.le.s32.totalorder 2, %s11
    // Predicated region
    $region45: #{tpu_custom_call.1} parent=5 // pred_check
      %p1991 = pneg %p1990
    $region46: #{tpu_custom_call.1} parent=5 // pred_check_branch
      %1993 = sbr.rel (%p1991) target = $region48
    $region47: #{tpu_custom_call.1} parent=5 // pred_region
      %s1994 = ssub.s32 %s11, 2
      // Predicated region
      $region49: #{tpu_custom_call.1} parent=47 // pred_check
        %p1995 = pneg %p150
      $region50: #{tpu_custom_call.1} parent=47 // pred_check_branch
        %1997 = sbr.rel (%p1995) target = $region52
      $region51: #{tpu_custom_call.1} parent=47 // pred_region
        %s1998 = smul.u32 64, %s17
        %p1999 = scmp.lt.s32.totalorder %s1998, 127
        %s2000 = scalar_select %p1999, %s1998, 127
        %s2001 = smul.addr %s2000, 8
        %s2002 = scalar_lea.vmem %s5, %s2001
      $region52: #{tpu_custom_call.1} parent=47 // pred_fallthru
        _
    $region48: #{tpu_custom_call.1} parent=5 // pred_fallthru
      _
  $region6: #{tpu_custom_call.1} parent=0 // loop_footer
    %s15 = sadd.s32 1, %s11
  $region7: #{tpu_custom_call.1} parent=0 // loop_footer_branch
    %10 = sbr.rel target = $region3
  $region8: #{tpu_custom_call.1} parent=0 // loop_exit
    _

</llo_original>
